<compile_context>
chip_gen: v7x
topology: tpu7x:2x2x1
jax: 0.10.0
libtpu: 0.0.40
codegen_flags: <defaults>
</compile_context>

<pallas_src>
import functools

import jax
import jax.numpy as jnp
from jax import lax
from jax.experimental import pallas as pl
from jax.experimental.pallas import tpu as pltpu

BN_EPS = 1e-5
MATMUL_DTYPE = jnp.bfloat16          # MXU operand dtype (accumulation stays f32)


# ------------------------- generation-aware config -------------------------

@functools.lru_cache(maxsize=1)
def _hw_config():
    """VMEM budgets + megacore preference, derived from the chip's VMEM capacity."""
    vmem = None
    try:
        info = pltpu.get_tpu_info()
        for name in ("vmem_capacity_bytes", "vmem_size_bytes", "vmem_bytes"):
            v = getattr(info, name, None)
            if isinstance(v, int) and v > 0:
                vmem = v
                break
    except Exception:
        vmem = None
    if vmem is not None and vmem >= 100 * 1024 * 1024:
        # v5e / v6e: 128 MiB VMEM, single TensorCore -> big tiles, no forced split.
        return {"vmem_limit": 96 * 1024 * 1024,
                "block_budget": 40 * 1024 * 1024,
                "prefer_multi_step": False}
    # v7x (64 MiB / TC, 2 TCs) or unknown backend -> conservative + keep >=2 steps.
    return {"vmem_limit": 32 * 1024 * 1024,
            "block_budget": 12 * 1024 * 1024,
            "prefer_multi_step": True}


def _pick_row_tile(rows, bytes_per_row, fixed_bytes, budget, prefer_multi_step,
                   already_parallel=False):
    """Largest row tile that divides `rows` and fits the VMEM budget; on 2-TC chips
    prefer a tile giving >=2 grid steps unless another grid axis already provides
    parallelism."""
    cands = (2048, 1024, 512, 256, 128, 64, 32, 16, 8)
    fits = [c for c in cands
            if rows % c == 0 and fixed_bytes + c * bytes_per_row <= budget]
    if not fits:
        divs = [c for c in cands if rows % c == 0]
        return divs[0] if divs else rows
    if prefer_multi_step and not already_parallel:
        for c in fits:
            if rows // c >= 2:
                return c
    return fits[0]


# ----------------------------- Pallas kernels -----------------------------

def _make_pw_kernel(act, has_scale):
    """Fused 1x1-conv (matmul) + affine (bias/BN) + optional ReLU6."""

    def kernel(*refs):
        it = iter(refs)
        x_ref = next(it)
        w_ref = next(it)
        s_ref = next(it) if has_scale else None
        t_ref = next(it)
        o_ref = next(it)

        y = jnp.dot(x_ref[...], w_ref[...], preferred_element_type=jnp.float32)
        if has_scale:
            y = y * s_ref[...]
        y = y + t_ref[...]
        if act == "relu6":
            y = jnp.minimum(jnp.maximum(y, 0.0), 6.0)
        o_ref[...] = y.astype(o_ref.dtype)

    return kernel


def pointwise_conv(x2d, w, *, shift, scale=None, act="none",
                   out_dtype=jnp.float32):
    """x2d: (M, Cin) rows = pixels, w: (Cin, Cout).  Returns (M, Cout)."""
    cfg = _hw_config()
    M, Cin = x2d.shape
    Cout = w.shape[1]
    x2d = x2d.astype(MATMUL_DTYPE)
    w = w.astype(MATMUL_DTYPE)

    if Cout <= 512:
        tn = Cout
    else:
        tn = next((c for c in (512, 384, 256, 128) if Cout % c == 0), Cout)

    out_bytes = jnp.dtype(out_dtype).itemsize
    bytes_per_row = 2 * Cin * 2 + 2 * tn * out_bytes + 8 * tn   # in/out dbuf + f32 tmp
    fixed = 2 * Cin * tn * 2 + 8 * tn * 4
    tm = _pick_row_tile(M, bytes_per_row, fixed, cfg["block_budget"],
                        cfg["prefer_multi_step"],
                        already_parallel=(Cout // tn) >= 2)
    grid = (M // tm, Cout // tn)

    has_scale = scale is not None
    row_spec = pl.BlockSpec((1, tn), lambda i, j: (0, j))
    in_specs = [pl.BlockSpec((tm, Cin), lambda i, j: (i, 0)),
                pl.BlockSpec((Cin, tn), lambda i, j: (0, j))]
    args = [x2d, w]
    if has_scale:
        in_specs.append(row_spec)
        args.append(scale.reshape(1, Cout).astype(jnp.float32))
    in_specs.append(row_spec)
    args.append(shift.reshape(1, Cout).astype(jnp.float32))

    return pl.pallas_call(
        _make_pw_kernel(act, has_scale),
        out_shape=jax.ShapeDtypeStruct((M, Cout), out_dtype),
        grid=grid,
        in_specs=in_specs,
        out_specs=pl.BlockSpec((tm, tn), lambda i, j: (i, j)),
        compiler_params=pltpu.CompilerParams(
            dimension_semantics=("parallel", "parallel"),
            vmem_limit_bytes=cfg["vmem_limit"]),
    )(*args)


def _fused_local_qkv_kernel(x_ref, y2_ref, y3_ref, y4_ref,
                            wq_ref, wb_ref, sb_ref, tb_ref,
                            wc_ref, sc_ref, gshift_ref,
                            wa_ref, sa_ref, ta_ref,
                            qkv_ref, local_ref):
    """Per row tile: qkv conv; branch1..4 pointwise+BN+ReLU6; fused concat @
    branch_conv1_1 (columns pre-sliced [0::4]) with per-batch gconv shift;
    branch_adjust.  Intermediates never leave VMEM."""
    x = x_ref[...]

    # qkv 1x1 conv (softmax scale pre-folded into the q columns of wq)
    qkv_ref[...] = jnp.dot(
        x, wq_ref[...], preferred_element_type=jnp.float32).astype(qkv_ref.dtype)

    def branch(inp, idx):
        y = jnp.dot(inp, wb_ref[idx], preferred_element_type=jnp.float32)
        y = y * sb_ref[idx] + tb_ref[idx]
        return jnp.minimum(jnp.maximum(y, 0.0), 6.0).astype(MATMUL_DTYPE)

    b1 = branch(x, 0)
    b2 = branch(y2_ref[...], 1)
    b3 = branch(y3_ref[...], 2)
    b4 = branch(y4_ref[...], 3)

    # concat([b1..b4]) @ Wc  ==  sum_g  b_g @ Wc[gC:(g+1)C, :]
    acc = jnp.dot(b1, wc_ref[0], preferred_element_type=jnp.float32)
    acc = acc + jnp.dot(b2, wc_ref[1], preferred_element_type=jnp.float32)
    acc = acc + jnp.dot(b3, wc_ref[2], preferred_element_type=jnp.float32)
    acc = acc + jnp.dot(b4, wc_ref[3], preferred_element_type=jnp.float32)
    # branch_conv1_1 BN scale + (gconv@Wc + conv bias)*scale + BN shift, then ReLU6
    acc = acc * sc_ref[...] + gshift_ref[0]
    br = jnp.minimum(jnp.maximum(acc, 0.0), 6.0).astype(MATMUL_DTYPE)

    # branch_adjust (pixel_shuffle(2) + stride-2 tap already folded via [0::4])
    loc = jnp.dot(br, wa_ref[...], preferred_element_type=jnp.float32)
    loc = loc * sa_ref[...] + ta_ref[...]
    local_ref[...] = jnp.minimum(jnp.maximum(loc, 0.0), 6.0).astype(local_ref.dtype)


def fused_local_qkv(x2d, y2, y3, y4, wq, wb, sb, tb, wc, sc, gshift, wa, sa, ta,
                    *, B, HW, C):
    cfg = _hw_config()
    bytes_per_row = 80 * C                       # dbuf'd in/out + f32 temps (rough)
    fixed = 48 * C * C + 64 * C                  # resident weights (double-buffered)
    tm = _pick_row_tile(HW, bytes_per_row, fixed, cfg["block_budget"],
                        cfg["prefer_multi_step"], already_parallel=B >= 2)
    spb = HW // tm

    def data_spec():
        return pl.BlockSpec((tm, C), lambda b, i: (b * spb + i, 0))

    def const_spec(shape):
        zeros = (0,) * len(shape)
        return pl.BlockSpec(shape, lambda b, i: zeros)

    in_specs = [data_spec(), data_spec(), data_spec(), data_spec(),
                const_spec((C, 3 * C)),
                const_spec((4, C, C)), const_spec((4, 1, C)), const_spec((4, 1, C)),
                const_spec((4, C, C)), const_spec((1, C)),
                pl.BlockSpec((1, 1, C), lambda b, i: (b, 0, 0)),
                const_spec((C, C)), const_spec((1, C)), const_spec((1, C))]

    return pl.pallas_call(
        _fused_local_qkv_kernel,
        out_shape=(jax.ShapeDtypeStruct((B * HW, 3 * C), MATMUL_DTYPE),
                   jax.ShapeDtypeStruct((B * HW, C), jnp.float32)),
        grid=(B, spb),
        in_specs=in_specs,
        out_specs=(pl.BlockSpec((tm, 3 * C), lambda b, i: (b * spb + i, 0)),
                   pl.BlockSpec((tm, C), lambda b, i: (b * spb + i, 0))),
        compiler_params=pltpu.CompilerParams(
            dimension_semantics=("parallel", "parallel"),
            vmem_limit_bytes=cfg["vmem_limit"]),
    )(x2d, y2, y3, y4, wq, wb, sb, tb, wc, sc, gshift, wa, sa, ta)


def _make_window_attn_kernel(num_heads, head_dim, ws, tw):
    """tw windows per grid step, read/written straight from/to NHWC (lane-dense C)."""
    L = ws * ws
    C = num_heads * head_dim
    C3 = 3 * C

    def kernel(qkv_ref, bias_ref, o_ref):
        for w in range(tw):
            blk = qkv_ref[:, :, w * ws:(w + 1) * ws, :].astype(jnp.float32)
            blk = blk.reshape(L, C3)                       # (L, 3C), f32
            outs = []
            for h in range(num_heads):
                q = blk[:, h * head_dim:(h + 1) * head_dim]
                k = blk[:, C + h * head_dim:C + (h + 1) * head_dim]
                v = blk[:, 2 * C + h * head_dim:2 * C + (h + 1) * head_dim]
                dots = lax.dot_general(q, k, (((1,), (1,)), ((), ())),
                                       preferred_element_type=jnp.float32)
                dots = dots + bias_ref[h]
                m = jnp.max(dots, axis=-1, keepdims=True)
                p = jnp.exp(dots - m)
                denom = jnp.sum(p, axis=-1, keepdims=True)
                p = p * pl.reciprocal(denom, approx=True)  # EUP slot, ~free
                outs.append(jnp.dot(p, v, preferred_element_type=jnp.float32))
            out = jnp.concatenate(outs, axis=-1)           # (L, C), head-major chans
            o_ref[:, :, w * ws:(w + 1) * ws, :] = (
                out.reshape(1, ws, ws, C).astype(o_ref.dtype))

    return kernel


def window_attention_nhwc(qkv_nhwc, rel_bias, *, num_heads, ws):
    """qkv_nhwc: (B, Hp, Wp, 3C) bf16 -> (B, Hp, Wp, C) f32 attention output."""
    cfg = _hw_config()
    B, Hp, Wp, C3 = qkv_nhwc.shape
    C = C3 // 3
    d = C // num_heads
    hh, ww = Hp // ws, Wp // ws
    L = ws * ws

    tw = 1
    for cand in (8, 4, 2, 1):
        if ww % cand:
            continue
        if cand * num_heads > 32:                 # cap the unrolled head/window loops
            continue
        blk = (2 * cand * L * C3 * 2 + 2 * cand * L * C * 4 +
               cand * (L * C3 * 4 + 4 * L * L * 4 + L * C * 4) +
               num_heads * L * L * 4)
        if blk > cfg["block_budget"]:
            continue
        tw = cand
        break

    kernel = _make_window_attn_kernel(num_heads, d, ws, tw)
    return pl.pallas_call(
        kernel,
        out_shape=jax.ShapeDtypeStruct((B, Hp, Wp, C), jnp.float32),
        grid=(B, hh, ww // tw),
        in_specs=[pl.BlockSpec((1, ws, tw * ws, C3), lambda b, i, j: (b, i, j, 0)),
                  pl.BlockSpec((num_heads, L, L), lambda b, i, j: (0, 0, 0))],
        out_specs=pl.BlockSpec((1, ws, tw * ws, C), lambda b, i, j: (b, i, j, 0)),
        compiler_params=pltpu.CompilerParams(
            dimension_semantics=("parallel", "parallel", "parallel"),
            vmem_limit_bytes=cfg["vmem_limit"]),
    )(qkv_nhwc, rel_bias)


# ------------------------------- JAX glue ---------------------------------

def bn_affine(p):
    s = p["gamma"] / jnp.sqrt(p["var"] + BN_EPS)
    t = p["beta"] - p["mean"] * s
    return s, t


def depthwise_conv(x, w, bias, dilation, padding):
    # x: NHWC, w: (kh, kw, 1, C)  (HWIO, grouped)
    C = x.shape[-1]
    y = lax.conv_general_dilated(
        x, w, window_strides=(1, 1),
        padding=((padding, padding), (padding, padding)),
        rhs_dilation=(dilation, dilation),
        dimension_numbers=("NHWC", "HWIO", "NHWC"),
        feature_group_count=C)
    if bias is not None:
        y = y + bias
    return y


def avg_pool(x, window, pad):
    """AvgPool2d with count_include_pad=True semantics (divide by kernel area)."""
    kh, kw = window
    s = lax.reduce_window(
        x, jnp.array(0.0, x.dtype), lax.add,
        window_dimensions=(1, kh, kw, 1),
        window_strides=(1, 1, 1, 1),
        padding=((0, 0), pad[0], pad[1], (0, 0)))
    return s / float(kh * kw)


def relative_position_index(ws):
    coords = jnp.stack(jnp.meshgrid(jnp.arange(ws), jnp.arange(ws), indexing="ij"))
    flat = coords.reshape(2, -1)                       # (2, L)
    rel = flat[:, :, None] - flat[:, None, :]          # (2, L, L)
    rel = rel.transpose(1, 2, 0)                       # (L, L, 2)
    rel = rel.at[:, :, 0].add(ws - 1)
    rel = rel.at[:, :, 1].add(ws - 1)
    rel = rel.at[:, :, 0].multiply(2 * ws - 1)
    return rel.sum(-1)                                 # (L, L)


# ------------------------------ forward pass ------------------------------

def global_local_attention_forward(x_nchw, params, *, num_heads, window_size):
    x = jnp.transpose(x_nchw, (0, 2, 3, 1)).astype(jnp.float32)   # NHWC
    B, H, W, C = x.shape
    ws = window_size
    head_dim = C // num_heads
    scale = head_dim ** -0.5

    # ---- depthwise (grouped, dilated) convs of branches 2-4: XLA ----
    p2, p3, p4 = params["branch2"], params["branch3"], params["branch4"]
    y2 = depthwise_conv(x, p2["dw_w"], p2["dw_b"], p2["dilation"], p2["padding"])
    y3 = depthwise_conv(x, p3["dw_w"], p3["dw_b"], p3["dilation"], p3["padding"])
    y4 = depthwise_conv(x, p4["dw_w"], p4["dw_b"], p4["dilation"], p4["padding"])

    # ---- global feature path: tiny (B, C) matmuls, plain jnp ----
    gmean = jnp.mean(x, axis=(1, 2))                                      # (B, C)
    gp = params["global_feature"]
    sg, tg = bn_affine(gp["bn"])
    gfeat = jnp.clip((gmean @ gp["w"] + gp["b"]) * sg + tg, 0.0, 6.0)
    # bilinear upsample of a 1x1 map is a spatial broadcast; the 1x1 globe_conv
    # commutes with the broadcast exactly.
    gp = params["globe_conv"]
    sg, tg = bn_affine(gp["bn"])
    gconv = jnp.clip((gfeat @ gp["w"] + gp["b"]) * sg + tg, 0.0, 6.0)     # (B, 4C)

    # branch_conv1_1: only output channels co*4 survive pixel_shuffle(2) followed by
    # branch_adjust's stride-2 (top-left-phase) sampling, so slice columns 4x at
    # trace time; fold gconv + conv bias + BN into one per-batch row shift.
    pc = params["branch_conv1_1"]
    wc_s = pc["w"][:, 0::4]                                               # (4C, C)
    bc_s = pc["b"][0::4]
    bn_s = {k: pc["bn"][k][0::4] for k in ("gamma", "beta", "mean", "var")}
    sc, tc = bn_affine(bn_s)
    gshift = ((gconv @ wc_s) + bc_s) * sc + tc                            # (B, C)

    # per-branch pointwise affines (conv bias folded into the BN shift)
    p1 = params["branch1"]
    s1, t1 = bn_affine(p1["bn"]); t1 = t1 + p1["b"] * s1
    s2, t2 = bn_affine(p2["bn"]); t2 = t2 + p2["pw_b"] * s2
    s3, t3 = bn_affine(p3["bn"]); t3 = t3 + p3["pw_b"] * s3
    s4, t4 = bn_affine(p4["bn"]); t4 = t4 + p4["pw_b"] * s4
    pa = params["branch_adjust"]
    sa, ta = bn_affine(pa["bn"]); ta = ta + pa["b"] * sa

    qkv_w = params["qkv_w"]
    wq = jnp.concatenate([qkv_w[:, :C] * scale, qkv_w[:, C:]], axis=1)    # (C, 3C)

    wb = jnp.stack([p1["w"], p2["pw_w"], p3["pw_w"], p4["pw_w"]], axis=0)  # (4,C,C)
    sb = jnp.stack([s1, s2, s3, s4], axis=0).reshape(4, 1, C)
    tb = jnp.stack([t1, t2, t3, t4], axis=0).reshape(4, 1, C)
    wc = wc_s.reshape(4, C, C)                                            # row blocks

    # ---- fused local path + qkv: one Pallas call, intermediates stay in VMEM ----
    qkv_flat, local_flat = fused_local_qkv(
        x.reshape(-1, C).astype(MATMUL_DTYPE),
        y2.reshape(-1, C).astype(MATMUL_DTYPE),
        y3.reshape(-1, C).astype(MATMUL_DTYPE),
        y4.reshape(-1, C).astype(MATMUL_DTYPE),
        wq.astype(MATMUL_DTYPE), wb.astype(MATMUL_DTYPE),
        sb.astype(jnp.float32), tb.astype(jnp.float32),
        wc.astype(MATMUL_DTYPE), sc.reshape(1, C).astype(jnp.float32),
        gshift.reshape(B, 1, C).astype(jnp.float32),
        pa["w"].astype(MATMUL_DTYPE),
        sa.reshape(1, C).astype(jnp.float32), ta.reshape(1, C).astype(jnp.float32),
        B=B, HW=H * W, C=C)
    local = local_flat.reshape(B, H, W, C)
    qkv_nhwc = qkv_flat.reshape(B, H, W, 3 * C)

    # ---------------- window attention (consumes qkv NHWC directly) ----------------
    # qkv is a per-pixel (1x1) op, so reflect-padding its OUTPUT equals computing it
    # on the reflect-padded input (padding only duplicates pixels).
    pad_h = (ws - H % ws) % ws
    pad_w = (ws - W % ws) % ws
    qkv_sp = qkv_nhwc
    if pad_w:
        qkv_sp = jnp.pad(qkv_sp, ((0, 0), (0, 0), (0, pad_w), (0, 0)), mode="reflect")
    if pad_h:
        qkv_sp = jnp.pad(qkv_sp, ((0, 0), (0, pad_h), (0, 0), (0, 0)), mode="reflect")

    L = ws * ws
    rel_idx = relative_position_index(ws).reshape(-1)
    rel_bias = params["rel_pos_table"][rel_idx].reshape(L, L, num_heads)
    rel_bias = rel_bias.transpose(2, 0, 1).astype(jnp.float32)            # (h, L, L)

    attn = window_attention_nhwc(qkv_sp, rel_bias, num_heads=num_heads, ws=ws)
    attn = attn[:, :H, :W, :]                                             # (B,H,W,C)

    # directional average pooling (AvgPool2d, zero-pad counted in the divisor)
    ph = ws // 2 - 1
    ax = jnp.pad(attn, ((0, 0), (0, 1), (0, 0), (0, 0)), mode="reflect")
    ax = avg_pool(ax, (ws, 1), ((ph, ph), (0, 0)))
    ay = jnp.pad(attn, ((0, 0), (0, 0), (0, 1), (0, 0)), mode="reflect")
    ay = avg_pool(ay, (1, ws), ((0, 0), (ph, ph)))

    out = ax + ay + local
    out = jnp.pad(out, ((0, 0), (0, 1), (0, 1), (0, 0)), mode="reflect")  # pad_out

    # proj: depthwise ws x ws conv (no bias) -> BN -> 1x1 conv (no bias)
    # fold the BN into the pointwise weights: (dw*s + t) @ W = dw @ (s*W) + t @ W
    p = params["proj"]
    dw = depthwise_conv(out, p["dw_w"], None, 1, (ws - 1) // 2)
    s, t = bn_affine(p["bn"])
    w_eff = s[:, None] * p["pw_w"]
    shift_eff = t @ p["pw_w"]
    Bo, Hq, Wq, _ = dw.shape
    y = pointwise_conv(dw.reshape(-1, C), w_eff, shift=shift_eff, act="none",
                       out_dtype=jnp.float32)
    y = y.reshape(Bo, Hq, Wq, C)[:, :H, :W, :]
    return jnp.transpose(y, (0, 3, 1, 2))              # back to NCHW


# ------------------------------ parameter init -----------------------------

def init_params(key, dim, num_heads, window_size):
    state = {"key": key}

    def nk():
        state["key"], sub = jax.random.split(state["key"])
        return sub

    def w(shape, std=0.05):
        return jax.random.normal(nk(), shape, jnp.float32) * std

    def bias(c):
        return jax.random.normal(nk(), (c,), jnp.float32) * 0.02

    def bn(c):
        return {
            "gamma": 1.0 + 0.1 * jax.random.normal(nk(), (c,), jnp.float32),
            "beta": 0.05 * jax.random.normal(nk(), (c,), jnp.float32),
            "mean": 0.05 * jax.random.normal(nk(), (c,), jnp.float32),
            "var": 0.5 + jax.random.uniform(nk(), (c,), jnp.float32),
        }

    def depth(k, dilation):
        padding = (dilation * (k - 1)) // 2
        return {"dw_w": w((k, k, 1, dim)), "dw_b": bias(dim),
                "pw_w": w((dim, dim)), "pw_b": bias(dim),
                "bn": bn(dim), "dilation": dilation, "padding": padding}

    ws = window_size
    return {
        "branch1": {"w": w((dim, dim)), "b": bias(dim), "bn": bn(dim)},
        "branch2": depth(3, 1),
        "branch3": depth(4, 2),
        "branch4": depth(5, 2),
        "global_feature": {"w": w((dim, dim)), "b": bias(dim), "bn": bn(dim)},
        "globe_conv": {"w": w((dim, 4 * dim)), "b": bias(4 * dim), "bn": bn(4 * dim)},
        "branch_conv1_1": {"w": w((4 * dim, 4 * dim)), "b": bias(4 * dim),
                           "bn": bn(4 * dim)},
        "branch_adjust": {"w": w((dim, dim)), "b": bias(dim), "bn": bn(dim)},
        "qkv_w": w((dim, 3 * dim)),
        "proj": {"dw_w": w((ws, ws, 1, dim)), "bn": bn(dim), "pw_w": w((dim, dim))},
        "rel_pos_table": w(((2 * ws - 1) * (2 * ws - 1), num_heads), std=0.02),
    }


# ----------------------------------- main -----------------------------------

if __name__ == "__main__":
    dim, num_heads, window_size = 32, 4, 8
    B, H, W = 2, 16, 16

    key = jax.random.PRNGKey(0)
    pkey, xkey = jax.random.split(key)
    params = init_params(pkey, dim, num_heads, window_size)
    x = jax.random.normal(xkey, (B, dim, H, W), jnp.float32)

    out = global_local_attention_forward(x, params,
                                         num_heads=num_heads,
                                         window_size=window_size)
    out = jax.block_until_ready(out)
    assert out.shape == (B, dim, H, W), out.shape
    assert jnp.all(jnp.isfinite(out))
    print("KERNEL_OK")
</pallas_src>

<mosaic_0001>
module attributes {stable_mosaic.version = 11 : i64} {
  func.func @_fused_local_qkv_kernel(%arg0: i32, %arg1: i32, %arg2: memref<256x32xbf16, #tpu.memory_space<vmem>>, %arg3: memref<256x32xbf16, #tpu.memory_space<vmem>>, %arg4: memref<256x32xbf16, #tpu.memory_space<vmem>>, %arg5: memref<256x32xbf16, #tpu.memory_space<vmem>>, %arg6: memref<32x96xbf16, #tpu.memory_space<vmem>>, %arg7: memref<4x32x32xbf16, #tpu.memory_space<vmem>>, %arg8: memref<4x1x32xf32, #tpu.memory_space<vmem>>, %arg9: memref<4x1x32xf32, #tpu.memory_space<vmem>>, %arg10: memref<4x32x32xbf16, #tpu.memory_space<vmem>>, %arg11: memref<1x32xf32, #tpu.memory_space<vmem>>, %arg12: memref<1x1x32xf32, #tpu.memory_space<vmem>>, %arg13: memref<32x32xbf16, #tpu.memory_space<vmem>>, %arg14: memref<1x32xf32, #tpu.memory_space<vmem>>, %arg15: memref<1x32xf32, #tpu.memory_space<vmem>>, %arg16: memref<256x96xbf16, #tpu.memory_space<vmem>>, %arg17: memref<256x32xf32, #tpu.memory_space<vmem>>) attributes {dimension_semantics = [#tpu.dimension_semantics<parallel>, #tpu.dimension_semantics<parallel>], iteration_bounds = array<i64: 2, 1>, scalar_prefetch = 0 : i64, scratch_operands = 0 : i64, tpu.core_type = #tpu.core_type<tc>, window_params = [{transform_indices = @transform_0, window_bounds = array<i64: 256, 32>}, {transform_indices = @transform_1, window_bounds = array<i64: 256, 32>}, {transform_indices = @transform_2, window_bounds = array<i64: 256, 32>}, {transform_indices = @transform_3, window_bounds = array<i64: 256, 32>}, {pipeline_mode = #tpu.pipeline_mode<synchronous>, transform_indices = @transform_4, window_bounds = array<i64: 32, 96>}, {pipeline_mode = #tpu.pipeline_mode<synchronous>, transform_indices = @transform_5, window_bounds = array<i64: 4, 32, 32>}, {pipeline_mode = #tpu.pipeline_mode<synchronous>, transform_indices = @transform_6, window_bounds = array<i64: 4, 1, 32>}, {pipeline_mode = #tpu.pipeline_mode<synchronous>, transform_indices = @transform_7, window_bounds = array<i64: 4, 1, 32>}, {pipeline_mode = #tpu.pipeline_mode<synchronous>, transform_indices = @transform_8, window_bounds = array<i64: 4, 32, 32>}, {pipeline_mode = #tpu.pipeline_mode<synchronous>, transform_indices = @transform_9, window_bounds = array<i64: 1, 32>}, {transform_indices = @transform_10, window_bounds = array<i64: 1, 1, 32>}, {pipeline_mode = #tpu.pipeline_mode<synchronous>, transform_indices = @transform_11, window_bounds = array<i64: 32, 32>}, {pipeline_mode = #tpu.pipeline_mode<synchronous>, transform_indices = @transform_12, window_bounds = array<i64: 1, 32>}, {pipeline_mode = #tpu.pipeline_mode<synchronous>, transform_indices = @transform_13, window_bounds = array<i64: 1, 32>}, {transform_indices = @transform_14, window_bounds = array<i64: 256, 96>}, {transform_indices = @transform_15, window_bounds = array<i64: 256, 32>}]} {
    %c0 = arith.constant 0 : index
    %c0_0 = arith.constant 0 : index
    %0 = vector.load %arg2[%c0, %c0_0] : memref<256x32xbf16, #tpu.memory_space<vmem>>, vector<256x32xbf16>
    %c0_1 = arith.constant 0 : index
    %c0_2 = arith.constant 0 : index
    %1 = vector.load %arg6[%c0_1, %c0_2] : memref<32x96xbf16, #tpu.memory_space<vmem>>, vector<32x96xbf16>
    %cst = arith.constant dense<0.000000e+00> : vector<256x96xf32>
    %2 = tpu.matmul %0, %1, %cst {dimension_numbers = #tpu.dot_dimension_numbers<[1], [0], [0], [1], [0, 0, 1, 1], [], []>} : vector<256x32xbf16>, vector<32x96xbf16>, vector<256x96xf32> -> vector<256x96xf32>
    %3 = arith.truncf %2 : vector<256x96xf32> to vector<256x96xbf16>
    %c0_3 = arith.constant 0 : index
    %c0_4 = arith.constant 0 : index
    %4 = vector.load %arg16[%c0_3, %c0_4] : memref<256x96xbf16, #tpu.memory_space<vmem>>, vector<256x96xbf16>
    tpu.vector_store %arg16[%c0_3, %c0_4], %3 {strides = array<i32>} : memref<256x96xbf16, #tpu.memory_space<vmem>>, vector<256x96xbf16>,
    %c0_5 = arith.constant 0 : index
    %c0_6 = arith.constant 0 : index
    %c0_7 = arith.constant 0 : index
    %5 = vector.load %arg7[%c0_5, %c0_6, %c0_7] : memref<4x32x32xbf16, #tpu.memory_space<vmem>>, vector<1x32x32xbf16>
    %6 = vector.shape_cast %5 : vector<1x32x32xbf16> to vector<32x32xbf16>
    %cst_8 = arith.constant dense<0.000000e+00> : vector<256x32xf32>
    %7 = tpu.matmul %0, %6, %cst_8 {dimension_numbers = #tpu.dot_dimension_numbers<[1], [0], [0], [1], [0, 0, 1, 1], [], []>} : vector<256x32xbf16>, vector<32x32xbf16>, vector<256x32xf32> -> vector<256x32xf32>
    %c0_9 = arith.constant 0 : index
    %c0_10 = arith.constant 0 : index
    %c0_11 = arith.constant 0 : index
    %8 = vector.load %arg8[%c0_9, %c0_10, %c0_11] : memref<4x1x32xf32, #tpu.memory_space<vmem>>, vector<1x1x32xf32>
    %9 = vector.shape_cast %8 : vector<1x1x32xf32> to vector<1x32xf32>
    %10 = vector.broadcast %9 : vector<1x32xf32> to vector<256x32xf32>
    %11 = arith.mulf %7, %10 : vector<256x32xf32>
    %c0_12 = arith.constant 0 : index
    %c0_13 = arith.constant 0 : index
    %c0_14 = arith.constant 0 : index
    %12 = vector.load %arg9[%c0_12, %c0_13, %c0_14] : memref<4x1x32xf32, #tpu.memory_space<vmem>>, vector<1x1x32xf32>
    %13 = vector.shape_cast %12 : vector<1x1x32xf32> to vector<1x32xf32>
    %14 = vector.broadcast %13 : vector<1x32xf32> to vector<256x32xf32>
    %15 = arith.addf %11, %14 : vector<256x32xf32>
    %cst_15 = arith.constant 0.000000e+00 : f32
    %16 = vector.broadcast %cst_15 : f32 to vector<256x32xf32>
    %17 = arith.maximumf %15, %16 : vector<256x32xf32>
    %cst_16 = arith.constant 6.000000e+00 : f32
    %18 = vector.broadcast %cst_16 : f32 to vector<256x32xf32>
    %19 = arith.minimumf %17, %18 : vector<256x32xf32>
    %20 = arith.truncf %19 : vector<256x32xf32> to vector<256x32xbf16>
    %c0_17 = arith.constant 0 : index
    %c0_18 = arith.constant 0 : index
    %21 = vector.load %arg3[%c0_17, %c0_18] : memref<256x32xbf16, #tpu.memory_space<vmem>>, vector<256x32xbf16>
    %c1 = arith.constant 1 : index
    %c0_19 = arith.constant 0 : index
    %c0_20 = arith.constant 0 : index
    %22 = vector.load %arg7[%c1, %c0_19, %c0_20] : memref<4x32x32xbf16, #tpu.memory_space<vmem>>, vector<1x32x32xbf16>
    %23 = vector.shape_cast %22 : vector<1x32x32xbf16> to vector<32x32xbf16>
    %cst_21 = arith.constant dense<0.000000e+00> : vector<256x32xf32>
    %24 = tpu.matmul %21, %23, %cst_21 {dimension_numbers = #tpu.dot_dimension_numbers<[1], [0], [0], [1], [0, 0, 1, 1], [], []>} : vector<256x32xbf16>, vector<32x32xbf16>, vector<256x32xf32> -> vector<256x32xf32>
    %c1_22 = arith.constant 1 : index
    %c0_23 = arith.constant 0 : index
    %c0_24 = arith.constant 0 : index
    %25 = vector.load %arg8[%c1_22, %c0_23, %c0_24] : memref<4x1x32xf32, #tpu.memory_space<vmem>>, vector<1x1x32xf32>
    %26 = vector.shape_cast %25 : vector<1x1x32xf32> to vector<1x32xf32>
    %27 = vector.broadcast %26 : vector<1x32xf32> to vector<256x32xf32>
    %28 = arith.mulf %24, %27 : vector<256x32xf32>
    %c1_25 = arith.constant 1 : index
    %c0_26 = arith.constant 0 : index
    %c0_27 = arith.constant 0 : index
    %29 = vector.load %arg9[%c1_25, %c0_26, %c0_27] : memref<4x1x32xf32, #tpu.memory_space<vmem>>, vector<1x1x32xf32>
    %30 = vector.shape_cast %29 : vector<1x1x32xf32> to vector<1x32xf32>
    %31 = vector.broadcast %30 : vector<1x32xf32> to vector<256x32xf32>
    %32 = arith.addf %28, %31 : vector<256x32xf32>
    %cst_28 = arith.constant 0.000000e+00 : f32
    %33 = vector.broadcast %cst_28 : f32 to vector<256x32xf32>
    %34 = arith.maximumf %32, %33 : vector<256x32xf32>
    %cst_29 = arith.constant 6.000000e+00 : f32
    %35 = vector.broadcast %cst_29 : f32 to vector<256x32xf32>
    %36 = arith.minimumf %34, %35 : vector<256x32xf32>
    %37 = arith.truncf %36 : vector<256x32xf32> to vector<256x32xbf16>
    %c0_30 = arith.constant 0 : index
    %c0_31 = arith.constant 0 : index
    %38 = vector.load %arg4[%c0_30, %c0_31] : memref<256x32xbf16, #tpu.memory_space<vmem>>, vector<256x32xbf16>
    %c2 = arith.constant 2 : index
    %c0_32 = arith.constant 0 : index
    %c0_33 = arith.constant 0 : index
    %39 = vector.load %arg7[%c2, %c0_32, %c0_33] : memref<4x32x32xbf16, #tpu.memory_space<vmem>>, vector<1x32x32xbf16>
    %40 = vector.shape_cast %39 : vector<1x32x32xbf16> to vector<32x32xbf16>
    %cst_34 = arith.constant dense<0.000000e+00> : vector<256x32xf32>
    %41 = tpu.matmul %38, %40, %cst_34 {dimension_numbers = #tpu.dot_dimension_numbers<[1], [0], [0], [1], [0, 0, 1, 1], [], []>} : vector<256x32xbf16>, vector<32x32xbf16>, vector<256x32xf32> -> vector<256x32xf32>
    %c2_35 = arith.constant 2 : index
    %c0_36 = arith.constant 0 : index
    %c0_37 = arith.constant 0 : index
    %42 = vector.load %arg8[%c2_35, %c0_36, %c0_37] : memref<4x1x32xf32, #tpu.memory_space<vmem>>, vector<1x1x32xf32>
    %43 = vector.shape_cast %42 : vector<1x1x32xf32> to vector<1x32xf32>
    %44 = vector.broadcast %43 : vector<1x32xf32> to vector<256x32xf32>
    %45 = arith.mulf %41, %44 : vector<256x32xf32>
    %c2_38 = arith.constant 2 : index
    %c0_39 = arith.constant 0 : index
    %c0_40 = arith.constant 0 : index
    %46 = vector.load %arg9[%c2_38, %c0_39, %c0_40] : memref<4x1x32xf32, #tpu.memory_space<vmem>>, vector<1x1x32xf32>
    %47 = vector.shape_cast %46 : vector<1x1x32xf32> to vector<1x32xf32>
    %48 = vector.broadcast %47 : vector<1x32xf32> to vector<256x32xf32>
    %49 = arith.addf %45, %48 : vector<256x32xf32>
    %cst_41 = arith.constant 0.000000e+00 : f32
    %50 = vector.broadcast %cst_41 : f32 to vector<256x32xf32>
    %51 = arith.maximumf %49, %50 : vector<256x32xf32>
    %cst_42 = arith.constant 6.000000e+00 : f32
    %52 = vector.broadcast %cst_42 : f32 to vector<256x32xf32>
    %53 = arith.minimumf %51, %52 : vector<256x32xf32>
    %54 = arith.truncf %53 : vector<256x32xf32> to vector<256x32xbf16>
    %c0_43 = arith.constant 0 : index
    %c0_44 = arith.constant 0 : index
    %55 = vector.load %arg5[%c0_43, %c0_44] : memref<256x32xbf16, #tpu.memory_space<vmem>>, vector<256x32xbf16>
    %c3 = arith.constant 3 : index
    %c0_45 = arith.constant 0 : index
    %c0_46 = arith.constant 0 : index
    %56 = vector.load %arg7[%c3, %c0_45, %c0_46] : memref<4x32x32xbf16, #tpu.memory_space<vmem>>, vector<1x32x32xbf16>
    %57 = vector.shape_cast %56 : vector<1x32x32xbf16> to vector<32x32xbf16>
    %cst_47 = arith.constant dense<0.000000e+00> : vector<256x32xf32>
    %58 = tpu.matmul %55, %57, %cst_47 {dimension_numbers = #tpu.dot_dimension_numbers<[1], [0], [0], [1], [0, 0, 1, 1], [], []>} : vector<256x32xbf16>, vector<32x32xbf16>, vector<256x32xf32> -> vector<256x32xf32>
    %c3_48 = arith.constant 3 : index
    %c0_49 = arith.constant 0 : index
    %c0_50 = arith.constant 0 : index
    %59 = vector.load %arg8[%c3_48, %c0_49, %c0_50] : memref<4x1x32xf32, #tpu.memory_space<vmem>>, vector<1x1x32xf32>
    %60 = vector.shape_cast %59 : vector<1x1x32xf32> to vector<1x32xf32>
    %61 = vector.broadcast %60 : vector<1x32xf32> to vector<256x32xf32>
    %62 = arith.mulf %58, %61 : vector<256x32xf32>
    %c3_51 = arith.constant 3 : index
    %c0_52 = arith.constant 0 : index
    %c0_53 = arith.constant 0 : index
    %63 = vector.load %arg9[%c3_51, %c0_52, %c0_53] : memref<4x1x32xf32, #tpu.memory_space<vmem>>, vector<1x1x32xf32>
    %64 = vector.shape_cast %63 : vector<1x1x32xf32> to vector<1x32xf32>
    %65 = vector.broadcast %64 : vector<1x32xf32> to vector<256x32xf32>
    %66 = arith.addf %62, %65 : vector<256x32xf32>
    %cst_54 = arith.constant 0.000000e+00 : f32
    %67 = vector.broadcast %cst_54 : f32 to vector<256x32xf32>
    %68 = arith.maximumf %66, %67 : vector<256x32xf32>
    %cst_55 = arith.constant 6.000000e+00 : f32
    %69 = vector.broadcast %cst_55 : f32 to vector<256x32xf32>
    %70 = arith.minimumf %68, %69 : vector<256x32xf32>
    %71 = arith.truncf %70 : vector<256x32xf32> to vector<256x32xbf16>
    %c0_56 = arith.constant 0 : index
    %c0_57 = arith.constant 0 : index
    %c0_58 = arith.constant 0 : index
    %72 = vector.load %arg10[%c0_56, %c0_57, %c0_58] : memref<4x32x32xbf16, #tpu.memory_space<vmem>>, vector<1x32x32xbf16>
    %73 = vector.shape_cast %72 : vector<1x32x32xbf16> to vector<32x32xbf16>
    %cst_59 = arith.constant dense<0.000000e+00> : vector<256x32xf32>
    %74 = tpu.matmul %20, %73, %cst_59 {dimension_numbers = #tpu.dot_dimension_numbers<[1], [0], [0], [1], [0, 0, 1, 1], [], []>} : vector<256x32xbf16>, vector<32x32xbf16>, vector<256x32xf32> -> vector<256x32xf32>
    %c1_60 = arith.constant 1 : index
    %c0_61 = arith.constant 0 : index
    %c0_62 = arith.constant 0 : index
    %75 = vector.load %arg10[%c1_60, %c0_61, %c0_62] : memref<4x32x32xbf16, #tpu.memory_space<vmem>>, vector<1x32x32xbf16>
    %76 = vector.shape_cast %75 : vector<1x32x32xbf16> to vector<32x32xbf16>
    %cst_63 = arith.constant dense<0.000000e+00> : vector<256x32xf32>
    %77 = tpu.matmul %37, %76, %cst_63 {dimension_numbers = #tpu.dot_dimension_numbers<[1], [0], [0], [1], [0, 0, 1, 1], [], []>} : vector<256x32xbf16>, vector<32x32xbf16>, vector<256x32xf32> -> vector<256x32xf32>
    %78 = arith.addf %74, %77 : vector<256x32xf32>
    %c2_64 = arith.constant 2 : index
    %c0_65 = arith.constant 0 : index
    %c0_66 = arith.constant 0 : index
    %79 = vector.load %arg10[%c2_64, %c0_65, %c0_66] : memref<4x32x32xbf16, #tpu.memory_space<vmem>>, vector<1x32x32xbf16>
    %80 = vector.shape_cast %79 : vector<1x32x32xbf16> to vector<32x32xbf16>
    %cst_67 = arith.constant dense<0.000000e+00> : vector<256x32xf32>
    %81 = tpu.matmul %54, %80, %cst_67 {dimension_numbers = #tpu.dot_dimension_numbers<[1], [0], [0], [1], [0, 0, 1, 1], [], []>} : vector<256x32xbf16>, vector<32x32xbf16>, vector<256x32xf32> -> vector<256x32xf32>
    %82 = arith.addf %78, %81 : vector<256x32xf32>
    %c3_68 = arith.constant 3 : index
    %c0_69 = arith.constant 0 : index
    %c0_70 = arith.constant 0 : index
    %83 = vector.load %arg10[%c3_68, %c0_69, %c0_70] : memref<4x32x32xbf16, #tpu.memory_space<vmem>>, vector<1x32x32xbf16>
    %84 = vector.shape_cast %83 : vector<1x32x32xbf16> to vector<32x32xbf16>
    %cst_71 = arith.constant dense<0.000000e+00> : vector<256x32xf32>
    %85 = tpu.matmul %71, %84, %cst_71 {dimension_numbers = #tpu.dot_dimension_numbers<[1], [0], [0], [1], [0, 0, 1, 1], [], []>} : vector<256x32xbf16>, vector<32x32xbf16>, vector<256x32xf32> -> vector<256x32xf32>
    %86 = arith.addf %82, %85 : vector<256x32xf32>
    %c0_72 = arith.constant 0 : index
    %c0_73 = arith.constant 0 : index
    %87 = vector.load %arg11[%c0_72, %c0_73] : memref<1x32xf32, #tpu.memory_space<vmem>>, vector<1x32xf32>
    %88 = vector.broadcast %87 : vector<1x32xf32> to vector<256x32xf32>
    %89 = arith.mulf %86, %88 : vector<256x32xf32>
    %c0_74 = arith.constant 0 : index
    %c0_75 = arith.constant 0 : index
    %c0_76 = arith.constant 0 : index
    %90 = vector.load %arg12[%c0_74, %c0_75, %c0_76] : memref<1x1x32xf32, #tpu.memory_space<vmem>>, vector<1x1x32xf32>
    %91 = vector.shape_cast %90 : vector<1x1x32xf32> to vector<1x32xf32>
    %92 = vector.broadcast %91 : vector<1x32xf32> to vector<256x32xf32>
    %93 = arith.addf %89, %92 : vector<256x32xf32>
    %cst_77 = arith.constant 0.000000e+00 : f32
    %94 = vector.broadcast %cst_77 : f32 to vector<256x32xf32>
    %95 = arith.maximumf %93, %94 : vector<256x32xf32>
    %cst_78 = arith.constant 6.000000e+00 : f32
    %96 = vector.broadcast %cst_78 : f32 to vector<256x32xf32>
    %97 = arith.minimumf %95, %96 : vector<256x32xf32>
    %98 = arith.truncf %97 : vector<256x32xf32> to vector<256x32xbf16>
    %c0_79 = arith.constant 0 : index
    %c0_80 = arith.constant 0 : index
    %99 = vector.load %arg13[%c0_79, %c0_80] : memref<32x32xbf16, #tpu.memory_space<vmem>>, vector<32x32xbf16>
    %cst_81 = arith.constant dense<0.000000e+00> : vector<256x32xf32>
    %100 = tpu.matmul %98, %99, %cst_81 {dimension_numbers = #tpu.dot_dimension_numbers<[1], [0], [0], [1], [0, 0, 1, 1], [], []>} : vector<256x32xbf16>, vector<32x32xbf16>, vector<256x32xf32> -> vector<256x32xf32>
    %c0_82 = arith.constant 0 : index
    %c0_83 = arith.constant 0 : index
    %101 = vector.load %arg14[%c0_82, %c0_83] : memref<1x32xf32, #tpu.memory_space<vmem>>, vector<1x32xf32>
    %102 = vector.broadcast %101 : vector<1x32xf32> to vector<256x32xf32>
    %103 = arith.mulf %100, %102 : vector<256x32xf32>
    %c0_84 = arith.constant 0 : index
    %c0_85 = arith.constant 0 : index
    %104 = vector.load %arg15[%c0_84, %c0_85] : memref<1x32xf32, #tpu.memory_space<vmem>>, vector<1x32xf32>
    %105 = vector.broadcast %104 : vector<1x32xf32> to vector<256x32xf32>
    %106 = arith.addf %103, %105 : vector<256x32xf32>
    %cst_86 = arith.constant 0.000000e+00 : f32
    %107 = vector.broadcast %cst_86 : f32 to vector<256x32xf32>
    %108 = arith.maximumf %106, %107 : vector<256x32xf32>
    %cst_87 = arith.constant 6.000000e+00 : f32
    %109 = vector.broadcast %cst_87 : f32 to vector<256x32xf32>
    %110 = arith.minimumf %108, %109 : vector<256x32xf32>
    %c0_88 = arith.constant 0 : index
    %c0_89 = arith.constant 0 : index
    %111 = vector.load %arg17[%c0_88, %c0_89] : memref<256x32xf32, #tpu.memory_space<vmem>>, vector<256x32xf32>
    tpu.vector_store %arg17[%c0_88, %c0_89], %110 {strides = array<i32>} : memref<256x32xf32, #tpu.memory_space<vmem>>, vector<256x32xf32>,
    return
  }
  func.func @transform_0(%arg0: i32, %arg1: i32) -> (i32, i32) {
    %c1_i32 = arith.constant 1 : i32
    %0 = arith.muli %arg0, %c1_i32 : i32
    %1 = arith.addi %0, %arg1 : i32
    %c0_i32 = arith.constant 0 : i32
    %c0_i32_0 = arith.constant 0 : i32
    return %1, %c0_i32 : i32, i32
  }
  func.func @transform_1(%arg0: i32, %arg1: i32) -> (i32, i32) {
    %c1_i32 = arith.constant 1 : i32
    %0 = arith.muli %arg0, %c1_i32 : i32
    %1 = arith.addi %0, %arg1 : i32
    %c0_i32 = arith.constant 0 : i32
    %c0_i32_0 = arith.constant 0 : i32
    return %1, %c0_i32 : i32, i32
  }
  func.func @transform_2(%arg0: i32, %arg1: i32) -> (i32, i32) {
    %c1_i32 = arith.constant 1 : i32
    %0 = arith.muli %arg0, %c1_i32 : i32
    %1 = arith.addi %0, %arg1 : i32
    %c0_i32 = arith.constant 0 : i32
    %c0_i32_0 = arith.constant 0 : i32
    return %1, %c0_i32 : i32, i32
  }
  func.func @transform_3(%arg0: i32, %arg1: i32) -> (i32, i32) {
    %c1_i32 = arith.constant 1 : i32
    %0 = arith.muli %arg0, %c1_i32 : i32
    %1 = arith.addi %0, %arg1 : i32
    %c0_i32 = arith.constant 0 : i32
    %c0_i32_0 = arith.constant 0 : i32
    return %1, %c0_i32 : i32, i32
  }
  func.func @transform_4(%arg0: i32, %arg1: i32) -> (i32, i32) {
    %c0_i32 = arith.constant 0 : i32
    %c0_i32_0 = arith.constant 0 : i32
    %c0_i32_1 = arith.constant 0 : i32
    return %c0_i32, %c0_i32_0 : i32, i32
  }
  func.func @transform_5(%arg0: i32, %arg1: i32) -> (i32, i32, i32) {
    %c0_i32 = arith.constant 0 : i32
    %c0_i32_0 = arith.constant 0 : i32
    %c0_i32_1 = arith.constant 0 : i32
    %c0_i32_2 = arith.constant 0 : i32
    return %c0_i32, %c0_i32_0, %c0_i32_1 : i32, i32, i32
  }
  func.func @transform_6(%arg0: i32, %arg1: i32) -> (i32, i32, i32) {
    %c0_i32 = arith.constant 0 : i32
    %c0_i32_0 = arith.constant 0 : i32
    %c0_i32_1 = arith.constant 0 : i32
    %c0_i32_2 = arith.constant 0 : i32
    return %c0_i32, %c0_i32_0, %c0_i32_1 : i32, i32, i32
  }
  func.func @transform_7(%arg0: i32, %arg1: i32) -> (i32, i32, i32) {
    %c0_i32 = arith.constant 0 : i32
    %c0_i32_0 = arith.constant 0 : i32
    %c0_i32_1 = arith.constant 0 : i32
    %c0_i32_2 = arith.constant 0 : i32
    return %c0_i32, %c0_i32_0, %c0_i32_1 : i32, i32, i32
  }
  func.func @transform_8(%arg0: i32, %arg1: i32) -> (i32, i32, i32) {
    %c0_i32 = arith.constant 0 : i32
    %c0_i32_0 = arith.constant 0 : i32
    %c0_i32_1 = arith.constant 0 : i32
    %c0_i32_2 = arith.constant 0 : i32
    return %c0_i32, %c0_i32_0, %c0_i32_1 : i32, i32, i32
  }
  func.func @transform_9(%arg0: i32, %arg1: i32) -> (i32, i32) {
    %c0_i32 = arith.constant 0 : i32
    %c0_i32_0 = arith.constant 0 : i32
    %c0_i32_1 = arith.constant 0 : i32
    return %c0_i32, %c0_i32_0 : i32, i32
  }
  func.func @transform_10(%arg0: i32, %arg1: i32) -> (i32, i32, i32) {
    %c0_i32 = arith.constant 0 : i32
    %c0_i32_0 = arith.constant 0 : i32
    %c0_i32_1 = arith.constant 0 : i32
    return %arg0, %c0_i32, %c0_i32_0 : i32, i32, i32
  }
  func.func @transform_11(%arg0: i32, %arg1: i32) -> (i32, i32) {
    %c0_i32 = arith.constant 0 : i32
    %c0_i32_0 = arith.constant 0 : i32
    %c0_i32_1 = arith.constant 0 : i32
    return %c0_i32, %c0_i32_0 : i32, i32
  }
  func.func @transform_12(%arg0: i32, %arg1: i32) -> (i32, i32) {
    %c0_i32 = arith.constant 0 : i32
    %c0_i32_0 = arith.constant 0 : i32
    %c0_i32_1 = arith.constant 0 : i32
    return %c0_i32, %c0_i32_0 : i32, i32
  }
  func.func @transform_13(%arg0: i32, %arg1: i32) -> (i32, i32) {
    %c0_i32 = arith.constant 0 : i32
    %c0_i32_0 = arith.constant 0 : i32
    %c0_i32_1 = arith.constant 0 : i32
    return %c0_i32, %c0_i32_0 : i32, i32
  }
  func.func @transform_14(%arg0: i32, %arg1: i32) -> (i32, i32) {
    %c1_i32 = arith.constant 1 : i32
    %0 = arith.muli %arg0, %c1_i32 : i32
    %1 = arith.addi %0, %arg1 : i32
    %c0_i32 = arith.constant 0 : i32
    %c0_i32_0 = arith.constant 0 : i32
    return %1, %c0_i32 : i32, i32
  }
  func.func @transform_15(%arg0: i32, %arg1: i32) -> (i32, i32) {
    %c1_i32 = arith.constant 1 : i32
    %0 = arith.muli %arg0, %c1_i32 : i32
    %1 = arith.addi %0, %arg1 : i32
    %c0_i32 = arith.constant 0 : i32
    %c0_i32_0 = arith.constant 0 : i32
    return %1, %c0_i32 : i32, i32
  }
}

</mosaic_0001>

<llo_original>
// kernel: tpu_custom_call.1
$region0: #{tpu_custom_call.1}
  #allocation0 [shape = 'u32[]', space=smem, size = 0x4, offset = 0x4, fixed_abs, tag = 'smem constant byte address 0x4 - core index']
  #allocation1 [shape = 'u32[144,128]{1,0:T(1,128)}', space=vmem, size = 0x12000, scoped, tag = 'internal scratch']
  %s0 = inlined_call_operand.vmem [shape: bf16[512,32], index: 0, kind: input, shape index: {}]
  %s1 = inlined_call_operand.vmem [shape: bf16[512,32], index: 1, kind: input, shape index: {}]
  %s2 = inlined_call_operand.vmem [shape: bf16[512,32], index: 2, kind: input, shape index: {}]
  %s3 = inlined_call_operand.vmem [shape: bf16[512,32], index: 3, kind: input, shape index: {}]
  %s4 = inlined_call_operand.vmem [shape: bf16[32,96], index: 4, kind: input, shape index: {}]
  %s5 = inlined_call_operand.vmem [shape: bf16[4,32,32], index: 5, kind: input, shape index: {}]
  %s6 = inlined_call_operand.vmem [shape: f32[4,1,32], index: 6, kind: input, shape index: {}]
  %s7 = inlined_call_operand.vmem [shape: f32[4,1,32], index: 7, kind: input, shape index: {}]
  %s8 = inlined_call_operand.vmem [shape: bf16[4,32,32], index: 8, kind: input, shape index: {}]
  %s9 = inlined_call_operand.vmem [shape: f32[1,32], index: 9, kind: input, shape index: {}]
  %s10 = inlined_call_operand.vmem [shape: f32[2,1,32], index: 10, kind: input, shape index: {}]
  %s11 = inlined_call_operand.vmem [shape: bf16[32,32], index: 11, kind: input, shape index: {}]
  %s12 = inlined_call_operand.vmem [shape: f32[1,32], index: 12, kind: input, shape index: {}]
  %s13 = inlined_call_operand.vmem [shape: f32[1,32], index: 13, kind: input, shape index: {}]
  %s14 = inlined_call_operand.vmem [shape: bf16[512,96], index: 14, kind: output, shape index: {0}]
  %s15 = inlined_call_operand.vmem [shape: f32[512,32], index: 15, kind: output, shape index: {1}]
  %16 = xla_tuple %s14, %s15
  %s17 = sld [smem:[#allocation0]]
  $region97: #{tpu_custom_call.1} parent=0
    _
  %s19 = ssub.s32 1, %s17
  %s20 = scalar_select 0, %s19, %s17
  loop: start=0, step=1, limit=4
  $region2: #{tpu_custom_call.1} parent=0 // loop_pre_header
    _
  $region3: #{tpu_custom_call.1} parent=0 // loop_header
    %s22 = sphi 0, %s26
    %p23 = scmp.ge.s32.totalorder %s22, 4
    %s29 = sphi 0, %s41
    %s30 = sphi 0, %s37
    %s31 = sphi 0, %s29
    %s32 = sphi 0, %s30
    %s33 = sphi 0, %s31
    %s34 = sphi 0, %s32
    %s46 = sphi 0, %s48
    %s49 = sphi 0, %s46
    %s50 = sphi 0, %s49
    %s66 = sphi 0, %s50
    %s74 = sphi 0, %s76
    %s77 = sphi 0, %s74
    %s78 = sphi 0, %s77
    %s94 = sphi 0, %s78
    %s102 = sphi 0, %s104
    %s105 = sphi 0, %s102
    %s106 = sphi 0, %s105
    %s122 = sphi 0, %s106
    %s130 = sphi 0, %s132
    %s133 = sphi 0, %s130
    %s134 = sphi 0, %s133
    %s150 = sphi 0, %s134
    %s154 = sphi 0, %s154
    %s156 = sphi 0, %s154
    %s157 = sphi 0, %s156
    %s171 = sphi 0, %s157
    %s175 = sphi 0, %s175
    %s177 = sphi 0, %s175
    %s178 = sphi 0, %s177
    %s192 = sphi 0, %s178
    %s196 = sphi 0, %s196
    %s198 = sphi 0, %s196
    %s199 = sphi 0, %s198
    %s213 = sphi 0, %s199
    %s217 = sphi 0, %s217
    %s219 = sphi 0, %s217
    %s220 = sphi 0, %s219
    %s234 = sphi 0, %s220
    %s238 = sphi 0, %s238
    %s240 = sphi 0, %s238
    %s241 = sphi 0, %s240
    %s255 = sphi 0, %s241
    %s259 = sphi 0, %s259
    %s261 = sphi 0, %s259
    %s262 = sphi 0, %s261
    %s276 = sphi 0, %s262
    %s282 = sphi 0, %s284
    %s285 = sphi 0, %s282
    %s286 = sphi 0, %s285
    %s302 = sphi 0, %s286
    %s306 = sphi 0, %s306
    %s308 = sphi 0, %s306
    %s309 = sphi 0, %s308
    %s323 = sphi 0, %s309
    %s327 = sphi 0, %s327
    %s329 = sphi 0, %s327
    %s330 = sphi 0, %s329
    %s344 = sphi 0, %s330
    %s348 = sphi 0, %s348
    %s350 = sphi 0, %s348
    %s351 = sphi 0, %s350
    %s365 = sphi 0, %s351
    %s373 = sphi 0, %s375
    %s376 = sphi 0, %s373
    %s377 = sphi 0, %s376
    %s393 = sphi 0, %s377
    %s401 = sphi 0, %s403
    %s404 = sphi 0, %s401
    %s405 = sphi 0, %s404
    %s421 = sphi 0, %s405
  $region4: #{tpu_custom_call.1} parent=0 // loop_header_branch
    %25 = sbr.rel (%p23) target = $region8
  $region5: #{tpu_custom_call.1} parent=0 // loop_body
    %s27 = ssub.s32 %s22, 1
    %s28 = ssub.s32 %s22, 2
    %s35 = sadd.s32 1, %s30
    %p36 = scmp.ge.s32.totalorder %s35, 1
    %s37 = scalar_select %p36, 0, %s35
    %s38 = sadd.s32 1, %s29
    %s39 = scalar_select %p36, %s38, %s29
    %p40 = scmp.ge.s32.totalorder %s39, 2
    %s41 = scalar_select %p40, 0, %s39
    %s42 = sadd.s32 %s29, %s30
    %s43 = sadd.s32 %s41, %s37
    %s44 = ssub.s32 %s42, %s43
    %p45 = scmp.eq.s32.totalorder %s44, 0
    %s47 = sadd.s32 %s46, 1
    %s48 = scalar_select %p45, %s46, %s47
    %p51 = pneg %p45
    %p52 = scmp.eq.s32.totalorder %s22, 1
    %p53 = por %p51, %p52
    %p54 = scmp.ne.s32.totalorder %s46, %s49
    %p55 = scmp.eq.s32.totalorder %s22, 0
    %p56 = por %p54, %p55
    %p57 = scmp.ne.s32.totalorder %s46, %s49
    %p58 = scmp.eq.s32.totalorder %s27, 1
    %p59 = por %p57, %p58
    %p60 = scmp.ne.s32.totalorder %s49, %s50
    %p61 = scmp.eq.s32.totalorder %s27, 0
    %p62 = por %p60, %p61
    %p63 = scmp.ne.s32.totalorder %s49, %s50
    %p64 = scmp.eq.s32.totalorder %s28, 1
    %p65 = por %p63, %p64
    %p67 = scmp.ne.s32.totalorder %s50, %s66
    %p68 = scmp.eq.s32.totalorder %s28, 0
    %p69 = por %p67, %p68
    %s70 = sadd.s32 %s29, %s30
    %s71 = sadd.s32 %s41, %s37
    %s72 = ssub.s32 %s70, %s71
    %p73 = scmp.eq.s32.totalorder %s72, 0
    %s75 = sadd.s32 %s74, 1
    %s76 = scalar_select %p73, %s74, %s75
    %p79 = pneg %p73
    %p80 = scmp.eq.s32.totalorder %s22, 1
    %p81 = por %p79, %p80
    %p82 = scmp.ne.s32.totalorder %s74, %s77
    %p83 = scmp.eq.s32.totalorder %s22, 0
    %p84 = por %p82, %p83
    %p85 = scmp.ne.s32.totalorder %s74, %s77
    %p86 = scmp.eq.s32.totalorder %s27, 1
    %p87 = por %p85, %p86
    %p88 = scmp.ne.s32.totalorder %s77, %s78
    %p89 = scmp.eq.s32.totalorder %s27, 0
    %p90 = por %p88, %p89
    %p91 = scmp.ne.s32.totalorder %s77, %s78
    %p92 = scmp.eq.s32.totalorder %s28, 1
    %p93 = por %p91, %p92
    %p95 = scmp.ne.s32.totalorder %s78, %s94
    %p96 = scmp.eq.s32.totalorder %s28, 0
    %p97 = por %p95, %p96
    %s98 = sadd.s32 %s29, %s30
    %s99 = sadd.s32 %s41, %s37
    %s100 = ssub.s32 %s98, %s99
    %p101 = scmp.eq.s32.totalorder %s100, 0
    %s103 = sadd.s32 %s102, 1
    %s104 = scalar_select %p101, %s102, %s103
    %p107 = pneg %p101
    %p108 = scmp.eq.s32.totalorder %s22, 1
    %p109 = por %p107, %p108
    %p110 = scmp.ne.s32.totalorder %s102, %s105
    %p111 = scmp.eq.s32.totalorder %s22, 0
    %p112 = por %p110, %p111
    %p113 = scmp.ne.s32.totalorder %s102, %s105
    %p114 = scmp.eq.s32.totalorder %s27, 1
    %p115 = por %p113, %p114
    %p116 = scmp.ne.s32.totalorder %s105, %s106
    %p117 = scmp.eq.s32.totalorder %s27, 0
    %p118 = por %p116, %p117
    %p119 = scmp.ne.s32.totalorder %s105, %s106
    %p120 = scmp.eq.s32.totalorder %s28, 1
    %p121 = por %p119, %p120
    %p123 = scmp.ne.s32.totalorder %s106, %s122
    %p124 = scmp.eq.s32.totalorder %s28, 0
    %p125 = por %p123, %p124
    %s126 = sadd.s32 %s29, %s30
    %s127 = sadd.s32 %s41, %s37
    %s128 = ssub.s32 %s126, %s127
    %p129 = scmp.eq.s32.totalorder %s128, 0
    %s131 = sadd.s32 %s130, 1
    %s132 = scalar_select %p129, %s130, %s131
    %p135 = pneg %p129
    %p136 = scmp.eq.s32.totalorder %s22, 1
    %p137 = por %p135, %p136
    %p138 = scmp.ne.s32.totalorder %s130, %s133
    %p139 = scmp.eq.s32.totalorder %s22, 0
    %p140 = por %p138, %p139
    %p141 = scmp.ne.s32.totalorder %s130, %s133
    %p142 = scmp.eq.s32.totalorder %s27, 1
    %p143 = por %p141, %p142
    %p144 = scmp.ne.s32.totalorder %s133, %s134
    %p145 = scmp.eq.s32.totalorder %s27, 0
    %p146 = por %p144, %p145
    %p147 = scmp.ne.s32.totalorder %s133, %s134
    %p148 = scmp.eq.s32.totalorder %s28, 1
    %p149 = por %p147, %p148
    %p151 = scmp.ne.s32.totalorder %s134, %s150
    %p152 = scmp.eq.s32.totalorder %s28, 0
    %p153 = por %p151, %p152
    %s155 = sadd.s32 %s154, 1
    %p158 = scmp.eq.s32.totalorder %s22, 1
    %p159 = scmp.ne.s32.totalorder %s154, %s156
    %p160 = scmp.eq.s32.totalorder %s22, 0
    %p161 = por %p159, %p160
    %p162 = scmp.ne.s32.totalorder %s154, %s156
    %p163 = scmp.eq.s32.totalorder %s27, 1
    %p164 = por %p162, %p163
    %p165 = scmp.ne.s32.totalorder %s156, %s157
    %p166 = scmp.eq.s32.totalorder %s27, 0
    %p167 = por %p165, %p166
    %p168 = scmp.ne.s32.totalorder %s156, %s157
    %p169 = scmp.eq.s32.totalorder %s28, 1
    %p170 = por %p168, %p169
    %p172 = scmp.ne.s32.totalorder %s157, %s171
    %p173 = scmp.eq.s32.totalorder %s28, 0
    %p174 = por %p172, %p173
    %s176 = sadd.s32 %s175, 1
    %p179 = scmp.eq.s32.totalorder %s22, 1
    %p180 = scmp.ne.s32.totalorder %s175, %s177
    %p181 = scmp.eq.s32.totalorder %s22, 0
    %p182 = por %p180, %p181
    %p183 = scmp.ne.s32.totalorder %s175, %s177
    %p184 = scmp.eq.s32.totalorder %s27, 1
    %p185 = por %p183, %p184
    %p186 = scmp.ne.s32.totalorder %s177, %s178
    %p187 = scmp.eq.s32.totalorder %s27, 0
    %p188 = por %p186, %p187
    %p189 = scmp.ne.s32.totalorder %s177, %s178
    %p190 = scmp.eq.s32.totalorder %s28, 1
    %p191 = por %p189, %p190
    %p193 = scmp.ne.s32.totalorder %s178, %s192
    %p194 = scmp.eq.s32.totalorder %s28, 0
    %p195 = por %p193, %p194
    %s197 = sadd.s32 %s196, 1
    %p200 = scmp.eq.s32.totalorder %s22, 1
    %p201 = scmp.ne.s32.totalorder %s196, %s198
    %p202 = scmp.eq.s32.totalorder %s22, 0
    %p203 = por %p201, %p202
    %p204 = scmp.ne.s32.totalorder %s196, %s198
    %p205 = scmp.eq.s32.totalorder %s27, 1
    %p206 = por %p204, %p205
    %p207 = scmp.ne.s32.totalorder %s198, %s199
    %p208 = scmp.eq.s32.totalorder %s27, 0
    %p209 = por %p207, %p208
    %p210 = scmp.ne.s32.totalorder %s198, %s199
    %p211 = scmp.eq.s32.totalorder %s28, 1
    %p212 = por %p210, %p211
    %p214 = scmp.ne.s32.totalorder %s199, %s213
    %p215 = scmp.eq.s32.totalorder %s28, 0
    %p216 = por %p214, %p215
    %s218 = sadd.s32 %s217, 1
    %p221 = scmp.eq.s32.totalorder %s22, 1
    %p222 = scmp.ne.s32.totalorder %s217, %s219
    %p223 = scmp.eq.s32.totalorder %s22, 0
    %p224 = por %p222, %p223
    %p225 = scmp.ne.s32.totalorder %s217, %s219
    %p226 = scmp.eq.s32.totalorder %s27, 1
    %p227 = por %p225, %p226
    %p228 = scmp.ne.s32.totalorder %s219, %s220
    %p229 = scmp.eq.s32.totalorder %s27, 0
    %p230 = por %p228, %p229
    %p231 = scmp.ne.s32.totalorder %s219, %s220
    %p232 = scmp.eq.s32.totalorder %s28, 1
    %p233 = por %p231, %p232
    %p235 = scmp.ne.s32.totalorder %s220, %s234
    %p236 = scmp.eq.s32.totalorder %s28, 0
    %p237 = por %p235, %p236
    %s239 = sadd.s32 %s238, 1
    %p242 = scmp.eq.s32.totalorder %s22, 1
    %p243 = scmp.ne.s32.totalorder %s238, %s240
    %p244 = scmp.eq.s32.totalorder %s22, 0
    %p245 = por %p243, %p244
    %p246 = scmp.ne.s32.totalorder %s238, %s240
    %p247 = scmp.eq.s32.totalorder %s27, 1
    %p248 = por %p246, %p247
    %p249 = scmp.ne.s32.totalorder %s240, %s241
    %p250 = scmp.eq.s32.totalorder %s27, 0
    %p251 = por %p249, %p250
    %p252 = scmp.ne.s32.totalorder %s240, %s241
    %p253 = scmp.eq.s32.totalorder %s28, 1
    %p254 = por %p252, %p253
    %p256 = scmp.ne.s32.totalorder %s241, %s255
    %p257 = scmp.eq.s32.totalorder %s28, 0
    %p258 = por %p256, %p257
    %s260 = sadd.s32 %s259, 1
    %p263 = scmp.eq.s32.totalorder %s22, 1
    %p264 = scmp.ne.s32.totalorder %s259, %s261
    %p265 = scmp.eq.s32.totalorder %s22, 0
    %p266 = por %p264, %p265
    %p267 = scmp.ne.s32.totalorder %s259, %s261
    %p268 = scmp.eq.s32.totalorder %s27, 1
    %p269 = por %p267, %p268
    %p270 = scmp.ne.s32.totalorder %s261, %s262
    %p271 = scmp.eq.s32.totalorder %s27, 0
    %p272 = por %p270, %p271
    %p273 = scmp.ne.s32.totalorder %s261, %s262
    %p274 = scmp.eq.s32.totalorder %s28, 1
    %p275 = por %p273, %p274
    %p277 = scmp.ne.s32.totalorder %s262, %s276
    %p278 = scmp.eq.s32.totalorder %s28, 0
    %p279 = por %p277, %p278
    %s280 = ssub.s32 %s29, %s41
    %p281 = scmp.eq.s32.totalorder %s280, 0
    %s283 = sadd.s32 %s282, 1
    %s284 = scalar_select %p281, %s282, %s283
    %p287 = pneg %p281
    %p288 = scmp.eq.s32.totalorder %s22, 1
    %p289 = por %p287, %p288
    %p290 = scmp.ne.s32.totalorder %s282, %s285
    %p291 = scmp.eq.s32.totalorder %s22, 0
    %p292 = por %p290, %p291
    %p293 = scmp.ne.s32.totalorder %s282, %s285
    %p294 = scmp.eq.s32.totalorder %s27, 1
    %p295 = por %p293, %p294
    %p296 = scmp.ne.s32.totalorder %s285, %s286
    %p297 = scmp.eq.s32.totalorder %s27, 0
    %p298 = por %p296, %p297
    %p299 = scmp.ne.s32.totalorder %s285, %s286
    %p300 = scmp.eq.s32.totalorder %s28, 1
    %p301 = por %p299, %p300
    %p303 = scmp.ne.s32.totalorder %s286, %s302
    %p304 = scmp.eq.s32.totalorder %s28, 0
    %p305 = por %p303, %p304
    %s307 = sadd.s32 %s306, 1
    %p310 = scmp.eq.s32.totalorder %s22, 1
    %p311 = scmp.ne.s32.totalorder %s306, %s308
    %p312 = scmp.eq.s32.totalorder %s22, 0
    %p313 = por %p311, %p312
    %p314 = scmp.ne.s32.totalorder %s306, %s308
    %p315 = scmp.eq.s32.totalorder %s27, 1
    %p316 = por %p314, %p315
    %p317 = scmp.ne.s32.totalorder %s308, %s309
    %p318 = scmp.eq.s32.totalorder %s27, 0
    %p319 = por %p317, %p318
    %p320 = scmp.ne.s32.totalorder %s308, %s309
    %p321 = scmp.eq.s32.totalorder %s28, 1
    %p322 = por %p320, %p321
    %p324 = scmp.ne.s32.totalorder %s309, %s323
    %p325 = scmp.eq.s32.totalorder %s28, 0
    %p326 = por %p324, %p325
    %s328 = sadd.s32 %s327, 1
    %p331 = scmp.eq.s32.totalorder %s22, 1
    %p332 = scmp.ne.s32.totalorder %s327, %s329
    %p333 = scmp.eq.s32.totalorder %s22, 0
    %p334 = por %p332, %p333
    %p335 = scmp.ne.s32.totalorder %s327, %s329
    %p336 = scmp.eq.s32.totalorder %s27, 1
    %p337 = por %p335, %p336
    %p338 = scmp.ne.s32.totalorder %s329, %s330
    %p339 = scmp.eq.s32.totalorder %s27, 0
    %p340 = por %p338, %p339
    %p341 = scmp.ne.s32.totalorder %s329, %s330
    %p342 = scmp.eq.s32.totalorder %s28, 1
    %p343 = por %p341, %p342
    %p345 = scmp.ne.s32.totalorder %s330, %s344
    %p346 = scmp.eq.s32.totalorder %s28, 0
    %p347 = por %p345, %p346
    %s349 = sadd.s32 %s348, 1
    %p352 = scmp.eq.s32.totalorder %s22, 1
    %p353 = scmp.ne.s32.totalorder %s348, %s350
    %p354 = scmp.eq.s32.totalorder %s22, 0
    %p355 = por %p353, %p354
    %p356 = scmp.ne.s32.totalorder %s348, %s350
    %p357 = scmp.eq.s32.totalorder %s27, 1
    %p358 = por %p356, %p357
    %p359 = scmp.ne.s32.totalorder %s350, %s351
    %p360 = scmp.eq.s32.totalorder %s27, 0
    %p361 = por %p359, %p360
    %p362 = scmp.ne.s32.totalorder %s350, %s351
    %p363 = scmp.eq.s32.totalorder %s28, 1
    %p364 = por %p362, %p363
    %p366 = scmp.ne.s32.totalorder %s351, %s365
    %p367 = scmp.eq.s32.totalorder %s28, 0
    %p368 = por %p366, %p367
    %s369 = sadd.s32 %s29, %s30
    %s370 = sadd.s32 %s41, %s37
    %s371 = ssub.s32 %s369, %s370
    %p372 = scmp.eq.s32.totalorder %s371, 0
    %s374 = sadd.s32 %s373, 1
    %s375 = scalar_select %p372, %s373, %s374
    %p378 = pneg %p372
    %p379 = scmp.eq.s32.totalorder %s22, 1
    %p380 = por %p378, %p379
    %p381 = scmp.ne.s32.totalorder %s373, %s376
    %p382 = scmp.eq.s32.totalorder %s22, 0
    %p383 = por %p381, %p382
    %p384 = scmp.ne.s32.totalorder %s373, %s376
    %p385 = scmp.eq.s32.totalorder %s27, 1
    %p386 = por %p384, %p385
    %p387 = scmp.ne.s32.totalorder %s376, %s377
    %p388 = scmp.eq.s32.totalorder %s27, 0
    %p389 = por %p387, %p388
    %p390 = scmp.ne.s32.totalorder %s376, %s377
    %p391 = scmp.eq.s32.totalorder %s28, 1
    %p392 = por %p390, %p391
    %p394 = scmp.ne.s32.totalorder %s377, %s393
    %p395 = scmp.eq.s32.totalorder %s28, 0
    %p396 = por %p394, %p395
    %s397 = sadd.s32 %s29, %s30
    %s398 = sadd.s32 %s41, %s37
    %s399 = ssub.s32 %s397, %s398
    %p400 = scmp.eq.s32.totalorder %s399, 0
    %s402 = sadd.s32 %s401, 1
    %s403 = scalar_select %p400, %s401, %s402
    %p406 = pneg %p400
    %p407 = scmp.eq.s32.totalorder %s22, 1
    %p408 = por %p406, %p407
    %p409 = scmp.ne.s32.totalorder %s401, %s404
    %p410 = scmp.eq.s32.totalorder %s22, 0
    %p411 = por %p409, %p410
    %p412 = scmp.ne.s32.totalorder %s401, %s404
    %p413 = scmp.eq.s32.totalorder %s27, 1
    %p414 = por %p412, %p413
    %p415 = scmp.ne.s32.totalorder %s404, %s405
    %p416 = scmp.eq.s32.totalorder %s27, 0
    %p417 = por %p415, %p416
    %p418 = scmp.ne.s32.totalorder %s404, %s405
    %p419 = scmp.eq.s32.totalorder %s28, 1
    %p420 = por %p418, %p419
    %p422 = scmp.ne.s32.totalorder %s405, %s421
    %p423 = scmp.eq.s32.totalorder %s28, 0
    %p424 = por %p422, %p423
    %p425 = scmp.le.s32.totalorder 1, %s22
    %p426 = scmp.lt.s32.totalorder %s22, 3
    %p427 = pnand %p425, %p426
    %p428 = pneg %p427
    // Predicated region
    $region9: #{tpu_custom_call.1} parent=5 // pred_check
      _
    $region10: #{tpu_custom_call.1} parent=5 // pred_check_branch
      %430 = sbr.rel (%p427) target = $region12
    $region11: #{tpu_custom_call.1} parent=5 // pred_region
      %s431 = ssub.s32 %s22, 1
      // Predicated region
      $region13: #{tpu_custom_call.1} parent=11 // pred_check
        %p432 = pneg %p167
      $region14: #{tpu_custom_call.1} parent=11 // pred_check_branch
        %434 = sbr.rel (%p432) target = $region16
      $region15: #{tpu_custom_call.1} parent=11 // pred_region
        _
      $region16: #{tpu_custom_call.1} parent=11 // pred_fallthru
        _
      // Predicated region
      $region17: #{tpu_custom_call.1} parent=11 // pred_check
        %p435 = pneg %p188
      $region18: #{tpu_custom_call.1} parent=11 // pred_check_branch
        %437 = sbr.rel (%p435) target = $region20
      $region19: #{tpu_custom_call.1} parent=11 // pred_region
        _
      $region20: #{tpu_custom_call.1} parent=11 // pred_fallthru
        _
      // Predicated region
      $region21: #{tpu_custom_call.1} parent=11 // pred_check
        %p438 = pneg %p209
      $region22: #{tpu_custom_call.1} parent=11 // pred_check_branch
        %440 = sbr.rel (%p438) target = $region24
      $region23: #{tpu_custom_call.1} parent=11 // pred_region
        _
      $region24: #{tpu_custom_call.1} parent=11 // pred_fallthru
        _
      // Predicated region
      $region25: #{tpu_custom_call.1} parent=11 // pred_check
        %p441 = pneg %p230
      $region26: #{tpu_custom_call.1} parent=11 // pred_check_branch
        %443 = sbr.rel (%p441) target = $region28
      $region27: #{tpu_custom_call.1} parent=11 // pred_region
        _
      $region28: #{tpu_custom_call.1} parent=11 // pred_fallthru
        _
      // Predicated region
      $region29: #{tpu_custom_call.1} parent=11 // pred_check
        %p444 = pneg %p251
      $region30: #{tpu_custom_call.1} parent=11 // pred_check_branch
        %446 = sbr.rel (%p444) target = $region32
      $region31: #{tpu_custom_call.1} parent=11 // pred_region
        _
      $region32: #{tpu_custom_call.1} parent=11 // pred_fallthru
        _
      // Predicated region
      $region33: #{tpu_custom_call.1} parent=11 // pred_check
        %p447 = pneg %p272
      $region34: #{tpu_custom_call.1} parent=11 // pred_check_branch
        %449 = sbr.rel (%p447) target = $region36
      $region35: #{tpu_custom_call.1} parent=11 // pred_region
        _
      $region36: #{tpu_custom_call.1} parent=11 // pred_fallthru
        _
      // Predicated region
      $region37: #{tpu_custom_call.1} parent=11 // pred_check
        %p450 = pneg %p319
      $region38: #{tpu_custom_call.1} parent=11 // pred_check_branch
        %452 = sbr.rel (%p450) target = $region40
      $region39: #{tpu_custom_call.1} parent=11 // pred_region
        _
      $region40: #{tpu_custom_call.1} parent=11 // pred_fallthru
        _
      // Predicated region
      $region41: #{tpu_custom_call.1} parent=11 // pred_check
        %p453 = pneg %p340
      $region42: #{tpu_custom_call.1} parent=11 // pred_check_branch
        %455 = sbr.rel (%p453) target = $region44
      $region43: #{tpu_custom_call.1} parent=11 // pred_region
        _
      $region44: #{tpu_custom_call.1} parent=11 // pred_fallthru
        _
      // Predicated region
      $region45: #{tpu_custom_call.1} parent=11 // pred_check
        %p456 = pneg %p361
      $region46: #{tpu_custom_call.1} parent=11 // pred_check_branch
        %458 = sbr.rel (%p456) target = $region48
      $region47: #{tpu_custom_call.1} parent=11 // pred_region
        _
      $region48: #{tpu_custom_call.1} parent=11 // pred_fallthru
        _
    $region12: #{tpu_custom_call.1} parent=5 // pred_fallthru
      _
    %p459 = scmp.lt.s32.totalorder %s22, 2
    // Predicated region
    $region49: #{tpu_custom_call.1} parent=5 // pred_check
      %p460 = pneg %p459
    $region50: #{tpu_custom_call.1} parent=5 // pred_check_branch
      %462 = sbr.rel (%p460) target = $region52
    $region51: #{tpu_custom_call.1} parent=5 // pred_region
      // Predicated region
      $region53: #{tpu_custom_call.1} parent=51 // pred_check
        %p463 = pneg %p56
      $region54: #{tpu_custom_call.1} parent=51 // pred_check_branch
        %465 = sbr.rel (%p463) target = $region56
      $region55: #{tpu_custom_call.1} parent=51 // pred_region
        %s466 = sadd.s32 %s29, %s30
        %s467 = smul.u32 32, %s466
        %p468 = scmp.lt.s32.totalorder %s467, 63
        %s469 = scalar_select %p468, %s467, 63
        %s470 = smul.addr %s469, 4
        %s471 = scalar_lea.vmem %s0, %s470
        %s472 = sadd.s32 %s29, %s30
        %s473 = smul.u32 32, %s472
      $region56: #{tpu_custom_call.1} parent=51 // pred_fallthru
        _
      // Predicated region
      $region57: #{tpu_custom_call.1} parent=51 // pred_check
        %p474 = pneg %p84
      $region58: #{tpu_custom_call.1} parent=51 // pred_check_branch
        %476 = sbr.rel (%p474) target = $region60
      $region59: #{tpu_custom_call.1} parent=51 // pred_region
        %s477 = sadd.s32 %s29, %s30
        %s478 = smul.u32 32, %s477
        %p479 = scmp.lt.s32.totalorder %s478, 63
        %s480 = scalar_select %p479, %s478, 63
        %s481 = smul.addr %s480, 4
        %s482 = scalar_lea.vmem %s1, %s481
        %s483 = sadd.s32 %s29, %s30
        %s484 = smul.u32 32, %s483
      $region60: #{tpu_custom_call.1} parent=51 // pred_fallthru
        _
      // Predicated region
      $region61: #{tpu_custom_call.1} parent=51 // pred_check
        %p485 = pneg %p112
      $region62: #{tpu_custom_call.1} parent=51 // pred_check_branch
        %487 = sbr.rel (%p485) target = $region64
      $region63: #{tpu_custom_call.1} parent=51 // pred_region
        %s488 = sadd.s32 %s29, %s30
        %s489 = smul.u32 32, %s488
        %p490 = scmp.lt.s32.totalorder %s489, 63
        %s491 = scalar_select %p490, %s489, 63
        %s492 = smul.addr %s491, 4
        %s493 = scalar_lea.vmem %s2, %s492
        %s494 = sadd.s32 %s29, %s30
        %s495 = smul.u32 32, %s494
      $region64: #{tpu_custom_call.1} parent=51 // pred_fallthru
        _
      // Predicated region
      $region65: #{tpu_custom_call.1} parent=51 // pred_check
        %p496 = pneg %p140
      $region66: #{tpu_custom_call.1} parent=51 // pred_check_branch
        %498 = sbr.rel (%p496) target = $region68
      $region67: #{tpu_custom_call.1} parent=51 // pred_region
        %s499 = sadd.s32 %s29, %s30
        %s500 = smul.u32 32, %s499
        %p501 = scmp.lt.s32.totalorder %s500, 63
        %s502 = scalar_select %p501, %s500, 63
        %s503 = smul.addr %s502, 4
        %s504 = scalar_lea.vmem %s3, %s503
        %s505 = sadd.s32 %s29, %s30
        %s506 = smul.u32 32, %s505
      $region68: #{tpu_custom_call.1} parent=51 // pred_fallthru
        _
      // Predicated region
      $region69: #{tpu_custom_call.1} parent=51 // pred_check
        %p507 = pneg %p292
      $region70: #{tpu_custom_call.1} parent=51 // pred_check_branch
        %509 = sbr.rel (%p507) target = $region72
      $region71: #{tpu_custom_call.1} parent=51 // pred_region
        %p510 = scmp.lt.s32.totalorder %s29, 1
        %s511 = scalar_select %p510, %s29, 1
        %s512 = scalar_lea.vmem %s10, %s511
      $region72: #{tpu_custom_call.1} parent=51 // pred_fallthru
        _
    $region52: #{tpu_custom_call.1} parent=5 // pred_fallthru
      _
    %p513 = scmp.le.s32.totalorder 1, %s22
    %p514 = scmp.lt.s32.totalorder %s22, 3
    %p515 = pnand %p513, %p514
    %p516 = pneg %p515
    // Predicated region
    $region73: #{tpu_custom_call.1} parent=5 // pred_check
      _
    $region74: #{tpu_custom_call.1} parent=5 // pred_check_branch
      %518 = sbr.rel (%p515) target = $region76
    $region75: #{tpu_custom_call.1} parent=5 // pred_region
      %s519 = ssub.s32 %s22, 1
      %s520 = sadd.s32 %s31, %s32
      %s521 = smul.u32 32, %s520
      %p522 = scmp.lt.s32.totalorder %s521, 63
      %s523 = scalar_select %p522, %s521, 63
      %s524 = smul.addr %s523, 4
      %s525 = scalar_lea.vmem %s0, %s524
      %p526 = pneg %p62
      %p527 = pneg %p59
      %s528 = sadd.s32 %s31, %s32
      %s529 = smul.u32 32, %s528
      %p530 = scmp.lt.s32.totalorder %s529, 63
      %s531 = scalar_select %p530, %s529, 63
      %s532 = smul.addr %s531, 4
      %s533 = scalar_lea.vmem %s1, %s532
      %p534 = pneg %p90
      %p535 = pneg %p87
      %s536 = sadd.s32 %s31, %s32
      %s537 = smul.u32 32, %s536
      %p538 = scmp.lt.s32.totalorder %s537, 63
      %s539 = scalar_select %p538, %s537, 63
      %s540 = smul.addr %s539, 4
      %s541 = scalar_lea.vmem %s2, %s540
      %p542 = pneg %p118
      %p543 = pneg %p115
      %s544 = sadd.s32 %s31, %s32
      %s545 = smul.u32 32, %s544
      %p546 = scmp.lt.s32.totalorder %s545, 63
      %s547 = scalar_select %p546, %s545, 63
      %s548 = smul.addr %s547, 4
      %s549 = scalar_lea.vmem %s3, %s548
      %p550 = pneg %p146
      %p551 = pneg %p143
      %p552 = pneg %p167
      %p553 = pneg %p164
      %p554 = pneg %p188
      %p555 = pneg %p185
      %p556 = pneg %p209
      %p557 = pneg %p206
      %p558 = pneg %p230
      %p559 = pneg %p227
      %p560 = pneg %p251
      %p561 = pneg %p248
      %p562 = pneg %p272
      %p563 = pneg %p269
      %p564 = scmp.lt.s32.totalorder %s31, 1
      %s565 = scalar_select %p564, %s31, 1
      %s566 = scalar_lea.vmem %s10, %s565
      %p567 = pneg %p298
      %p568 = pneg %p295
      %p569 = pneg %p319
      %p570 = pneg %p316
      %p571 = pneg %p340
      %p572 = pneg %p337
      %p573 = pneg %p361
      %p574 = pneg %p358
      %p575 = pneg %p389
      %p576 = pneg %p386
      %s577 = sadd.s32 %s31, %s32
      %s578 = smul.u32 32, %s577
      %p579 = scmp.lt.s32.totalorder %s578, 63
      %s580 = scalar_select %p579, %s578, 63
      %s581 = smul.addr %s580, 4
      %s582 = scalar_lea.vmem %s14, %s581
      %p583 = pneg %p417
      %p584 = pneg %p414
      %s585 = sadd.s32 %s31, %s32
      %s586 = smul.u32 32, %s585
      %p587 = scmp.lt.s32.totalorder %s586, 63
      %s588 = scalar_select %p587, %s586, 63
      %s589 = smul.addr %s588, 8
      %s590 = scalar_lea.vmem %s15, %s589
      %s591 = sadd.s32 %s31, %s32
      %s592 = smul.u32 32, %s591
      %p593 = scmp.lt.s32.totalorder %s592, 63
      %s594 = scalar_select %p593, %s592, 63
      %s595 = smul.addr %s594, 4
      %s596 = scalar_lea.vmem %s0, %s595
      %s597 = sadd.s32 %s31, %s32
      %s598 = smul.u32 32, %s597
      %s599 = sadd.s32 %s31, %s32
      %s600 = smul.u32 32, %s599
      %p601 = scmp.lt.s32.totalorder %s600, 63
      %s602 = scalar_select %p601, %s600, 63
      %s603 = smul.addr %s602, 4
      %s604 = scalar_lea.vmem %s1, %s603
      %s605 = sadd.s32 %s31, %s32
      %s606 = smul.u32 32, %s605
      %s607 = sadd.s32 %s31, %s32
      %s608 = smul.u32 32, %s607
      %p609 = scmp.lt.s32.totalorder %s608, 63
      %s610 = scalar_select %p609, %s608, 63
      %s611 = smul.addr %s610, 4
      %s612 = scalar_lea.vmem %s2, %s611
      %s613 = sadd.s32 %s31, %s32
      %s614 = smul.u32 32, %s613
      %s615 = sadd.s32 %s31, %s32
      %s616 = smul.u32 32, %s615
      %p617 = scmp.lt.s32.totalorder %s616, 63
      %s618 = scalar_select %p617, %s616, 63
      %s619 = smul.addr %s618, 4
      %s620 = scalar_lea.vmem %s3, %s619
      %s621 = sadd.s32 %s31, %s32
      %s622 = smul.u32 32, %s621
      %p623 = scmp.lt.s32.totalorder %s31, 1
      %s624 = scalar_select %p623, %s31, 1
      %s625 = scalar_lea.vmem %s10, %s624
      %s626 = sadd.s32 %s31, %s32
      %s627 = smul.u32 32, %s626
      %p628 = scmp.lt.s32.totalorder %s627, 63
      %s629 = scalar_select %p628, %s627, 63
      %s630 = smul.addr %s629, 4
      %s631 = scalar_lea.vmem %s14, %s630
      %s632 = sadd.s32 %s31, %s32
      %s633 = smul.u32 32, %s632
      %s634 = sadd.s32 %s31, %s32
      %s635 = smul.u32 32, %s634
      %p636 = scmp.lt.s32.totalorder %s635, 63
      %s637 = scalar_select %p636, %s635, 63
      %s638 = smul.addr %s637, 8
      %s639 = scalar_lea.vmem %s15, %s638
      %s640 = sadd.s32 %s31, %s32
      %s641 = smul.u32 32, %s640
      %v643 = vld [vmem:[%s596] sm:$0xf]
      %v644 = vld [vmem:[%s596 + $0x4] sm:$0xf]
      %v645 = vld [vmem:[%s596 + $0x8] sm:$0xf]
      %v646 = vld [vmem:[%s596 + $0xc] sm:$0xf]
      %v647 = vld [vmem:[%s596 + $0x10] sm:$0xf]
      %v648 = vld [vmem:[%s596 + $0x14] sm:$0xf]
      %v649 = vld [vmem:[%s596 + $0x18] sm:$0xf]
      %v650 = vld [vmem:[%s596 + $0x1c] sm:$0xf]
      %v651 = vld [vmem:[%s596 + $0x20] sm:$0xf]
      %v652 = vld [vmem:[%s596 + $0x24] sm:$0xf]
      %v653 = vld [vmem:[%s596 + $0x28] sm:$0xf]
      %v654 = vld [vmem:[%s596 + $0x2c] sm:$0xf]
      %v655 = vld [vmem:[%s596 + $0x30] sm:$0xf]
      %v656 = vld [vmem:[%s596 + $0x34] sm:$0xf]
      %v657 = vld [vmem:[%s596 + $0x38] sm:$0xf]
      %v658 = vld [vmem:[%s596 + $0x3c] sm:$0xf]
      %v659 = vld [vmem:[%s596 + $0x40] sm:$0xf]
      %v660 = vld [vmem:[%s596 + $0x44] sm:$0xf]
      %v661 = vld [vmem:[%s596 + $0x48] sm:$0xf]
      %v662 = vld [vmem:[%s596 + $0x4c] sm:$0xf]
      %v663 = vld [vmem:[%s596 + $0x50] sm:$0xf]
      %v664 = vld [vmem:[%s596 + $0x54] sm:$0xf]
      %v665 = vld [vmem:[%s596 + $0x58] sm:$0xf]
      %v666 = vld [vmem:[%s596 + $0x5c] sm:$0xf]
      %v667 = vld [vmem:[%s596 + $0x60] sm:$0xf]
      %v668 = vld [vmem:[%s596 + $0x64] sm:$0xf]
      %v669 = vld [vmem:[%s596 + $0x68] sm:$0xf]
      %v670 = vld [vmem:[%s596 + $0x6c] sm:$0xf]
      %v671 = vld [vmem:[%s596 + $0x70] sm:$0xf]
      %v672 = vld [vmem:[%s596 + $0x74] sm:$0xf]
      %v673 = vld [vmem:[%s596 + $0x78] sm:$0xf]
      %v674 = vld [vmem:[%s596 + $0x7c] sm:$0xf]
      %v675 = vld [vmem:[%s4] sm:$0xf]
      %v676 = vld [vmem:[%s4 + $0x4] sm:$0xf]
      %v677 = vld [vmem:[%s4 + $0x8] sm:$0xf]
      %v678 = vld [vmem:[%s4 + $0xc] sm:$0xf]
      %v711 = vunpack.c.l.b16 %v643
      %v712 = vunpack.c.l.b16 %v644
      %v713 = vunpack.c.l.b16 %v645
      %v714 = vunpack.c.l.b16 %v646
      %v715 = vunpack.c.l.b16 %v647
      %v716 = vunpack.c.l.b16 %v648
      %v717 = vunpack.c.l.b16 %v649
      %v718 = vunpack.c.l.b16 %v650
      %v719 = vunpack.c.l.b16 %v651
      %v720 = vunpack.c.l.b16 %v652
      %v721 = vunpack.c.l.b16 %v653
      %v722 = vunpack.c.l.b16 %v654
      %v723 = vunpack.c.l.b16 %v655
      %v724 = vunpack.c.l.b16 %v656
      %v725 = vunpack.c.l.b16 %v657
      %v726 = vunpack.c.l.b16 %v658
      %v727 = vunpack.c.l.b16 %v659
      %v728 = vunpack.c.l.b16 %v660
      %v729 = vunpack.c.l.b16 %v661
      %v730 = vunpack.c.l.b16 %v662
      %v731 = vunpack.c.l.b16 %v663
      %v732 = vunpack.c.l.b16 %v664
      %v733 = vunpack.c.l.b16 %v665
      %v734 = vunpack.c.l.b16 %v666
      %v735 = vunpack.c.l.b16 %v667
      %v736 = vunpack.c.l.b16 %v668
      %v737 = vunpack.c.l.b16 %v669
      %v738 = vunpack.c.l.b16 %v670
      %v739 = vunpack.c.l.b16 %v671
      %v740 = vunpack.c.l.b16 %v672
      %v741 = vunpack.c.l.b16 %v673
      %v742 = vunpack.c.l.b16 %v674
      %v743 = vpack.c.b16 %v712, %v711
      %v744 = vpack.c.b16 %v714, %v713
      %v745 = vpack.c.b16 %v716, %v715
      %v746 = vpack.c.b16 %v718, %v717
      %v747 = vpack.c.b16 %v720, %v719
      %v748 = vpack.c.b16 %v722, %v721
      %v749 = vpack.c.b16 %v724, %v723
      %v750 = vpack.c.b16 %v726, %v725
      %v751 = vpack.c.b16 %v728, %v727
      %v752 = vpack.c.b16 %v730, %v729
      %v753 = vpack.c.b16 %v732, %v731
      %v754 = vpack.c.b16 %v734, %v733
      %v755 = vpack.c.b16 %v736, %v735
      %v756 = vpack.c.b16 %v738, %v737
      %v757 = vpack.c.b16 %v740, %v739
      %v758 = vpack.c.b16 %v742, %v741
      %v763 = vunpack.c.l.b16 %v675
      %v764 = vunpack.c.l.b16 %v676
      %v765 = vunpack.c.l.b16 %v677
      %v766 = vunpack.c.l.b16 %v678
      %v767 = vpack.c.b16 %v764, %v763
      %v768 = vpack.c.b16 %v766, %v765
      %vm771 = vcmask 261120
      %v773 = vsel %vm771, %v743, 0
      %v776 = vsel %vm771, %v744, 0
      %v779 = vsel %vm771, %v745, 0
      %v782 = vsel %vm771, %v746, 0
      %v785 = vsel %vm771, %v747, 0
      %v788 = vsel %vm771, %v748, 0
      %v791 = vsel %vm771, %v749, 0
      %v794 = vsel %vm771, %v750, 0
      %v797 = vsel %vm771, %v751, 0
      %v800 = vsel %vm771, %v752, 0
      %v803 = vsel %vm771, %v753, 0
      %v806 = vsel %vm771, %v754, 0
      %v809 = vsel %vm771, %v755, 0
      %v812 = vsel %vm771, %v756, 0
      %v815 = vsel %vm771, %v757, 0
      %v818 = vsel %vm771, %v758, 0
      %820 = vmatprep.subr.bf16.mxu0 0
      %821 = vmatpush1.bf16.msra.mxu0 %v767
      %822 = vmatprep.subr.bf16.mxu0 0
      %823 = vmatpush1.bf16.msra.mxu0 %v768
      %824 = vmatprep.subr.bf16.mxu0 0
      %825 = vmatpush1.bf16.msra.mxu0 0
      %826 = vmatprep.subr.bf16.mxu0 0
      %827 = vmatpush1.bf16.msra.mxu0 0
      %828 = vmatprep.subr.bf16.mxu0 0
      %829 = vmatpush1.bf16.msra.mxu0 0
      %830 = vmatprep.subr.bf16.mxu0 0
      %831 = vmatpush1.bf16.msra.mxu0 0
      %832 = vmatprep.subr.bf16.mxu0 0
      %833 = vmatpush1.bf16.msra.mxu0 0
      %834 = vmatprep.subr.bf16.mxu0 0
      %835 = vmatpush1.bf16.msra.mxu0 0
      %836 = vmatprep.subr.bf16.mxu0 0
      %837 = vmatpush1.bf16.msra.mxu0 0
      %838 = vmatprep.subr.bf16.mxu0 0
      %839 = vmatpush1.bf16.msra.mxu0 0
      %840 = vmatprep.subr.bf16.mxu0 0
      %841 = vmatpush1.bf16.msra.mxu0 0
      %842 = vmatprep.subr.bf16.mxu0 0
      %843 = vmatpush1.bf16.msra.mxu0 0
      %844 = vmatprep.subr.bf16.mxu0 0
      %845 = vmatpush1.bf16.msra.mxu0 0
      %846 = vmatprep.subr.bf16.mxu0 0
      %847 = vmatpush1.bf16.msra.mxu0 0
      %848 = vmatprep.subr.bf16.mxu0 0
      %849 = vmatpush1.bf16.msra.mxu0 0
      %850 = vmatprep.subr.bf16.mxu0 0
      %851 = vmatpush1.bf16.msra.mxu0 0
      %852 = vmatprep.mubr.bf16.mxu0 0
      %853 = vmatmul.mubr.bf16.gmra.mrb[0].mxu0 %v773
      %v854 = vpop.f32.mrb[0].mxu0
      %v855 = vadd.f32 0.0, %v854
      %v856 = vpop.f32.mrb[0].mxu0
      %v857 = vpop.f32.mrb[0].mxu0
      %v858 = vadd.f32 0.0, %v857
      %v859 = vpop.f32.mrb[0].mxu0
      %860 = vmatprep.mubr.bf16.mxu0 0
      %861 = vmatmul.mubr.bf16.gmra.mrb[0].mxu0 %v776
      %v862 = vpop.f32.mrb[0].mxu0
      %v863 = vadd.f32 0.0, %v862
      %v864 = vpop.f32.mrb[0].mxu0
      %v865 = vpop.f32.mrb[0].mxu0
      %v866 = vadd.f32 0.0, %v865
      %v867 = vpop.f32.mrb[0].mxu0
      %868 = vmatprep.mubr.bf16.mxu0 0
      %869 = vmatmul.mubr.bf16.gmra.mrb[0].mxu0 %v779
      %v870 = vpop.f32.mrb[0].mxu0
      %v871 = vadd.f32 0.0, %v870
      %v872 = vpop.f32.mrb[0].mxu0
      %v873 = vpop.f32.mrb[0].mxu0
      %v874 = vadd.f32 0.0, %v873
      %v875 = vpop.f32.mrb[0].mxu0
      %876 = vmatprep.mubr.bf16.mxu0 0
      %877 = vmatmul.mubr.bf16.gmra.mrb[0].mxu0 %v782
      %v878 = vpop.f32.mrb[0].mxu0
      %v879 = vadd.f32 0.0, %v878
      %v880 = vpop.f32.mrb[0].mxu0
      %v881 = vpop.f32.mrb[0].mxu0
      %v882 = vadd.f32 0.0, %v881
      %v883 = vpop.f32.mrb[0].mxu0
      %884 = vmatprep.mubr.bf16.mxu0 0
      %885 = vmatmul.mubr.bf16.gmra.mrb[0].mxu0 %v785
      %v886 = vpop.f32.mrb[0].mxu0
      %v887 = vadd.f32 0.0, %v886
      %v888 = vpop.f32.mrb[0].mxu0
      %v889 = vpop.f32.mrb[0].mxu0
      %v890 = vadd.f32 0.0, %v889
      %v891 = vpop.f32.mrb[0].mxu0
      %892 = vmatprep.mubr.bf16.mxu0 0
      %893 = vmatmul.mubr.bf16.gmra.mrb[0].mxu0 %v788
      %v894 = vpop.f32.mrb[0].mxu0
      %v895 = vadd.f32 0.0, %v894
      %v896 = vpop.f32.mrb[0].mxu0
      %v897 = vpop.f32.mrb[0].mxu0
      %v898 = vadd.f32 0.0, %v897
      %v899 = vpop.f32.mrb[0].mxu0
      %900 = vmatprep.mubr.bf16.mxu0 0
      %901 = vmatmul.mubr.bf16.gmra.mrb[0].mxu0 %v791
      %v902 = vpop.f32.mrb[0].mxu0
      %v903 = vadd.f32 0.0, %v902
      %v904 = vpop.f32.mrb[0].mxu0
      %v905 = vpop.f32.mrb[0].mxu0
      %v906 = vadd.f32 0.0, %v905
      %v907 = vpop.f32.mrb[0].mxu0
      %908 = vmatprep.mubr.bf16.mxu0 0
      %909 = vmatmul.mubr.bf16.gmra.mrb[0].mxu0 %v794
      %v910 = vpop.f32.mrb[0].mxu0
      %v911 = vadd.f32 0.0, %v910
      %v912 = vpop.f32.mrb[0].mxu0
      %v913 = vpop.f32.mrb[0].mxu0
      %v914 = vadd.f32 0.0, %v913
      %v915 = vpop.f32.mrb[0].mxu0
      %916 = vmatprep.mubr.bf16.mxu0 0
      %917 = vmatmul.mubr.bf16.gmra.mrb[0].mxu0 %v797
      %v918 = vpop.f32.mrb[0].mxu0
      %v919 = vadd.f32 0.0, %v918
      %v920 = vpop.f32.mrb[0].mxu0
      %v921 = vpop.f32.mrb[0].mxu0
      %v922 = vadd.f32 0.0, %v921
      %v923 = vpop.f32.mrb[0].mxu0
      %924 = vmatprep.mubr.bf16.mxu0 0
      %925 = vmatmul.mubr.bf16.gmra.mrb[0].mxu0 %v800
      %v926 = vpop.f32.mrb[0].mxu0
      %v927 = vadd.f32 0.0, %v926
      %v928 = vpop.f32.mrb[0].mxu0
      %v929 = vpop.f32.mrb[0].mxu0
      %v930 = vadd.f32 0.0, %v929
      %v931 = vpop.f32.mrb[0].mxu0
      %932 = vmatprep.mubr.bf16.mxu0 0
      %933 = vmatmul.mubr.bf16.gmra.mrb[0].mxu0 %v803
      %v934 = vpop.f32.mrb[0].mxu0
      %v935 = vadd.f32 0.0, %v934
      %v936 = vpop.f32.mrb[0].mxu0
      %v937 = vpop.f32.mrb[0].mxu0
      %v938 = vadd.f32 0.0, %v937
      %v939 = vpop.f32.mrb[0].mxu0
      %940 = vmatprep.mubr.bf16.mxu0 0
      %941 = vmatmul.mubr.bf16.gmra.mrb[0].mxu0 %v806
      %v942 = vpop.f32.mrb[0].mxu0
      %v943 = vadd.f32 0.0, %v942
      %v944 = vpop.f32.mrb[0].mxu0
      %v945 = vpop.f32.mrb[0].mxu0
      %v946 = vadd.f32 0.0, %v945
      %v947 = vpop.f32.mrb[0].mxu0
      %948 = vmatprep.mubr.bf16.mxu0 0
      %949 = vmatmul.mubr.bf16.gmra.mrb[0].mxu0 %v809
      %v950 = vpop.f32.mrb[0].mxu0
      %v951 = vadd.f32 0.0, %v950
      %v952 = vpop.f32.mrb[0].mxu0
      %v953 = vpop.f32.mrb[0].mxu0
      %v954 = vadd.f32 0.0, %v953
      %v955 = vpop.f32.mrb[0].mxu0
      %956 = vmatprep.mubr.bf16.mxu0 0
      %957 = vmatmul.mubr.bf16.gmra.mrb[0].mxu0 %v812
      %v958 = vpop.f32.mrb[0].mxu0
      %v959 = vadd.f32 0.0, %v958
      %v960 = vpop.f32.mrb[0].mxu0
      %v961 = vpop.f32.mrb[0].mxu0
      %v962 = vadd.f32 0.0, %v961
      %v963 = vpop.f32.mrb[0].mxu0
      %964 = vmatprep.mubr.bf16.mxu0 0
      %965 = vmatmul.mubr.bf16.gmra.mrb[0].mxu0 %v815
      %v966 = vpop.f32.mrb[0].mxu0
      %v967 = vadd.f32 0.0, %v966
      %v968 = vpop.f32.mrb[0].mxu0
      %v969 = vpop.f32.mrb[0].mxu0
      %v970 = vadd.f32 0.0, %v969
      %v971 = vpop.f32.mrb[0].mxu0
      %972 = vmatprep.mubr.bf16.mxu0 0
      %973 = vmatmul.mubr.bf16.gmra.mrb[0].mxu0 %v818
      %v974 = vpop.f32.mrb[0].mxu0
      %v975 = vadd.f32 0.0, %v974
      %v976 = vpop.f32.mrb[0].mxu0
      %v977 = vpop.f32.mrb[0].mxu0
      %v978 = vadd.f32 0.0, %v977
      %v979 = vpop.f32.mrb[0].mxu0
      %980 = vdwg.mxu0
      %v981 = vpack.c.bf16 %v858, %v855
      %v982 = vpack.c.bf16 %v866, %v863
      %v983 = vpack.c.bf16 %v874, %v871
      %v984 = vpack.c.bf16 %v882, %v879
      %v985 = vpack.c.bf16 %v890, %v887
      %v986 = vpack.c.bf16 %v898, %v895
      %v987 = vpack.c.bf16 %v906, %v903
      %v988 = vpack.c.bf16 %v914, %v911
      %v989 = vpack.c.bf16 %v922, %v919
      %v990 = vpack.c.bf16 %v930, %v927
      %v991 = vpack.c.bf16 %v938, %v935
      %v992 = vpack.c.bf16 %v946, %v943
      %v993 = vpack.c.bf16 %v954, %v951
      %v994 = vpack.c.bf16 %v962, %v959
      %v995 = vpack.c.bf16 %v970, %v967
      %v996 = vpack.c.bf16 %v978, %v975
      %v1013 = vunpack.c.l.b16 %v981
      %v1014 = vunpack.c.h.b16 %v981
      %v1015 = vunpack.c.l.b16 %v982
      %v1016 = vunpack.c.h.b16 %v982
      %v1017 = vunpack.c.l.b16 %v983
      %v1018 = vunpack.c.h.b16 %v983
      %v1019 = vunpack.c.l.b16 %v984
      %v1020 = vunpack.c.h.b16 %v984
      %v1021 = vunpack.c.l.b16 %v985
      %v1022 = vunpack.c.h.b16 %v985
      %v1023 = vunpack.c.l.b16 %v986
      %v1024 = vunpack.c.h.b16 %v986
      %v1025 = vunpack.c.l.b16 %v987
      %v1026 = vunpack.c.h.b16 %v987
      %v1027 = vunpack.c.l.b16 %v988
      %v1028 = vunpack.c.h.b16 %v988
      %v1029 = vunpack.c.l.b16 %v989
      %v1030 = vunpack.c.h.b16 %v989
      %v1031 = vunpack.c.l.b16 %v990
      %v1032 = vunpack.c.h.b16 %v990
      %v1033 = vunpack.c.l.b16 %v991
      %v1034 = vunpack.c.h.b16 %v991
      %v1035 = vunpack.c.l.b16 %v992
      %v1036 = vunpack.c.h.b16 %v992
      %v1037 = vunpack.c.l.b16 %v993
      %v1038 = vunpack.c.h.b16 %v993
      %v1039 = vunpack.c.l.b16 %v994
      %v1040 = vunpack.c.h.b16 %v994
      %v1041 = vunpack.c.l.b16 %v995
      %v1042 = vunpack.c.h.b16 %v995
      %v1043 = vunpack.c.l.b16 %v996
      %v1044 = vunpack.c.h.b16 %v996
      %v1045 = vpack.c.b16 %v1013, %v1013
      %v1046 = vpack.c.b16 %v1014, %v1014
      %v1047 = vpack.c.b16 %v1015, %v1015
      %v1048 = vpack.c.b16 %v1016, %v1016
      %v1049 = vpack.c.b16 %v1017, %v1017
      %v1050 = vpack.c.b16 %v1018, %v1018
      %v1051 = vpack.c.b16 %v1019, %v1019
      %v1052 = vpack.c.b16 %v1020, %v1020
      %v1053 = vpack.c.b16 %v1021, %v1021
      %v1054 = vpack.c.b16 %v1022, %v1022
      %v1055 = vpack.c.b16 %v1023, %v1023
      %v1056 = vpack.c.b16 %v1024, %v1024
      %v1057 = vpack.c.b16 %v1025, %v1025
      %v1058 = vpack.c.b16 %v1026, %v1026
      %v1059 = vpack.c.b16 %v1027, %v1027
      %v1060 = vpack.c.b16 %v1028, %v1028
      %v1061 = vpack.c.b16 %v1029, %v1029
      %v1062 = vpack.c.b16 %v1030, %v1030
      %v1063 = vpack.c.b16 %v1031, %v1031
      %v1064 = vpack.c.b16 %v1032, %v1032
      %v1065 = vpack.c.b16 %v1033, %v1033
      %v1066 = vpack.c.b16 %v1034, %v1034
      %v1067 = vpack.c.b16 %v1035, %v1035
      %v1068 = vpack.c.b16 %v1036, %v1036
      %v1069 = vpack.c.b16 %v1037, %v1037
      %v1070 = vpack.c.b16 %v1038, %v1038
      %v1071 = vpack.c.b16 %v1039, %v1039
      %v1072 = vpack.c.b16 %v1040, %v1040
      %v1073 = vpack.c.b16 %v1041, %v1041
      %v1074 = vpack.c.b16 %v1042, %v1042
      %v1075 = vpack.c.b16 %v1043, %v1043
      %v1076 = vpack.c.b16 %v1044, %v1044
      %vm1109 = vcmask 781312
      %1110 = vst.msk [vmem:[%s631] sm:$0xf] %vm1109, %v1045
      %1111 = vst.msk [vmem:[%s631 + $0x4] sm:$0xf] %vm1109, %v1046
      %1112 = vst.msk [vmem:[%s631 + $0x8] sm:$0xf] %vm1109, %v1047
      %1113 = vst.msk [vmem:[%s631 + $0xc] sm:$0xf] %vm1109, %v1048
      %1114 = vst.msk [vmem:[%s631 + $0x10] sm:$0xf] %vm1109, %v1049
      %1115 = vst.msk [vmem:[%s631 + $0x14] sm:$0xf] %vm1109, %v1050
      %1116 = vst.msk [vmem:[%s631 + $0x18] sm:$0xf] %vm1109, %v1051
      %1117 = vst.msk [vmem:[%s631 + $0x1c] sm:$0xf] %vm1109, %v1052
      %1118 = vst.msk [vmem:[%s631 + $0x20] sm:$0xf] %vm1109, %v1053
      %1119 = vst.msk [vmem:[%s631 + $0x24] sm:$0xf] %vm1109, %v1054
      %1120 = vst.msk [vmem:[%s631 + $0x28] sm:$0xf] %vm1109, %v1055
      %1121 = vst.msk [vmem:[%s631 + $0x2c] sm:$0xf] %vm1109, %v1056
      %1122 = vst.msk [vmem:[%s631 + $0x30] sm:$0xf] %vm1109, %v1057
      %1123 = vst.msk [vmem:[%s631 + $0x34] sm:$0xf] %vm1109, %v1058
      %1124 = vst.msk [vmem:[%s631 + $0x38] sm:$0xf] %vm1109, %v1059
      %1125 = vst.msk [vmem:[%s631 + $0x3c] sm:$0xf] %vm1109, %v1060
      %1126 = vst.msk [vmem:[%s631 + $0x40] sm:$0xf] %vm1109, %v1061
      %1127 = vst.msk [vmem:[%s631 + $0x44] sm:$0xf] %vm1109, %v1062
      %1128 = vst.msk [vmem:[%s631 + $0x48] sm:$0xf] %vm1109, %v1063
      %1129 = vst.msk [vmem:[%s631 + $0x4c] sm:$0xf] %vm1109, %v1064
      %1130 = vst.msk [vmem:[%s631 + $0x50] sm:$0xf] %vm1109, %v1065
      %1131 = vst.msk [vmem:[%s631 + $0x54] sm:$0xf] %vm1109, %v1066
      %1132 = vst.msk [vmem:[%s631 + $0x58] sm:$0xf] %vm1109, %v1067
      %1133 = vst.msk [vmem:[%s631 + $0x5c] sm:$0xf] %vm1109, %v1068
      %1134 = vst.msk [vmem:[%s631 + $0x60] sm:$0xf] %vm1109, %v1069
      %1135 = vst.msk [vmem:[%s631 + $0x64] sm:$0xf] %vm1109, %v1070
      %1136 = vst.msk [vmem:[%s631 + $0x68] sm:$0xf] %vm1109, %v1071
      %1137 = vst.msk [vmem:[%s631 + $0x6c] sm:$0xf] %vm1109, %v1072
      %1138 = vst.msk [vmem:[%s631 + $0x70] sm:$0xf] %vm1109, %v1073
      %1139 = vst.msk [vmem:[%s631 + $0x74] sm:$0xf] %vm1109, %v1074
      %1140 = vst.msk [vmem:[%s631 + $0x78] sm:$0xf] %vm1109, %v1075
      %1141 = vst.msk [vmem:[%s631 + $0x7c] sm:$0xf] %vm1109, %v1076
      %v1142 = vld [vmem:[%s5] sm:$0xf]
      %v1143 = vld [vmem:[%s5 + $0x4] sm:$0xf]
      %v1144 = vld [vmem:[%s5 + $0x8] sm:$0xf]
      %v1145 = vld [vmem:[%s5 + $0xc] sm:$0xf]
      %v1150 = vunpack.c.l.b16 %v1142
      %v1151 = vunpack.c.l.b16 %v1143
      %v1152 = vunpack.c.l.b16 %v1144
      %v1153 = vunpack.c.l.b16 %v1145
      %v1154 = vpack.c.b16 %v1151, %v1150
      %v1155 = vpack.c.b16 %v1153, %v1152
      %1158 = vmatprep.subr.bf16.mxu0 0
      %1159 = vmatpush1.bf16.msra.mxu0 %v1154
      %1160 = vmatprep.subr.bf16.mxu0 0
      %1161 = vmatpush1.bf16.msra.mxu0 %v1155
      %1162 = vmatprep.subr.bf16.mxu0 0
      %1163 = vmatpush1.bf16.msra.mxu0 0
      %1164 = vmatprep.subr.bf16.mxu0 0
      %1165 = vmatpush1.bf16.msra.mxu0 0
      %1166 = vmatprep.subr.bf16.mxu0 0
      %1167 = vmatpush1.bf16.msra.mxu0 0
      %1168 = vmatprep.subr.bf16.mxu0 0
      %1169 = vmatpush1.bf16.msra.mxu0 0
      %1170 = vmatprep.subr.bf16.mxu0 0
      %1171 = vmatpush1.bf16.msra.mxu0 0
      %1172 = vmatprep.subr.bf16.mxu0 0
      %1173 = vmatpush1.bf16.msra.mxu0 0
      %1174 = vmatprep.subr.bf16.mxu0 0
      %1175 = vmatpush1.bf16.msra.mxu0 0
      %1176 = vmatprep.subr.bf16.mxu0 0
      %1177 = vmatpush1.bf16.msra.mxu0 0
      %1178 = vmatprep.subr.bf16.mxu0 0
      %1179 = vmatpush1.bf16.msra.mxu0 0
      %1180 = vmatprep.subr.bf16.mxu0 0
      %1181 = vmatpush1.bf16.msra.mxu0 0
      %1182 = vmatprep.subr.bf16.mxu0 0
      %1183 = vmatpush1.bf16.msra.mxu0 0
      %1184 = vmatprep.subr.bf16.mxu0 0
      %1185 = vmatpush1.bf16.msra.mxu0 0
      %1186 = vmatprep.subr.bf16.mxu0 0
      %1187 = vmatpush1.bf16.msra.mxu0 0
      %1188 = vmatprep.subr.bf16.mxu0 0
      %1189 = vmatpush1.bf16.msra.mxu0 0
      %1190 = vmatprep.mubr.bf16.mxu0 0
      %1191 = vmatmul.mubr.bf16.gmra.mrb[0].mxu0 %v773
      %v1192 = vpop.f32.mrb[0].mxu0
      %v1193 = vadd.f32 0.0, %v1192
      %v1194 = vpop.f32.mrb[0].mxu0
      %v1195 = vpop.f32.mrb[0].mxu0
      %v1196 = vadd.f32 0.0, %v1195
      %v1197 = vpop.f32.mrb[0].mxu0
      %1198 = vmatprep.mubr.bf16.mxu0 0
      %1199 = vmatmul.mubr.bf16.gmra.mrb[0].mxu0 %v776
      %v1200 = vpop.f32.mrb[0].mxu0
      %v1201 = vadd.f32 0.0, %v1200
      %v1202 = vpop.f32.mrb[0].mxu0
      %v1203 = vpop.f32.mrb[0].mxu0
      %v1204 = vadd.f32 0.0, %v1203
      %v1205 = vpop.f32.mrb[0].mxu0
      %1206 = vmatprep.mubr.bf16.mxu0 0
      %1207 = vmatmul.mubr.bf16.gmra.mrb[0].mxu0 %v779
      %v1208 = vpop.f32.mrb[0].mxu0
      %v1209 = vadd.f32 0.0, %v1208
      %v1210 = vpop.f32.mrb[0].mxu0
      %v1211 = vpop.f32.mrb[0].mxu0
      %v1212 = vadd.f32 0.0, %v1211
      %v1213 = vpop.f32.mrb[0].mxu0
      %1214 = vmatprep.mubr.bf16.mxu0 0
      %1215 = vmatmul.mubr.bf16.gmra.mrb[0].mxu0 %v782
      %v1216 = vpop.f32.mrb[0].mxu0
      %v1217 = vadd.f32 0.0, %v1216
      %v1218 = vpop.f32.mrb[0].mxu0
      %v1219 = vpop.f32.mrb[0].mxu0
      %v1220 = vadd.f32 0.0, %v1219
      %v1221 = vpop.f32.mrb[0].mxu0
      %1222 = vmatprep.mubr.bf16.mxu0 0
      %1223 = vmatmul.mubr.bf16.gmra.mrb[0].mxu0 %v785
      %v1224 = vpop.f32.mrb[0].mxu0
      %v1225 = vadd.f32 0.0, %v1224
      %v1226 = vpop.f32.mrb[0].mxu0
      %v1227 = vpop.f32.mrb[0].mxu0
      %v1228 = vadd.f32 0.0, %v1227
      %v1229 = vpop.f32.mrb[0].mxu0
      %1230 = vmatprep.mubr.bf16.mxu0 0
      %1231 = vmatmul.mubr.bf16.gmra.mrb[0].mxu0 %v788
      %v1232 = vpop.f32.mrb[0].mxu0
      %v1233 = vadd.f32 0.0, %v1232
      %v1234 = vpop.f32.mrb[0].mxu0
      %v1235 = vpop.f32.mrb[0].mxu0
      %v1236 = vadd.f32 0.0, %v1235
      %v1237 = vpop.f32.mrb[0].mxu0
      %1238 = vmatprep.mubr.bf16.mxu0 0
      %1239 = vmatmul.mubr.bf16.gmra.mrb[0].mxu0 %v791
      %v1240 = vpop.f32.mrb[0].mxu0
      %v1241 = vadd.f32 0.0, %v1240
      %v1242 = vpop.f32.mrb[0].mxu0
      %v1243 = vpop.f32.mrb[0].mxu0
      %v1244 = vadd.f32 0.0, %v1243
      %v1245 = vpop.f32.mrb[0].mxu0
      %1246 = vmatprep.mubr.bf16.mxu0 0
      %1247 = vmatmul.mubr.bf16.gmra.mrb[0].mxu0 %v794
      %v1248 = vpop.f32.mrb[0].mxu0
      %v1249 = vadd.f32 0.0, %v1248
      %v1250 = vpop.f32.mrb[0].mxu0
      %v1251 = vpop.f32.mrb[0].mxu0
      %v1252 = vadd.f32 0.0, %v1251
      %v1253 = vpop.f32.mrb[0].mxu0
      %1254 = vmatprep.mubr.bf16.mxu0 0
      %1255 = vmatmul.mubr.bf16.gmra.mrb[0].mxu0 %v797
      %v1256 = vpop.f32.mrb[0].mxu0
      %v1257 = vadd.f32 0.0, %v1256
      %v1258 = vpop.f32.mrb[0].mxu0
      %v1259 = vpop.f32.mrb[0].mxu0
      %v1260 = vadd.f32 0.0, %v1259
      %v1261 = vpop.f32.mrb[0].mxu0
      %1262 = vmatprep.mubr.bf16.mxu0 0
      %1263 = vmatmul.mubr.bf16.gmra.mrb[0].mxu0 %v800
      %v1264 = vpop.f32.mrb[0].mxu0
      %v1265 = vadd.f32 0.0, %v1264
      %v1266 = vpop.f32.mrb[0].mxu0
      %v1267 = vpop.f32.mrb[0].mxu0
      %v1268 = vadd.f32 0.0, %v1267
      %v1269 = vpop.f32.mrb[0].mxu0
      %1270 = vmatprep.mubr.bf16.mxu0 0
      %1271 = vmatmul.mubr.bf16.gmra.mrb[0].mxu0 %v803
      %v1272 = vpop.f32.mrb[0].mxu0
      %v1273 = vadd.f32 0.0, %v1272
      %v1274 = vpop.f32.mrb[0].mxu0
      %v1275 = vpop.f32.mrb[0].mxu0
      %v1276 = vadd.f32 0.0, %v1275
      %v1277 = vpop.f32.mrb[0].mxu0
      %1278 = vmatprep.mubr.bf16.mxu0 0
      %1279 = vmatmul.mubr.bf16.gmra.mrb[0].mxu0 %v806
      %v1280 = vpop.f32.mrb[0].mxu0
      %v1281 = vadd.f32 0.0, %v1280
      %v1282 = vpop.f32.mrb[0].mxu0
      %v1283 = vpop.f32.mrb[0].mxu0
      %v1284 = vadd.f32 0.0, %v1283
      %v1285 = vpop.f32.mrb[0].mxu0
      %1286 = vmatprep.mubr.bf16.mxu0 0
      %1287 = vmatmul.mubr.bf16.gmra.mrb[0].mxu0 %v809
      %v1288 = vpop.f32.mrb[0].mxu0
      %v1289 = vadd.f32 0.0, %v1288
      %v1290 = vpop.f32.mrb[0].mxu0
      %v1291 = vpop.f32.mrb[0].mxu0
      %v1292 = vadd.f32 0.0, %v1291
      %v1293 = vpop.f32.mrb[0].mxu0
      %1294 = vmatprep.mubr.bf16.mxu0 0
      %1295 = vmatmul.mubr.bf16.gmra.mrb[0].mxu0 %v812
      %v1296 = vpop.f32.mrb[0].mxu0
      %v1297 = vadd.f32 0.0, %v1296
      %v1298 = vpop.f32.mrb[0].mxu0
      %v1299 = vpop.f32.mrb[0].mxu0
      %v1300 = vadd.f32 0.0, %v1299
      %v1301 = vpop.f32.mrb[0].mxu0
      %1302 = vmatprep.mubr.bf16.mxu0 0
      %1303 = vmatmul.mubr.bf16.gmra.mrb[0].mxu0 %v815
      %v1304 = vpop.f32.mrb[0].mxu0
      %v1305 = vadd.f32 0.0, %v1304
      %v1306 = vpop.f32.mrb[0].mxu0
      %v1307 = vpop.f32.mrb[0].mxu0
      %v1308 = vadd.f32 0.0, %v1307
      %v1309 = vpop.f32.mrb[0].mxu0
      %1310 = vmatprep.mubr.bf16.mxu0 0
      %1311 = vmatmul.mubr.bf16.gmra.mrb[0].mxu0 %v818
      %v1312 = vpop.f32.mrb[0].mxu0
      %v1313 = vadd.f32 0.0, %v1312
      %v1314 = vpop.f32.mrb[0].mxu0
      %v1315 = vpop.f32.mrb[0].mxu0
      %v1316 = vadd.f32 0.0, %v1315
      %v1317 = vpop.f32.mrb[0].mxu0
      %1318 = vdwg.mxu0
      %v1319 = vld [vmem:[%s6] sm:$0x1]
      %v1321 = vlaneseq
      %v1322 = vshrl.u32 %v1321, 7
      %v1323 = vsub.s32 0, %v1322
      %v1324 = vrot.slane %v1319, %v1323
      %v1326 = vmul.f32 %v1193, %v1324
      %v1327 = vmul.f32 %v1196, %v1324
      %v1328 = vmul.f32 %v1201, %v1324
      %v1329 = vmul.f32 %v1204, %v1324
      %v1330 = vmul.f32 %v1209, %v1324
      %v1331 = vmul.f32 %v1212, %v1324
      %v1332 = vmul.f32 %v1217, %v1324
      %v1333 = vmul.f32 %v1220, %v1324
      %v1334 = vmul.f32 %v1225, %v1324
      %v1335 = vmul.f32 %v1228, %v1324
      %v1336 = vmul.f32 %v1233, %v1324
      %v1337 = vmul.f32 %v1236, %v1324
      %v1338 = vmul.f32 %v1241, %v1324
      %v1339 = vmul.f32 %v1244, %v1324
      %v1340 = vmul.f32 %v1249, %v1324
      %v1341 = vmul.f32 %v1252, %v1324
      %v1342 = vmul.f32 %v1257, %v1324
      %v1343 = vmul.f32 %v1260, %v1324
      %v1344 = vmul.f32 %v1265, %v1324
      %v1345 = vmul.f32 %v1268, %v1324
      %v1346 = vmul.f32 %v1273, %v1324
      %v1347 = vmul.f32 %v1276, %v1324
      %v1348 = vmul.f32 %v1281, %v1324
      %v1349 = vmul.f32 %v1284, %v1324
      %v1350 = vmul.f32 %v1289, %v1324
      %v1351 = vmul.f32 %v1292, %v1324
      %v1352 = vmul.f32 %v1297, %v1324
      %v1353 = vmul.f32 %v1300, %v1324
      %v1354 = vmul.f32 %v1305, %v1324
      %v1355 = vmul.f32 %v1308, %v1324
      %v1356 = vmul.f32 %v1313, %v1324
      %v1357 = vmul.f32 %v1316, %v1324
      %v1358 = vld [vmem:[%s7] sm:$0x1]
      %v1360 = vlaneseq
      %v1361 = vshrl.u32 %v1360, 7
      %v1362 = vsub.s32 0, %v1361
      %v1363 = vrot.slane %v1358, %v1362
      %v1365 = vadd.f32 %v1326, %v1363
      %v1366 = vadd.f32 %v1327, %v1363
      %v1367 = vadd.f32 %v1328, %v1363
      %v1368 = vadd.f32 %v1329, %v1363
      %v1369 = vadd.f32 %v1330, %v1363
      %v1370 = vadd.f32 %v1331, %v1363
      %v1371 = vadd.f32 %v1332, %v1363
      %v1372 = vadd.f32 %v1333, %v1363
      %v1373 = vadd.f32 %v1334, %v1363
      %v1374 = vadd.f32 %v1335, %v1363
      %v1375 = vadd.f32 %v1336, %v1363
      %v1376 = vadd.f32 %v1337, %v1363
      %v1377 = vadd.f32 %v1338, %v1363
      %v1378 = vadd.f32 %v1339, %v1363
      %v1379 = vadd.f32 %v1340, %v1363
      %v1380 = vadd.f32 %v1341, %v1363
      %v1381 = vadd.f32 %v1342, %v1363
      %v1382 = vadd.f32 %v1343, %v1363
      %v1383 = vadd.f32 %v1344, %v1363
      %v1384 = vadd.f32 %v1345, %v1363
      %v1385 = vadd.f32 %v1346, %v1363
      %v1386 = vadd.f32 %v1347, %v1363
      %v1387 = vadd.f32 %v1348, %v1363
      %v1388 = vadd.f32 %v1349, %v1363
      %v1389 = vadd.f32 %v1350, %v1363
      %v1390 = vadd.f32 %v1351, %v1363
      %v1391 = vadd.f32 %v1352, %v1363
      %v1392 = vadd.f32 %v1353, %v1363
      %v1393 = vadd.f32 %v1354, %v1363
      %v1394 = vadd.f32 %v1355, %v1363
      %v1395 = vadd.f32 %v1356, %v1363
      %v1396 = vadd.f32 %v1357, %v1363
      %v1397 = vmax.f32 %v1365, 0.0
      %v1398 = vmax.f32 %v1366, 0.0
      %v1399 = vmax.f32 %v1367, 0.0
      %v1400 = vmax.f32 %v1368, 0.0
      %v1401 = vmax.f32 %v1369, 0.0
      %v1402 = vmax.f32 %v1370, 0.0
      %v1403 = vmax.f32 %v1371, 0.0
      %v1404 = vmax.f32 %v1372, 0.0
      %v1405 = vmax.f32 %v1373, 0.0
      %v1406 = vmax.f32 %v1374, 0.0
      %v1407 = vmax.f32 %v1375, 0.0
      %v1408 = vmax.f32 %v1376, 0.0
      %v1409 = vmax.f32 %v1377, 0.0
      %v1410 = vmax.f32 %v1378, 0.0
      %v1411 = vmax.f32 %v1379, 0.0
      %v1412 = vmax.f32 %v1380, 0.0
      %v1413 = vmax.f32 %v1381, 0.0
      %v1414 = vmax.f32 %v1382, 0.0
      %v1415 = vmax.f32 %v1383, 0.0
      %v1416 = vmax.f32 %v1384, 0.0
      %v1417 = vmax.f32 %v1385, 0.0
      %v1418 = vmax.f32 %v1386, 0.0
      %v1419 = vmax.f32 %v1387, 0.0
      %v1420 = vmax.f32 %v1388, 0.0
      %v1421 = vmax.f32 %v1389, 0.0
      %v1422 = vmax.f32 %v1390, 0.0
      %v1423 = vmax.f32 %v1391, 0.0
      %v1424 = vmax.f32 %v1392, 0.0
      %v1425 = vmax.f32 %v1393, 0.0
      %v1426 = vmax.f32 %v1394, 0.0
      %v1427 = vmax.f32 %v1395, 0.0
      %v1428 = vmax.f32 %v1396, 0.0
      %v1429 = vmin.f32 %v1397, 6.0
      %v1430 = vmin.f32 %v1398, 6.0
      %v1431 = vmin.f32 %v1399, 6.0
      %v1432 = vmin.f32 %v1400, 6.0
      %v1433 = vmin.f32 %v1401, 6.0
      %v1434 = vmin.f32 %v1402, 6.0
      %v1435 = vmin.f32 %v1403, 6.0
      %v1436 = vmin.f32 %v1404, 6.0
      %v1437 = vmin.f32 %v1405, 6.0
      %v1438 = vmin.f32 %v1406, 6.0
      %v1439 = vmin.f32 %v1407, 6.0
      %v1440 = vmin.f32 %v1408, 6.0
      %v1441 = vmin.f32 %v1409, 6.0
      %v1442 = vmin.f32 %v1410, 6.0
      %v1443 = vmin.f32 %v1411, 6.0
      %v1444 = vmin.f32 %v1412, 6.0
      %v1445 = vmin.f32 %v1413, 6.0
      %v1446 = vmin.f32 %v1414, 6.0
      %v1447 = vmin.f32 %v1415, 6.0
      %v1448 = vmin.f32 %v1416, 6.0
      %v1449 = vmin.f32 %v1417, 6.0
      %v1450 = vmin.f32 %v1418, 6.0
      %v1451 = vmin.f32 %v1419, 6.0
      %v1452 = vmin.f32 %v1420, 6.0
      %v1453 = vmin.f32 %v1421, 6.0
      %v1454 = vmin.f32 %v1422, 6.0
      %v1455 = vmin.f32 %v1423, 6.0
      %v1456 = vmin.f32 %v1424, 6.0
      %v1457 = vmin.f32 %v1425, 6.0
      %v1458 = vmin.f32 %v1426, 6.0
      %v1459 = vmin.f32 %v1427, 6.0
      %v1460 = vmin.f32 %v1428, 6.0
      %v1461 = vpack.c.bf16 %v1430, %v1429
      %v1462 = vpack.c.bf16 %v1432, %v1431
      %v1463 = vpack.c.bf16 %v1434, %v1433
      %v1464 = vpack.c.bf16 %v1436, %v1435
      %v1465 = vpack.c.bf16 %v1438, %v1437
      %v1466 = vpack.c.bf16 %v1440, %v1439
      %v1467 = vpack.c.bf16 %v1442, %v1441
      %v1468 = vpack.c.bf16 %v1444, %v1443
      %v1469 = vpack.c.bf16 %v1446, %v1445
      %v1470 = vpack.c.bf16 %v1448, %v1447
      %v1471 = vpack.c.bf16 %v1450, %v1449
      %v1472 = vpack.c.bf16 %v1452, %v1451
      %v1473 = vpack.c.bf16 %v1454, %v1453
      %v1474 = vpack.c.bf16 %v1456, %v1455
      %v1475 = vpack.c.bf16 %v1458, %v1457
      %v1476 = vpack.c.bf16 %v1460, %v1459
      %v1477 = vld [vmem:[%s604] sm:$0xf]
      %v1478 = vld [vmem:[%s604 + $0x4] sm:$0xf]
      %v1479 = vld [vmem:[%s604 + $0x8] sm:$0xf]
      %v1480 = vld [vmem:[%s604 + $0xc] sm:$0xf]
      %v1481 = vld [vmem:[%s604 + $0x10] sm:$0xf]
      %v1482 = vld [vmem:[%s604 + $0x14] sm:$0xf]
      %v1483 = vld [vmem:[%s604 + $0x18] sm:$0xf]
      %v1484 = vld [vmem:[%s604 + $0x1c] sm:$0xf]
      %v1485 = vld [vmem:[%s604 + $0x20] sm:$0xf]
      %v1486 = vld [vmem:[%s604 + $0x24] sm:$0xf]
      %v1487 = vld [vmem:[%s604 + $0x28] sm:$0xf]
      %v1488 = vld [vmem:[%s604 + $0x2c] sm:$0xf]
      %v1489 = vld [vmem:[%s604 + $0x30] sm:$0xf]
      %v1490 = vld [vmem:[%s604 + $0x34] sm:$0xf]
      %v1491 = vld [vmem:[%s604 + $0x38] sm:$0xf]
      %v1492 = vld [vmem:[%s604 + $0x3c] sm:$0xf]
      %v1493 = vld [vmem:[%s604 + $0x40] sm:$0xf]
      %v1494 = vld [vmem:[%s604 + $0x44] sm:$0xf]
      %v1495 = vld [vmem:[%s604 + $0x48] sm:$0xf]
      %v1496 = vld [vmem:[%s604 + $0x4c] sm:$0xf]
      %v1497 = vld [vmem:[%s604 + $0x50] sm:$0xf]
      %v1498 = vld [vmem:[%s604 + $0x54] sm:$0xf]
      %v1499 = vld [vmem:[%s604 + $0x58] sm:$0xf]
      %v1500 = vld [vmem:[%s604 + $0x5c] sm:$0xf]
      %v1501 = vld [vmem:[%s604 + $0x60] sm:$0xf]
      %v1502 = vld [vmem:[%s604 + $0x64] sm:$0xf]
      %v1503 = vld [vmem:[%s604 + $0x68] sm:$0xf]
      %v1504 = vld [vmem:[%s604 + $0x6c] sm:$0xf]
      %v1505 = vld [vmem:[%s604 + $0x70] sm:$0xf]
      %v1506 = vld [vmem:[%s604 + $0x74] sm:$0xf]
      %v1507 = vld [vmem:[%s604 + $0x78] sm:$0xf]
      %v1508 = vld [vmem:[%s604 + $0x7c] sm:$0xf]
      %s1509 = scalar_lea.vmem %s5, 16
      %v1510 = vld [vmem:[%s1509] sm:$0xf]
      %v1511 = vld [vmem:[%s1509 + $0x4] sm:$0xf]
      %v1512 = vld [vmem:[%s1509 + $0x8] sm:$0xf]
      %v1513 = vld [vmem:[%s1509 + $0xc] sm:$0xf]
      %v1546 = vunpack.c.l.b16 %v1477
      %v1547 = vunpack.c.l.b16 %v1478
      %v1548 = vunpack.c.l.b16 %v1479
      %v1549 = vunpack.c.l.b16 %v1480
      %v1550 = vunpack.c.l.b16 %v1481
      %v1551 = vunpack.c.l.b16 %v1482
      %v1552 = vunpack.c.l.b16 %v1483
      %v1553 = vunpack.c.l.b16 %v1484
      %v1554 = vunpack.c.l.b16 %v1485
      %v1555 = vunpack.c.l.b16 %v1486
      %v1556 = vunpack.c.l.b16 %v1487
      %v1557 = vunpack.c.l.b16 %v1488
      %v1558 = vunpack.c.l.b16 %v1489
      %v1559 = vunpack.c.l.b16 %v1490
      %v1560 = vunpack.c.l.b16 %v1491
      %v1561 = vunpack.c.l.b16 %v1492
      %v1562 = vunpack.c.l.b16 %v1493
      %v1563 = vunpack.c.l.b16 %v1494
      %v1564 = vunpack.c.l.b16 %v1495
      %v1565 = vunpack.c.l.b16 %v1496
      %v1566 = vunpack.c.l.b16 %v1497
      %v1567 = vunpack.c.l.b16 %v1498
      %v1568 = vunpack.c.l.b16 %v1499
      %v1569 = vunpack.c.l.b16 %v1500
      %v1570 = vunpack.c.l.b16 %v1501
      %v1571 = vunpack.c.l.b16 %v1502
      %v1572 = vunpack.c.l.b16 %v1503
      %v1573 = vunpack.c.l.b16 %v1504
      %v1574 = vunpack.c.l.b16 %v1505
      %v1575 = vunpack.c.l.b16 %v1506
      %v1576 = vunpack.c.l.b16 %v1507
      %v1577 = vunpack.c.l.b16 %v1508
      %v1578 = vpack.c.b16 %v1547, %v1546
      %v1579 = vpack.c.b16 %v1549, %v1548
      %v1580 = vpack.c.b16 %v1551, %v1550
      %v1581 = vpack.c.b16 %v1553, %v1552
      %v1582 = vpack.c.b16 %v1555, %v1554
      %v1583 = vpack.c.b16 %v1557, %v1556
      %v1584 = vpack.c.b16 %v1559, %v1558
      %v1585 = vpack.c.b16 %v1561, %v1560
      %v1586 = vpack.c.b16 %v1563, %v1562
      %v1587 = vpack.c.b16 %v1565, %v1564
      %v1588 = vpack.c.b16 %v1567, %v1566
      %v1589 = vpack.c.b16 %v1569, %v1568
      %v1590 = vpack.c.b16 %v1571, %v1570
      %v1591 = vpack.c.b16 %v1573, %v1572
      %v1592 = vpack.c.b16 %v1575, %v1574
      %v1593 = vpack.c.b16 %v1577, %v1576
      %v1598 = vunpack.c.l.b16 %v1510
      %v1599 = vunpack.c.l.b16 %v1511
      %v1600 = vunpack.c.l.b16 %v1512
      %v1601 = vunpack.c.l.b16 %v1513
      %v1602 = vpack.c.b16 %v1599, %v1598
      %v1603 = vpack.c.b16 %v1601, %v1600
      %v1607 = vsel %vm771, %v1578, 0
      %v1610 = vsel %vm771, %v1579, 0
      %v1613 = vsel %vm771, %v1580, 0
      %v1616 = vsel %vm771, %v1581, 0
      %v1619 = vsel %vm771, %v1582, 0
      %v1622 = vsel %vm771, %v1583, 0
      %v1625 = vsel %vm771, %v1584, 0
      %v1628 = vsel %vm771, %v1585, 0
      %v1631 = vsel %vm771, %v1586, 0
      %v1634 = vsel %vm771, %v1587, 0
      %v1637 = vsel %vm771, %v1588, 0
      %v1640 = vsel %vm771, %v1589, 0
      %v1643 = vsel %vm771, %v1590, 0
      %v1646 = vsel %vm771, %v1591, 0
      %v1649 = vsel %vm771, %v1592, 0
      %v1652 = vsel %vm771, %v1593, 0
      %1654 = vmatprep.subr.bf16.mxu0 0
      %1655 = vmatpush1.bf16.msra.mxu0 %v1602
      %1656 = vmatprep.subr.bf16.mxu0 0
      %1657 = vmatpush1.bf16.msra.mxu0 %v1603
      %1658 = vmatprep.subr.bf16.mxu0 0
      %1659 = vmatpush1.bf16.msra.mxu0 0
      %1660 = vmatprep.subr.bf16.mxu0 0
      %1661 = vmatpush1.bf16.msra.mxu0 0
      %1662 = vmatprep.subr.bf16.mxu0 0
      %1663 = vmatpush1.bf16.msra.mxu0 0
      %1664 = vmatprep.subr.bf16.mxu0 0
      %1665 = vmatpush1.bf16.msra.mxu0 0
      %1666 = vmatprep.subr.bf16.mxu0 0
      %1667 = vmatpush1.bf16.msra.mxu0 0
      %1668 = vmatprep.subr.bf16.mxu0 0
      %1669 = vmatpush1.bf16.msra.mxu0 0
      %1670 = vmatprep.subr.bf16.mxu0 0
      %1671 = vmatpush1.bf16.msra.mxu0 0
      %1672 = vmatprep.subr.bf16.mxu0 0
      %1673 = vmatpush1.bf16.msra.mxu0 0
      %1674 = vmatprep.subr.bf16.mxu0 0
      %1675 = vmatpush1.bf16.msra.mxu0 0
      %1676 = vmatprep.subr.bf16.mxu0 0
      %1677 = vmatpush1.bf16.msra.mxu0 0
      %1678 = vmatprep.subr.bf16.mxu0 0
      %1679 = vmatpush1.bf16.msra.mxu0 0
      %1680 = vmatprep.subr.bf16.mxu0 0
      %1681 = vmatpush1.bf16.msra.mxu0 0
      %1682 = vmatprep.subr.bf16.mxu0 0
      %1683 = vmatpush1.bf16.msra.mxu0 0
      %1684 = vmatprep.subr.bf16.mxu0 0
      %1685 = vmatpush1.bf16.msra.mxu0 0
      %1686 = vmatprep.mubr.bf16.mxu0 0
      %1687 = vmatmul.mubr.bf16.gmra.mrb[0].mxu0 %v1607
      %v1688 = vpop.f32.mrb[0].mxu0
      %v1689 = vadd.f32 0.0, %v1688
      %v1690 = vpop.f32.mrb[0].mxu0
      %v1691 = vpop.f32.mrb[0].mxu0
      %v1692 = vadd.f32 0.0, %v1691
      %v1693 = vpop.f32.mrb[0].mxu0
      %1694 = vmatprep.mubr.bf16.mxu0 0
      %1695 = vmatmul.mubr.bf16.gmra.mrb[0].mxu0 %v1610
      %v1696 = vpop.f32.mrb[0].mxu0
      %v1697 = vadd.f32 0.0, %v1696
      %v1698 = vpop.f32.mrb[0].mxu0
      %v1699 = vpop.f32.mrb[0].mxu0
      %v1700 = vadd.f32 0.0, %v1699
      %v1701 = vpop.f32.mrb[0].mxu0
      %1702 = vmatprep.mubr.bf16.mxu0 0
      %1703 = vmatmul.mubr.bf16.gmra.mrb[0].mxu0 %v1613
      %v1704 = vpop.f32.mrb[0].mxu0
      %v1705 = vadd.f32 0.0, %v1704
      %v1706 = vpop.f32.mrb[0].mxu0
      %v1707 = vpop.f32.mrb[0].mxu0
      %v1708 = vadd.f32 0.0, %v1707
      %v1709 = vpop.f32.mrb[0].mxu0
      %1710 = vmatprep.mubr.bf16.mxu0 0
      %1711 = vmatmul.mubr.bf16.gmra.mrb[0].mxu0 %v1616
      %v1712 = vpop.f32.mrb[0].mxu0
      %v1713 = vadd.f32 0.0, %v1712
      %v1714 = vpop.f32.mrb[0].mxu0
      %v1715 = vpop.f32.mrb[0].mxu0
      %v1716 = vadd.f32 0.0, %v1715
      %v1717 = vpop.f32.mrb[0].mxu0
      %1718 = vmatprep.mubr.bf16.mxu0 0
      %1719 = vmatmul.mubr.bf16.gmra.mrb[0].mxu0 %v1619
      %v1720 = vpop.f32.mrb[0].mxu0
      %v1721 = vadd.f32 0.0, %v1720
      %v1722 = vpop.f32.mrb[0].mxu0
      %v1723 = vpop.f32.mrb[0].mxu0
      %v1724 = vadd.f32 0.0, %v1723
      %v1725 = vpop.f32.mrb[0].mxu0
      %1726 = vmatprep.mubr.bf16.mxu0 0
      %1727 = vmatmul.mubr.bf16.gmra.mrb[0].mxu0 %v1622
      %v1728 = vpop.f32.mrb[0].mxu0
      %v1729 = vadd.f32 0.0, %v1728
      %v1730 = vpop.f32.mrb[0].mxu0
      %v1731 = vpop.f32.mrb[0].mxu0
      %v1732 = vadd.f32 0.0, %v1731
      %v1733 = vpop.f32.mrb[0].mxu0
      %1734 = vmatprep.mubr.bf16.mxu0 0
      %1735 = vmatmul.mubr.bf16.gmra.mrb[0].mxu0 %v1625
      %v1736 = vpop.f32.mrb[0].mxu0
      %v1737 = vadd.f32 0.0, %v1736
      %v1738 = vpop.f32.mrb[0].mxu0
      %v1739 = vpop.f32.mrb[0].mxu0
      %v1740 = vadd.f32 0.0, %v1739
      %v1741 = vpop.f32.mrb[0].mxu0
      %1742 = vmatprep.mubr.bf16.mxu0 0
      %1743 = vmatmul.mubr.bf16.gmra.mrb[0].mxu0 %v1628
      %v1744 = vpop.f32.mrb[0].mxu0
      %v1745 = vadd.f32 0.0, %v1744
      %v1746 = vpop.f32.mrb[0].mxu0
      %v1747 = vpop.f32.mrb[0].mxu0
      %v1748 = vadd.f32 0.0, %v1747
      %v1749 = vpop.f32.mrb[0].mxu0
      %1750 = vmatprep.mubr.bf16.mxu0 0
      %1751 = vmatmul.mubr.bf16.gmra.mrb[0].mxu0 %v1631
      %v1752 = vpop.f32.mrb[0].mxu0
      %v1753 = vadd.f32 0.0, %v1752
      %v1754 = vpop.f32.mrb[0].mxu0
      %v1755 = vpop.f32.mrb[0].mxu0
      %v1756 = vadd.f32 0.0, %v1755
      %v1757 = vpop.f32.mrb[0].mxu0
      %1758 = vmatprep.mubr.bf16.mxu0 0
      %1759 = vmatmul.mubr.bf16.gmra.mrb[0].mxu0 %v1634
      %v1760 = vpop.f32.mrb[0].mxu0
      %v1761 = vadd.f32 0.0, %v1760
      %v1762 = vpop.f32.mrb[0].mxu0
      %v1763 = vpop.f32.mrb[0].mxu0
      %v1764 = vadd.f32 0.0, %v1763
      %v1765 = vpop.f32.mrb[0].mxu0
      %1766 = vmatprep.mubr.bf16.mxu0 0
      %1767 = vmatmul.mubr.bf16.gmra.mrb[0].mxu0 %v1637
      %v1768 = vpop.f32.mrb[0].mxu0
      %v1769 = vadd.f32 0.0, %v1768
      %v1770 = vpop.f32.mrb[0].mxu0
      %v1771 = vpop.f32.mrb[0].mxu0
      %v1772 = vadd.f32 0.0, %v1771
      %v1773 = vpop.f32.mrb[0].mxu0
      %1774 = vmatprep.mubr.bf16.mxu0 0
      %1775 = vmatmul.mubr.bf16.gmra.mrb[0].mxu0 %v1640
      %v1776 = vpop.f32.mrb[0].mxu0
      %v1777 = vadd.f32 0.0, %v1776
      %v1778 = vpop.f32.mrb[0].mxu0
      %v1779 = vpop.f32.mrb[0].mxu0
      %v1780 = vadd.f32 0.0, %v1779
      %v1781 = vpop.f32.mrb[0].mxu0
      %1782 = vmatprep.mubr.bf16.mxu0 0
      %1783 = vmatmul.mubr.bf16.gmra.mrb[0].mxu0 %v1643
      %v1784 = vpop.f32.mrb[0].mxu0
      %v1785 = vadd.f32 0.0, %v1784
      %v1786 = vpop.f32.mrb[0].mxu0
      %v1787 = vpop.f32.mrb[0].mxu0
      %v1788 = vadd.f32 0.0, %v1787
      %v1789 = vpop.f32.mrb[0].mxu0
      %1790 = vmatprep.mubr.bf16.mxu0 0
      %1791 = vmatmul.mubr.bf16.gmra.mrb[0].mxu0 %v1646
      %v1792 = vpop.f32.mrb[0].mxu0
      %v1793 = vadd.f32 0.0, %v1792
      %v1794 = vpop.f32.mrb[0].mxu0
      %v1795 = vpop.f32.mrb[0].mxu0
      %v1796 = vadd.f32 0.0, %v1795
      %v1797 = vpop.f32.mrb[0].mxu0
      %1798 = vmatprep.mubr.bf16.mxu0 0
      %1799 = vmatmul.mubr.bf16.gmra.mrb[0].mxu0 %v1649
      %v1800 = vpop.f32.mrb[0].mxu0
      %v1801 = vadd.f32 0.0, %v1800
      %v1802 = vpop.f32.mrb[0].mxu0
      %v1803 = vpop.f32.mrb[0].mxu0
      %v1804 = vadd.f32 0.0, %v1803
      %v1805 = vpop.f32.mrb[0].mxu0
      %1806 = vmatprep.mubr.bf16.mxu0 0
      %1807 = vmatmul.mubr.bf16.gmra.mrb[0].mxu0 %v1652
      %v1808 = vpop.f32.mrb[0].mxu0
      %v1809 = vadd.f32 0.0, %v1808
      %v1810 = vpop.f32.mrb[0].mxu0
      %v1811 = vpop.f32.mrb[0].mxu0
      %v1812 = vadd.f32 0.0, %v1811
      %v1813 = vpop.f32.mrb[0].mxu0
      %1814 = vdwg.mxu0
      %s1815 = scalar_lea.vmem %s6, 1
      %v1816 = vld [vmem:[%s1815] sm:$0x1]
      %v1818 = vlaneseq
      %v1819 = vshrl.u32 %v1818, 7
      %v1820 = vsub.s32 0, %v1819
      %v1821 = vrot.slane %v1816, %v1820
      %v1823 = vmul.f32 %v1689, %v1821
      %v1824 = vmul.f32 %v1692, %v1821
      %v1825 = vmul.f32 %v1697, %v1821
      %v1826 = vmul.f32 %v1700, %v1821
      %v1827 = vmul.f32 %v1705, %v1821
      %v1828 = vmul.f32 %v1708, %v1821
      %v1829 = vmul.f32 %v1713, %v1821
      %v1830 = vmul.f32 %v1716, %v1821
      %v1831 = vmul.f32 %v1721, %v1821
      %v1832 = vmul.f32 %v1724, %v1821
      %v1833 = vmul.f32 %v1729, %v1821
      %v1834 = vmul.f32 %v1732, %v1821
      %v1835 = vmul.f32 %v1737, %v1821
      %v1836 = vmul.f32 %v1740, %v1821
      %v1837 = vmul.f32 %v1745, %v1821
      %v1838 = vmul.f32 %v1748, %v1821
      %v1839 = vmul.f32 %v1753, %v1821
      %v1840 = vmul.f32 %v1756, %v1821
      %v1841 = vmul.f32 %v1761, %v1821
      %v1842 = vmul.f32 %v1764, %v1821
      %v1843 = vmul.f32 %v1769, %v1821
      %v1844 = vmul.f32 %v1772, %v1821
      %v1845 = vmul.f32 %v1777, %v1821
      %v1846 = vmul.f32 %v1780, %v1821
      %v1847 = vmul.f32 %v1785, %v1821
      %v1848 = vmul.f32 %v1788, %v1821
      %v1849 = vmul.f32 %v1793, %v1821
      %v1850 = vmul.f32 %v1796, %v1821
      %v1851 = vmul.f32 %v1801, %v1821
      %v1852 = vmul.f32 %v1804, %v1821
      %v1853 = vmul.f32 %v1809, %v1821
      %v1854 = vmul.f32 %v1812, %v1821
      %s1855 = scalar_lea.vmem %s7, 1
      %v1856 = vld [vmem:[%s1855] sm:$0x1]
      %v1858 = vlaneseq
      %v1859 = vshrl.u32 %v1858, 7
      %v1860 = vsub.s32 0, %v1859
      %v1861 = vrot.slane %v1856, %v1860
      %v1863 = vadd.f32 %v1823, %v1861
      %v1864 = vadd.f32 %v1824, %v1861
      %v1865 = vadd.f32 %v1825, %v1861
      %v1866 = vadd.f32 %v1826, %v1861
      %v1867 = vadd.f32 %v1827, %v1861
      %v1868 = vadd.f32 %v1828, %v1861
      %v1869 = vadd.f32 %v1829, %v1861
      %v1870 = vadd.f32 %v1830, %v1861
      %v1871 = vadd.f32 %v1831, %v1861
      %v1872 = vadd.f32 %v1832, %v1861
      %v1873 = vadd.f32 %v1833, %v1861
      %v1874 = vadd.f32 %v1834, %v1861
      %v1875 = vadd.f32 %v1835, %v1861
      %v1876 = vadd.f32 %v1836, %v1861
      %v1877 = vadd.f32 %v1837, %v1861
      %v1878 = vadd.f32 %v1838, %v1861
      %v1879 = vadd.f32 %v1839, %v1861
      %v1880 = vadd.f32 %v1840, %v1861
      %v1881 = vadd.f32 %v1841, %v1861
      %v1882 = vadd.f32 %v1842, %v1861
      %v1883 = vadd.f32 %v1843, %v1861
      %v1884 = vadd.f32 %v1844, %v1861
      %v1885 = vadd.f32 %v1845, %v1861
      %v1886 = vadd.f32 %v1846, %v1861
      %v1887 = vadd.f32 %v1847, %v1861
      %v1888 = vadd.f32 %v1848, %v1861
      %v1889 = vadd.f32 %v1849, %v1861
      %v1890 = vadd.f32 %v1850, %v1861
      %v1891 = vadd.f32 %v1851, %v1861
      %v1892 = vadd.f32 %v1852, %v1861
      %v1893 = vadd.f32 %v1853, %v1861
      %v1894 = vadd.f32 %v1854, %v1861
      %v1895 = vmax.f32 %v1863, 0.0
      %v1896 = vmax.f32 %v1864, 0.0
      %v1897 = vmax.f32 %v1865, 0.0
      %v1898 = vmax.f32 %v1866, 0.0
      %v1899 = vmax.f32 %v1867, 0.0
      %v1900 = vmax.f32 %v1868, 0.0
      %v1901 = vmax.f32 %v1869, 0.0
      %v1902 = vmax.f32 %v1870, 0.0
      %v1903 = vmax.f32 %v1871, 0.0
      %v1904 = vmax.f32 %v1872, 0.0
      %v1905 = vmax.f32 %v1873, 0.0
      %v1906 = vmax.f32 %v1874, 0.0
      %v1907 = vmax.f32 %v1875, 0.0
      %v1908 = vmax.f32 %v1876, 0.0
      %v1909 = vmax.f32 %v1877, 0.0
      %v1910 = vmax.f32 %v1878, 0.0
      %v1911 = vmax.f32 %v1879, 0.0
      %v1912 = vmax.f32 %v1880, 0.0
      %v1913 = vmax.f32 %v1881, 0.0
      %v1914 = vmax.f32 %v1882, 0.0
      %v1915 = vmax.f32 %v1883, 0.0
      %v1916 = vmax.f32 %v1884, 0.0
      %v1917 = vmax.f32 %v1885, 0.0
      %v1918 = vmax.f32 %v1886, 0.0
      %v1919 = vmax.f32 %v1887, 0.0
      %v1920 = vmax.f32 %v1888, 0.0
      %v1921 = vmax.f32 %v1889, 0.0
      %v1922 = vmax.f32 %v1890, 0.0
      %v1923 = vmax.f32 %v1891, 0.0
      %v1924 = vmax.f32 %v1892, 0.0
      %v1925 = vmax.f32 %v1893, 0.0
      %v1926 = vmax.f32 %v1894, 0.0
      %v1927 = vmin.f32 %v1895, 6.0
      %v1928 = vmin.f32 %v1896, 6.0
      %v1929 = vmin.f32 %v1897, 6.0
      %v1930 = vmin.f32 %v1898, 6.0
      %v1931 = vmin.f32 %v1899, 6.0
      %v1932 = vmin.f32 %v1900, 6.0
      %v1933 = vmin.f32 %v1901, 6.0
      %v1934 = vmin.f32 %v1902, 6.0
      %v1935 = vmin.f32 %v1903, 6.0
      %v1936 = vmin.f32 %v1904, 6.0
      %v1937 = vmin.f32 %v1905, 6.0
      %v1938 = vmin.f32 %v1906, 6.0
      %v1939 = vmin.f32 %v1907, 6.0
      %v1940 = vmin.f32 %v1908, 6.0
      %v1941 = vmin.f32 %v1909, 6.0
      %v1942 = vmin.f32 %v1910, 6.0
      %v1943 = vmin.f32 %v1911, 6.0
      %v1944 = vmin.f32 %v1912, 6.0
      %v1945 = vmin.f32 %v1913, 6.0
      %v1946 = vmin.f32 %v1914, 6.0
      %v1947 = vmin.f32 %v1915, 6.0
      %v1948 = vmin.f32 %v1916, 6.0
      %v1949 = vmin.f32 %v1917, 6.0
      %v1950 = vmin.f32 %v1918, 6.0
      %v1951 = vmin.f32 %v1919, 6.0
      %v1952 = vmin.f32 %v1920, 6.0
      %v1953 = vmin.f32 %v1921, 6.0
      %v1954 = vmin.f32 %v1922, 6.0
      %v1955 = vmin.f32 %v1923, 6.0
      %v1956 = vmin.f32 %v1924, 6.0
      %v1957 = vmin.f32 %v1925, 6.0
      %v1958 = vmin.f32 %v1926, 6.0
      %v1959 = vpack.c.bf16 %v1928, %v1927
      %v1960 = vpack.c.bf16 %v1930, %v1929
      %v1961 = vpack.c.bf16 %v1932, %v1931
      %v1962 = vpack.c.bf16 %v1934, %v1933
      %v1963 = vpack.c.bf16 %v1936, %v1935
      %v1964 = vpack.c.bf16 %v1938, %v1937
      %v1965 = vpack.c.bf16 %v1940, %v1939
      %v1966 = vpack.c.bf16 %v1942, %v1941
      %v1967 = vpack.c.bf16 %v1944, %v1943
      %v1968 = vpack.c.bf16 %v1946, %v1945
      %v1969 = vpack.c.bf16 %v1948, %v1947
      %v1970 = vpack.c.bf16 %v1950, %v1949
      %v1971 = vpack.c.bf16 %v1952, %v1951
      %v1972 = vpack.c.bf16 %v1954, %v1953
      %v1973 = vpack.c.bf16 %v1956, %v1955
      %v1974 = vpack.c.bf16 %v1958, %v1957
      %v1975 = vld [vmem:[%s612] sm:$0xf]
      %v1976 = vld [vmem:[%s612 + $0x4] sm:$0xf]
      %v1977 = vld [vmem:[%s612 + $0x8] sm:$0xf]
      %v1978 = vld [vmem:[%s612 + $0xc] sm:$0xf]
      %v1979 = vld [vmem:[%s612 + $0x10] sm:$0xf]
      %v1980 = vld [vmem:[%s612 + $0x14] sm:$0xf]
      %v1981 = vld [vmem:[%s612 + $0x18] sm:$0xf]
      %v1982 = vld [vmem:[%s612 + $0x1c] sm:$0xf]
      %v1983 = vld [vmem:[%s612 + $0x20] sm:$0xf]
      %v1984 = vld [vmem:[%s612 + $0x24] sm:$0xf]
      %v1985 = vld [vmem:[%s612 + $0x28] sm:$0xf]
      %v1986 = vld [vmem:[%s612 + $0x2c] sm:$0xf]
      %v1987 = vld [vmem:[%s612 + $0x30] sm:$0xf]
      %v1988 = vld [vmem:[%s612 + $0x34] sm:$0xf]
      %v1989 = vld [vmem:[%s612 + $0x38] sm:$0xf]
      %v1990 = vld [vmem:[%s612 + $0x3c] sm:$0xf]
      %v1991 = vld [vmem:[%s612 + $0x40] sm:$0xf]
      %v1992 = vld [vmem:[%s612 + $0x44] sm:$0xf]
      %v1993 = vld [vmem:[%s612 + $0x48] sm:$0xf]
      %v1994 = vld [vmem:[%s612 + $0x4c] sm:$0xf]
      %v1995 = vld [vmem:[%s612 + $0x50] sm:$0xf]
      %v1996 = vld [vmem:[%s612 + $0x54] sm:$0xf]
      %v1997 = vld [vmem:[%s612 + $0x58] sm:$0xf]
      %v1998 = vld [vmem:[%s612 + $0x5c] sm:$0xf]
      %v1999 = vld [vmem:[%s612 + $0x60] sm:$0xf]
      %v2000 = vld [vmem:[%s612 + $0x64] sm:$0xf]
      %v2001 = vld [vmem:[%s612 + $0x68] sm:$0xf]
      %v2002 = vld [vmem:[%s612 + $0x6c] sm:$0xf]
      %v2003 = vld [vmem:[%s612 + $0x70] sm:$0xf]
      %v2004 = vld [vmem:[%s612 + $0x74] sm:$0xf]
      %v2005 = vld [vmem:[%s612 + $0x78] sm:$0xf]
      %v2006 = vld [vmem:[%s612 + $0x7c] sm:$0xf]
      %s2007 = scalar_lea.vmem %s5, 32
      %v2008 = vld [vmem:[%s2007] sm:$0xf]
      %v2009 = vld [vmem:[%s2007 + $0x4] sm:$0xf]
      %v2010 = vld [vmem:[%s2007 + $0x8] sm:$0xf]
      %v2011 = vld [vmem:[%s2007 + $0xc] sm:$0xf]
      %v2044 = vunpack.c.l.b16 %v1975
      %v2045 = vunpack.c.l.b16 %v1976
      %v2046 = vunpack.c.l.b16 %v1977
      %v2047 = vunpack.c.l.b16 %v1978
      %v2048 = vunpack.c.l.b16 %v1979
      %v2049 = vunpack.c.l.b16 %v1980
      %v2050 = vunpack.c.l.b16 %v1981
      %v2051 = vunpack.c.l.b16 %v1982
      %v2052 = vunpack.c.l.b16 %v1983
      %v2053 = vunpack.c.l.b16 %v1984
      %v2054 = vunpack.c.l.b16 %v1985
      %v2055 = vunpack.c.l.b16 %v1986
      %v2056 = vunpack.c.l.b16 %v1987
      %v2057 = vunpack.c.l.b16 %v1988
      %v2058 = vunpack.c.l.b16 %v1989
      %v2059 = vunpack.c.l.b16 %v1990
      %v2060 = vunpack.c.l.b16 %v1991
      %v2061 = vunpack.c.l.b16 %v1992
      %v2062 = vunpack.c.l.b16 %v1993
      %v2063 = vunpack.c.l.b16 %v1994
      %v2064 = vunpack.c.l.b16 %v1995
      %v2065 = vunpack.c.l.b16 %v1996
      %v2066 = vunpack.c.l.b16 %v1997
      %v2067 = vunpack.c.l.b16 %v1998
      %v2068 = vunpack.c.l.b16 %v1999
      %v2069 = vunpack.c.l.b16 %v2000
      %v2070 = vunpack.c.l.b16 %v2001
      %v2071 = vunpack.c.l.b16 %v2002
      %v2072 = vunpack.c.l.b16 %v2003
      %v2073 = vunpack.c.l.b16 %v2004
      %v2074 = vunpack.c.l.b16 %v2005
      %v2075 = vunpack.c.l.b16 %v2006
      %v2076 = vpack.c.b16 %v2045, %v2044
      %v2077 = vpack.c.b16 %v2047, %v2046
      %v2078 = vpack.c.b16 %v2049, %v2048
      %v2079 = vpack.c.b16 %v2051, %v2050
      %v2080 = vpack.c.b16 %v2053, %v2052
      %v2081 = vpack.c.b16 %v2055, %v2054
      %v2082 = vpack.c.b16 %v2057, %v2056
      %v2083 = vpack.c.b16 %v2059, %v2058
      %v2084 = vpack.c.b16 %v2061, %v2060
      %v2085 = vpack.c.b16 %v2063, %v2062
      %v2086 = vpack.c.b16 %v2065, %v2064
      %v2087 = vpack.c.b16 %v2067, %v2066
      %v2088 = vpack.c.b16 %v2069, %v2068
      %v2089 = vpack.c.b16 %v2071, %v2070
      %v2090 = vpack.c.b16 %v2073, %v2072
      %v2091 = vpack.c.b16 %v2075, %v2074
      %v2096 = vunpack.c.l.b16 %v2008
      %v2097 = vunpack.c.l.b16 %v2009
      %v2098 = vunpack.c.l.b16 %v2010
      %v2099 = vunpack.c.l.b16 %v2011
      %v2100 = vpack.c.b16 %v2097, %v2096
      %v2101 = vpack.c.b16 %v2099, %v2098
      %v2105 = vsel %vm771, %v2076, 0
      %v2108 = vsel %vm771, %v2077, 0
      %v2111 = vsel %vm771, %v2078, 0
      %v2114 = vsel %vm771, %v2079, 0
      %v2117 = vsel %vm771, %v2080, 0
      %v2120 = vsel %vm771, %v2081, 0
      %v2123 = vsel %vm771, %v2082, 0
      %v2126 = vsel %vm771, %v2083, 0
      %v2129 = vsel %vm771, %v2084, 0
      %v2132 = vsel %vm771, %v2085, 0
      %v2135 = vsel %vm771, %v2086, 0
      %v2138 = vsel %vm771, %v2087, 0
      %v2141 = vsel %vm771, %v2088, 0
      %v2144 = vsel %vm771, %v2089, 0
      %v2147 = vsel %vm771, %v2090, 0
      %v2150 = vsel %vm771, %v2091, 0
      %2152 = vmatprep.subr.bf16.mxu0 0
      %2153 = vmatpush1.bf16.msra.mxu0 %v2100
      %2154 = vmatprep.subr.bf16.mxu0 0
      %2155 = vmatpush1.bf16.msra.mxu0 %v2101
      %2156 = vmatprep.subr.bf16.mxu0 0
      %2157 = vmatpush1.bf16.msra.mxu0 0
      %2158 = vmatprep.subr.bf16.mxu0 0
      %2159 = vmatpush1.bf16.msra.mxu0 0
      %2160 = vmatprep.subr.bf16.mxu0 0
      %2161 = vmatpush1.bf16.msra.mxu0 0
      %2162 = vmatprep.subr.bf16.mxu0 0
      %2163 = vmatpush1.bf16.msra.mxu0 0
      %2164 = vmatprep.subr.bf16.mxu0 0
      %2165 = vmatpush1.bf16.msra.mxu0 0
      %2166 = vmatprep.subr.bf16.mxu0 0
      %2167 = vmatpush1.bf16.msra.mxu0 0
      %2168 = vmatprep.subr.bf16.mxu0 0
      %2169 = vmatpush1.bf16.msra.mxu0 0
      %2170 = vmatprep.subr.bf16.mxu0 0
      %2171 = vmatpush1.bf16.msra.mxu0 0
      %2172 = vmatprep.subr.bf16.mxu0 0
      %2173 = vmatpush1.bf16.msra.mxu0 0
      %2174 = vmatprep.subr.bf16.mxu0 0
      %2175 = vmatpush1.bf16.msra.mxu0 0
      %2176 = vmatprep.subr.bf16.mxu0 0
      %2177 = vmatpush1.bf16.msra.mxu0 0
      %2178 = vmatprep.subr.bf16.mxu0 0
      %2179 = vmatpush1.bf16.msra.mxu0 0
      %2180 = vmatprep.subr.bf16.mxu0 0
      %2181 = vmatpush1.bf16.msra.mxu0 0
      %2182 = vmatprep.subr.bf16.mxu0 0
      %2183 = vmatpush1.bf16.msra.mxu0 0
      %2184 = vmatprep.mubr.bf16.mxu0 0
      %2185 = vmatmul.mubr.bf16.gmra.mrb[0].mxu0 %v2105
      %v2186 = vpop.f32.mrb[0].mxu0
      %v2187 = vadd.f32 0.0, %v2186
      %v2188 = vpop.f32.mrb[0].mxu0
      %v2189 = vpop.f32.mrb[0].mxu0
      %v2190 = vadd.f32 0.0, %v2189
      %v2191 = vpop.f32.mrb[0].mxu0
      %2192 = vmatprep.mubr.bf16.mxu0 0
      %2193 = vmatmul.mubr.bf16.gmra.mrb[0].mxu0 %v2108
      %v2194 = vpop.f32.mrb[0].mxu0
      %v2195 = vadd.f32 0.0, %v2194
      %v2196 = vpop.f32.mrb[0].mxu0
      %v2197 = vpop.f32.mrb[0].mxu0
      %v2198 = vadd.f32 0.0, %v2197
      %v2199 = vpop.f32.mrb[0].mxu0
      %2200 = vmatprep.mubr.bf16.mxu0 0
      %2201 = vmatmul.mubr.bf16.gmra.mrb[0].mxu0 %v2111
      %v2202 = vpop.f32.mrb[0].mxu0
      %v2203 = vadd.f32 0.0, %v2202
      %v2204 = vpop.f32.mrb[0].mxu0
      %v2205 = vpop.f32.mrb[0].mxu0
      %v2206 = vadd.f32 0.0, %v2205
      %v2207 = vpop.f32.mrb[0].mxu0
      %2208 = vmatprep.mubr.bf16.mxu0 0
      %2209 = vmatmul.mubr.bf16.gmra.mrb[0].mxu0 %v2114
      %v2210 = vpop.f32.mrb[0].mxu0
      %v2211 = vadd.f32 0.0, %v2210
      %v2212 = vpop.f32.mrb[0].mxu0
      %v2213 = vpop.f32.mrb[0].mxu0
      %v2214 = vadd.f32 0.0, %v2213
      %v2215 = vpop.f32.mrb[0].mxu0
      %2216 = vmatprep.mubr.bf16.mxu0 0
      %2217 = vmatmul.mubr.bf16.gmra.mrb[0].mxu0 %v2117
      %v2218 = vpop.f32.mrb[0].mxu0
      %v2219 = vadd.f32 0.0, %v2218
      %v2220 = vpop.f32.mrb[0].mxu0
      %v2221 = vpop.f32.mrb[0].mxu0
      %v2222 = vadd.f32 0.0, %v2221
      %v2223 = vpop.f32.mrb[0].mxu0
      %2224 = vmatprep.mubr.bf16.mxu0 0
      %2225 = vmatmul.mubr.bf16.gmra.mrb[0].mxu0 %v2120
      %v2226 = vpop.f32.mrb[0].mxu0
      %v2227 = vadd.f32 0.0, %v2226
      %v2228 = vpop.f32.mrb[0].mxu0
      %v2229 = vpop.f32.mrb[0].mxu0
      %v2230 = vadd.f32 0.0, %v2229
      %v2231 = vpop.f32.mrb[0].mxu0
      %2232 = vmatprep.mubr.bf16.mxu0 0
      %2233 = vmatmul.mubr.bf16.gmra.mrb[0].mxu0 %v2123
      %v2234 = vpop.f32.mrb[0].mxu0
      %v2235 = vadd.f32 0.0, %v2234
      %v2236 = vpop.f32.mrb[0].mxu0
      %v2237 = vpop.f32.mrb[0].mxu0
      %v2238 = vadd.f32 0.0, %v2237
      %v2239 = vpop.f32.mrb[0].mxu0
      %2240 = vmatprep.mubr.bf16.mxu0 0
      %2241 = vmatmul.mubr.bf16.gmra.mrb[0].mxu0 %v2126
      %v2242 = vpop.f32.mrb[0].mxu0
      %v2243 = vadd.f32 0.0, %v2242
      %v2244 = vpop.f32.mrb[0].mxu0
      %v2245 = vpop.f32.mrb[0].mxu0
      %v2246 = vadd.f32 0.0, %v2245
      %v2247 = vpop.f32.mrb[0].mxu0
      %2248 = vmatprep.mubr.bf16.mxu0 0
      %2249 = vmatmul.mubr.bf16.gmra.mrb[0].mxu0 %v2129
      %v2250 = vpop.f32.mrb[0].mxu0
      %v2251 = vadd.f32 0.0, %v2250
      %v2252 = vpop.f32.mrb[0].mxu0
      %v2253 = vpop.f32.mrb[0].mxu0
      %v2254 = vadd.f32 0.0, %v2253
      %v2255 = vpop.f32.mrb[0].mxu0
      %2256 = vmatprep.mubr.bf16.mxu0 0
      %2257 = vmatmul.mubr.bf16.gmra.mrb[0].mxu0 %v2132
      %v2258 = vpop.f32.mrb[0].mxu0
      %v2259 = vadd.f32 0.0, %v2258
      %v2260 = vpop.f32.mrb[0].mxu0
      %v2261 = vpop.f32.mrb[0].mxu0
      %v2262 = vadd.f32 0.0, %v2261
      %v2263 = vpop.f32.mrb[0].mxu0
      %2264 = vmatprep.mubr.bf16.mxu0 0
      %2265 = vmatmul.mubr.bf16.gmra.mrb[0].mxu0 %v2135
      %v2266 = vpop.f32.mrb[0].mxu0
      %v2267 = vadd.f32 0.0, %v2266
      %v2268 = vpop.f32.mrb[0].mxu0
      %v2269 = vpop.f32.mrb[0].mxu0
      %v2270 = vadd.f32 0.0, %v2269
      %v2271 = vpop.f32.mrb[0].mxu0
      %2272 = vmatprep.mubr.bf16.mxu0 0
      %2273 = vmatmul.mubr.bf16.gmra.mrb[0].mxu0 %v2138
      %v2274 = vpop.f32.mrb[0].mxu0
      %v2275 = vadd.f32 0.0, %v2274
      %v2276 = vpop.f32.mrb[0].mxu0
      %v2277 = vpop.f32.mrb[0].mxu0
      %v2278 = vadd.f32 0.0, %v2277
      %v2279 = vpop.f32.mrb[0].mxu0
      %2280 = vmatprep.mubr.bf16.mxu0 0
      %2281 = vmatmul.mubr.bf16.gmra.mrb[0].mxu0 %v2141
      %v2282 = vpop.f32.mrb[0].mxu0
      %v2283 = vadd.f32 0.0, %v2282
      %v2284 = vpop.f32.mrb[0].mxu0
      %v2285 = vpop.f32.mrb[0].mxu0
      %v2286 = vadd.f32 0.0, %v2285
      %v2287 = vpop.f32.mrb[0].mxu0
      %2288 = vmatprep.mubr.bf16.mxu0 0
      %2289 = vmatmul.mubr.bf16.gmra.mrb[0].mxu0 %v2144
      %v2290 = vpop.f32.mrb[0].mxu0
      %v2291 = vadd.f32 0.0, %v2290
      %v2292 = vpop.f32.mrb[0].mxu0
      %v2293 = vpop.f32.mrb[0].mxu0
      %v2294 = vadd.f32 0.0, %v2293
      %v2295 = vpop.f32.mrb[0].mxu0
      %2296 = vmatprep.mubr.bf16.mxu0 0
      %2297 = vmatmul.mubr.bf16.gmra.mrb[0].mxu0 %v2147
      %v2298 = vpop.f32.mrb[0].mxu0
      %v2299 = vadd.f32 0.0, %v2298
      %v2300 = vpop.f32.mrb[0].mxu0
      %v2301 = vpop.f32.mrb[0].mxu0
      %v2302 = vadd.f32 0.0, %v2301
      %v2303 = vpop.f32.mrb[0].mxu0
      %2304 = vmatprep.mubr.bf16.mxu0 0
      %2305 = vmatmul.mubr.bf16.gmra.mrb[0].mxu0 %v2150
      %v2306 = vpop.f32.mrb[0].mxu0
      %v2307 = vadd.f32 0.0, %v2306
      %v2308 = vpop.f32.mrb[0].mxu0
      %v2309 = vpop.f32.mrb[0].mxu0
      %v2310 = vadd.f32 0.0, %v2309
      %v2311 = vpop.f32.mrb[0].mxu0
      %2312 = vdwg.mxu0
      %s2313 = scalar_lea.vmem %s6, 2
      %v2314 = vld [vmem:[%s2313] sm:$0x1]
      %v2316 = vlaneseq
      %v2317 = vshrl.u32 %v2316, 7
      %v2318 = vsub.s32 0, %v2317
      %v2319 = vrot.slane %v2314, %v2318
      %v2321 = vmul.f32 %v2187, %v2319
      %v2322 = vmul.f32 %v2190, %v2319
      %v2323 = vmul.f32 %v2195, %v2319
      %v2324 = vmul.f32 %v2198, %v2319
      %v2325 = vmul.f32 %v2203, %v2319
      %v2326 = vmul.f32 %v2206, %v2319
      %v2327 = vmul.f32 %v2211, %v2319
      %v2328 = vmul.f32 %v2214, %v2319
      %v2329 = vmul.f32 %v2219, %v2319
      %v2330 = vmul.f32 %v2222, %v2319
      %v2331 = vmul.f32 %v2227, %v2319
      %v2332 = vmul.f32 %v2230, %v2319
      %v2333 = vmul.f32 %v2235, %v2319
      %v2334 = vmul.f32 %v2238, %v2319
      %v2335 = vmul.f32 %v2243, %v2319
      %v2336 = vmul.f32 %v2246, %v2319
      %v2337 = vmul.f32 %v2251, %v2319
      %v2338 = vmul.f32 %v2254, %v2319
      %v2339 = vmul.f32 %v2259, %v2319
      %v2340 = vmul.f32 %v2262, %v2319
      %v2341 = vmul.f32 %v2267, %v2319
      %v2342 = vmul.f32 %v2270, %v2319
      %v2343 = vmul.f32 %v2275, %v2319
      %v2344 = vmul.f32 %v2278, %v2319
      %v2345 = vmul.f32 %v2283, %v2319
      %v2346 = vmul.f32 %v2286, %v2319
      %v2347 = vmul.f32 %v2291, %v2319
      %v2348 = vmul.f32 %v2294, %v2319
      %v2349 = vmul.f32 %v2299, %v2319
      %v2350 = vmul.f32 %v2302, %v2319
      %v2351 = vmul.f32 %v2307, %v2319
      %v2352 = vmul.f32 %v2310, %v2319
      %s2353 = scalar_lea.vmem %s7, 2
      %v2354 = vld [vmem:[%s2353] sm:$0x1]
      %v2356 = vlaneseq
      %v2357 = vshrl.u32 %v2356, 7
      %v2358 = vsub.s32 0, %v2357
      %v2359 = vrot.slane %v2354, %v2358
      %v2361 = vadd.f32 %v2321, %v2359
      %v2362 = vadd.f32 %v2322, %v2359
      %v2363 = vadd.f32 %v2323, %v2359
      %v2364 = vadd.f32 %v2324, %v2359
      %v2365 = vadd.f32 %v2325, %v2359
      %v2366 = vadd.f32 %v2326, %v2359
      %v2367 = vadd.f32 %v2327, %v2359
      %v2368 = vadd.f32 %v2328, %v2359
      %v2369 = vadd.f32 %v2329, %v2359
      %v2370 = vadd.f32 %v2330, %v2359
      %v2371 = vadd.f32 %v2331, %v2359
      %v2372 = vadd.f32 %v2332, %v2359
      %v2373 = vadd.f32 %v2333, %v2359
      %v2374 = vadd.f32 %v2334, %v2359
      %v2375 = vadd.f32 %v2335, %v2359
      %v2376 = vadd.f32 %v2336, %v2359
      %v2377 = vadd.f32 %v2337, %v2359
      %v2378 = vadd.f32 %v2338, %v2359
      %v2379 = vadd.f32 %v2339, %v2359
      %v2380 = vadd.f32 %v2340, %v2359
      %v2381 = vadd.f32 %v2341, %v2359
      %v2382 = vadd.f32 %v2342, %v2359
      %v2383 = vadd.f32 %v2343, %v2359
      %v2384 = vadd.f32 %v2344, %v2359
      %v2385 = vadd.f32 %v2345, %v2359
      %v2386 = vadd.f32 %v2346, %v2359
      %v2387 = vadd.f32 %v2347, %v2359
      %v2388 = vadd.f32 %v2348, %v2359
      %v2389 = vadd.f32 %v2349, %v2359
      %v2390 = vadd.f32 %v2350, %v2359
      %v2391 = vadd.f32 %v2351, %v2359
      %v2392 = vadd.f32 %v2352, %v2359
      %v2393 = vmax.f32 %v2361, 0.0
      %v2394 = vmax.f32 %v2362, 0.0
      %v2395 = vmax.f32 %v2363, 0.0
      %v2396 = vmax.f32 %v2364, 0.0
      %v2397 = vmax.f32 %v2365, 0.0
      %v2398 = vmax.f32 %v2366, 0.0
      %v2399 = vmax.f32 %v2367, 0.0
      %v2400 = vmax.f32 %v2368, 0.0
      %v2401 = vmax.f32 %v2369, 0.0
      %v2402 = vmax.f32 %v2370, 0.0
      %v2403 = vmax.f32 %v2371, 0.0
      %v2404 = vmax.f32 %v2372, 0.0
      %v2405 = vmax.f32 %v2373, 0.0
      %v2406 = vmax.f32 %v2374, 0.0
      %v2407 = vmax.f32 %v2375, 0.0
      %v2408 = vmax.f32 %v2376, 0.0
      %v2409 = vmax.f32 %v2377, 0.0
      %v2410 = vmax.f32 %v2378, 0.0
      %v2411 = vmax.f32 %v2379, 0.0
      %v2412 = vmax.f32 %v2380, 0.0
      %v2413 = vmax.f32 %v2381, 0.0
      %v2414 = vmax.f32 %v2382, 0.0
      %v2415 = vmax.f32 %v2383, 0.0
      %v2416 = vmax.f32 %v2384, 0.0
      %v2417 = vmax.f32 %v2385, 0.0
      %v2418 = vmax.f32 %v2386, 0.0
      %v2419 = vmax.f32 %v2387, 0.0
      %v2420 = vmax.f32 %v2388, 0.0
      %v2421 = vmax.f32 %v2389, 0.0
      %v2422 = vmax.f32 %v2390, 0.0
      %v2423 = vmax.f32 %v2391, 0.0
      %v2424 = vmax.f32 %v2392, 0.0
      %v2425 = vmin.f32 %v2393, 6.0
      %v2426 = vmin.f32 %v2394, 6.0
      %v2427 = vmin.f32 %v2395, 6.0
      %v2428 = vmin.f32 %v2396, 6.0
      %v2429 = vmin.f32 %v2397, 6.0
      %v2430 = vmin.f32 %v2398, 6.0
      %v2431 = vmin.f32 %v2399, 6.0
      %v2432 = vmin.f32 %v2400, 6.0
      %v2433 = vmin.f32 %v2401, 6.0
      %v2434 = vmin.f32 %v2402, 6.0
      %v2435 = vmin.f32 %v2403, 6.0
      %v2436 = vmin.f32 %v2404, 6.0
      %v2437 = vmin.f32 %v2405, 6.0
      %v2438 = vmin.f32 %v2406, 6.0
      %v2439 = vmin.f32 %v2407, 6.0
      %v2440 = vmin.f32 %v2408, 6.0
      %v2441 = vmin.f32 %v2409, 6.0
      %v2442 = vmin.f32 %v2410, 6.0
      %v2443 = vmin.f32 %v2411, 6.0
      %v2444 = vmin.f32 %v2412, 6.0
      %v2445 = vmin.f32 %v2413, 6.0
      %v2446 = vmin.f32 %v2414, 6.0
      %v2447 = vmin.f32 %v2415, 6.0
      %v2448 = vmin.f32 %v2416, 6.0
      %v2449 = vmin.f32 %v2417, 6.0
      %v2450 = vmin.f32 %v2418, 6.0
      %v2451 = vmin.f32 %v2419, 6.0
      %v2452 = vmin.f32 %v2420, 6.0
      %v2453 = vmin.f32 %v2421, 6.0
      %v2454 = vmin.f32 %v2422, 6.0
      %v2455 = vmin.f32 %v2423, 6.0
      %v2456 = vmin.f32 %v2424, 6.0
      %v2457 = vpack.c.bf16 %v2426, %v2425
      %v2458 = vpack.c.bf16 %v2428, %v2427
      %v2459 = vpack.c.bf16 %v2430, %v2429
      %v2460 = vpack.c.bf16 %v2432, %v2431
      %v2461 = vpack.c.bf16 %v2434, %v2433
      %v2462 = vpack.c.bf16 %v2436, %v2435
      %v2463 = vpack.c.bf16 %v2438, %v2437
      %v2464 = vpack.c.bf16 %v2440, %v2439
      %v2465 = vpack.c.bf16 %v2442, %v2441
      %v2466 = vpack.c.bf16 %v2444, %v2443
      %v2467 = vpack.c.bf16 %v2446, %v2445
      %v2468 = vpack.c.bf16 %v2448, %v2447
      %v2469 = vpack.c.bf16 %v2450, %v2449
      %v2470 = vpack.c.bf16 %v2452, %v2451
      %v2471 = vpack.c.bf16 %v2454, %v2453
      %v2472 = vpack.c.bf16 %v2456, %v2455
      %v2473 = vld [vmem:[%s620] sm:$0xf]
      %v2474 = vld [vmem:[%s620 + $0x4] sm:$0xf]
      %v2475 = vld [vmem:[%s620 + $0x8] sm:$0xf]
      %v2476 = vld [vmem:[%s620 + $0xc] sm:$0xf]
      %v2477 = vld [vmem:[%s620 + $0x10] sm:$0xf]
      %v2478 = vld [vmem:[%s620 + $0x14] sm:$0xf]
      %v2479 = vld [vmem:[%s620 + $0x18] sm:$0xf]
      %v2480 = vld [vmem:[%s620 + $0x1c] sm:$0xf]
      %v2481 = vld [vmem:[%s620 + $0x20] sm:$0xf]
      %v2482 = vld [vmem:[%s620 + $0x24] sm:$0xf]
      %v2483 = vld [vmem:[%s620 + $0x28] sm:$0xf]
      %v2484 = vld [vmem:[%s620 + $0x2c] sm:$0xf]
      %v2485 = vld [vmem:[%s620 + $0x30] sm:$0xf]
      %v2486 = vld [vmem:[%s620 + $0x34] sm:$0xf]
      %v2487 = vld [vmem:[%s620 + $0x38] sm:$0xf]
      %v2488 = vld [vmem:[%s620 + $0x3c] sm:$0xf]
      %v2489 = vld [vmem:[%s620 + $0x40] sm:$0xf]
      %v2490 = vld [vmem:[%s620 + $0x44] sm:$0xf]
      %v2491 = vld [vmem:[%s620 + $0x48] sm:$0xf]
      %v2492 = vld [vmem:[%s620 + $0x4c] sm:$0xf]
      %v2493 = vld [vmem:[%s620 + $0x50] sm:$0xf]
      %v2494 = vld [vmem:[%s620 + $0x54] sm:$0xf]
      %v2495 = vld [vmem:[%s620 + $0x58] sm:$0xf]
      %v2496 = vld [vmem:[%s620 + $0x5c] sm:$0xf]
      %v2497 = vld [vmem:[%s620 + $0x60] sm:$0xf]
      %v2498 = vld [vmem:[%s620 + $0x64] sm:$0xf]
      %v2499 = vld [vmem:[%s620 + $0x68] sm:$0xf]
      %v2500 = vld [vmem:[%s620 + $0x6c] sm:$0xf]
      %v2501 = vld [vmem:[%s620 + $0x70] sm:$0xf]
      %v2502 = vld [vmem:[%s620 + $0x74] sm:$0xf]
      %v2503 = vld [vmem:[%s620 + $0x78] sm:$0xf]
      %v2504 = vld [vmem:[%s620 + $0x7c] sm:$0xf]
      %s2505 = scalar_lea.vmem %s5, 48
      %v2506 = vld [vmem:[%s2505] sm:$0xf]
      %v2507 = vld [vmem:[%s2505 + $0x4] sm:$0xf]
      %v2508 = vld [vmem:[%s2505 + $0x8] sm:$0xf]
      %v2509 = vld [vmem:[%s2505 + $0xc] sm:$0xf]
      %v2542 = vunpack.c.l.b16 %v2473
      %v2543 = vunpack.c.l.b16 %v2474
      %v2544 = vunpack.c.l.b16 %v2475
      %v2545 = vunpack.c.l.b16 %v2476
      %v2546 = vunpack.c.l.b16 %v2477
      %v2547 = vunpack.c.l.b16 %v2478
      %v2548 = vunpack.c.l.b16 %v2479
      %v2549 = vunpack.c.l.b16 %v2480
      %v2550 = vunpack.c.l.b16 %v2481
      %v2551 = vunpack.c.l.b16 %v2482
      %v2552 = vunpack.c.l.b16 %v2483
      %v2553 = vunpack.c.l.b16 %v2484
      %v2554 = vunpack.c.l.b16 %v2485
      %v2555 = vunpack.c.l.b16 %v2486
      %v2556 = vunpack.c.l.b16 %v2487
      %v2557 = vunpack.c.l.b16 %v2488
      %v2558 = vunpack.c.l.b16 %v2489
      %v2559 = vunpack.c.l.b16 %v2490
      %v2560 = vunpack.c.l.b16 %v2491
      %v2561 = vunpack.c.l.b16 %v2492
      %v2562 = vunpack.c.l.b16 %v2493
      %v2563 = vunpack.c.l.b16 %v2494
      %v2564 = vunpack.c.l.b16 %v2495
      %v2565 = vunpack.c.l.b16 %v2496
      %v2566 = vunpack.c.l.b16 %v2497
      %v2567 = vunpack.c.l.b16 %v2498
      %v2568 = vunpack.c.l.b16 %v2499
      %v2569 = vunpack.c.l.b16 %v2500
      %v2570 = vunpack.c.l.b16 %v2501
      %v2571 = vunpack.c.l.b16 %v2502
      %v2572 = vunpack.c.l.b16 %v2503
      %v2573 = vunpack.c.l.b16 %v2504
      %v2574 = vpack.c.b16 %v2543, %v2542
      %v2575 = vpack.c.b16 %v2545, %v2544
      %v2576 = vpack.c.b16 %v2547, %v2546
      %v2577 = vpack.c.b16 %v2549, %v2548
      %v2578 = vpack.c.b16 %v2551, %v2550
      %v2579 = vpack.c.b16 %v2553, %v2552
      %v2580 = vpack.c.b16 %v2555, %v2554
      %v2581 = vpack.c.b16 %v2557, %v2556
      %v2582 = vpack.c.b16 %v2559, %v2558
      %v2583 = vpack.c.b16 %v2561, %v2560
      %v2584 = vpack.c.b16 %v2563, %v2562
      %v2585 = vpack.c.b16 %v2565, %v2564
      %v2586 = vpack.c.b16 %v2567, %v2566
      %v2587 = vpack.c.b16 %v2569, %v2568
      %v2588 = vpack.c.b16 %v2571, %v2570
      %v2589 = vpack.c.b16 %v2573, %v2572
      %v2594 = vunpack.c.l.b16 %v2506
      %v2595 = vunpack.c.l.b16 %v2507
      %v2596 = vunpack.c.l.b16 %v2508
      %v2597 = vunpack.c.l.b16 %v2509
      %v2598 = vpack.c.b16 %v2595, %v2594
      %v2599 = vpack.c.b16 %v2597, %v2596
      %v2603 = vsel %vm771, %v2574, 0
      %v2606 = vsel %vm771, %v2575, 0
      %v2609 = vsel %vm771, %v2576, 0
      %v2612 = vsel %vm771, %v2577, 0
      %v2615 = vsel %vm771, %v2578, 0
      %v2618 = vsel %vm771, %v2579, 0
      %v2621 = vsel %vm771, %v2580, 0
      %v2624 = vsel %vm771, %v2581, 0
      %v2627 = vsel %vm771, %v2582, 0
      %v2630 = vsel %vm771, %v2583, 0
      %v2633 = vsel %vm771, %v2584, 0
      %v2636 = vsel %vm771, %v2585, 0
      %v2639 = vsel %vm771, %v2586, 0
      %v2642 = vsel %vm771, %v2587, 0
      %v2645 = vsel %vm771, %v2588, 0
      %v2648 = vsel %vm771, %v2589, 0
      %2650 = vmatprep.subr.bf16.mxu0 0
      %2651 = vmatpush1.bf16.msra.mxu0 %v2598
      %2652 = vmatprep.subr.bf16.mxu0 0
      %2653 = vmatpush1.bf16.msra.mxu0 %v2599
      %2654 = vmatprep.subr.bf16.mxu0 0
      %2655 = vmatpush1.bf16.msra.mxu0 0
      %2656 = vmatprep.subr.bf16.mxu0 0
      %2657 = vmatpush1.bf16.msra.mxu0 0
      %2658 = vmatprep.subr.bf16.mxu0 0
      %2659 = vmatpush1.bf16.msra.mxu0 0
      %2660 = vmatprep.subr.bf16.mxu0 0
      %2661 = vmatpush1.bf16.msra.mxu0 0
      %2662 = vmatprep.subr.bf16.mxu0 0
      %2663 = vmatpush1.bf16.msra.mxu0 0
      %2664 = vmatprep.subr.bf16.mxu0 0
      %2665 = vmatpush1.bf16.msra.mxu0 0
      %2666 = vmatprep.subr.bf16.mxu0 0
      %2667 = vmatpush1.bf16.msra.mxu0 0
      %2668 = vmatprep.subr.bf16.mxu0 0
      %2669 = vmatpush1.bf16.msra.mxu0 0
      %2670 = vmatprep.subr.bf16.mxu0 0
      %2671 = vmatpush1.bf16.msra.mxu0 0
      %2672 = vmatprep.subr.bf16.mxu0 0
      %2673 = vmatpush1.bf16.msra.mxu0 0
      %2674 = vmatprep.subr.bf16.mxu0 0
      %2675 = vmatpush1.bf16.msra.mxu0 0
      %2676 = vmatprep.subr.bf16.mxu0 0
      %2677 = vmatpush1.bf16.msra.mxu0 0
      %2678 = vmatprep.subr.bf16.mxu0 0
      %2679 = vmatpush1.bf16.msra.mxu0 0
      %2680 = vmatprep.subr.bf16.mxu0 0
      %2681 = vmatpush1.bf16.msra.mxu0 0
      %2682 = vmatprep.mubr.bf16.mxu0 0
      %2683 = vmatmul.mubr.bf16.gmra.mrb[0].mxu0 %v2603
      %v2684 = vpop.f32.mrb[0].mxu0
      %v2685 = vadd.f32 0.0, %v2684
      %v2686 = vpop.f32.mrb[0].mxu0
      %v2687 = vpop.f32.mrb[0].mxu0
      %v2688 = vadd.f32 0.0, %v2687
      %v2689 = vpop.f32.mrb[0].mxu0
      %2690 = vmatprep.mubr.bf16.mxu0 0
      %2691 = vmatmul.mubr.bf16.gmra.mrb[0].mxu0 %v2606
      %v2692 = vpop.f32.mrb[0].mxu0
      %v2693 = vadd.f32 0.0, %v2692
      %v2694 = vpop.f32.mrb[0].mxu0
      %v2695 = vpop.f32.mrb[0].mxu0
      %v2696 = vadd.f32 0.0, %v2695
      %v2697 = vpop.f32.mrb[0].mxu0
      %2698 = vmatprep.mubr.bf16.mxu0 0
      %2699 = vmatmul.mubr.bf16.gmra.mrb[0].mxu0 %v2609
      %v2700 = vpop.f32.mrb[0].mxu0
      %v2701 = vadd.f32 0.0, %v2700
      %v2702 = vpop.f32.mrb[0].mxu0
      %v2703 = vpop.f32.mrb[0].mxu0
      %v2704 = vadd.f32 0.0, %v2703
      %v2705 = vpop.f32.mrb[0].mxu0
      %2706 = vmatprep.mubr.bf16.mxu0 0
      %2707 = vmatmul.mubr.bf16.gmra.mrb[0].mxu0 %v2612
      %v2708 = vpop.f32.mrb[0].mxu0
      %v2709 = vadd.f32 0.0, %v2708
      %v2710 = vpop.f32.mrb[0].mxu0
      %v2711 = vpop.f32.mrb[0].mxu0
      %v2712 = vadd.f32 0.0, %v2711
      %v2713 = vpop.f32.mrb[0].mxu0
      %2714 = vmatprep.mubr.bf16.mxu0 0
      %2715 = vmatmul.mubr.bf16.gmra.mrb[0].mxu0 %v2615
      %v2716 = vpop.f32.mrb[0].mxu0
      %v2717 = vadd.f32 0.0, %v2716
      %v2718 = vpop.f32.mrb[0].mxu0
      %v2719 = vpop.f32.mrb[0].mxu0
      %v2720 = vadd.f32 0.0, %v2719
      %v2721 = vpop.f32.mrb[0].mxu0
      %2722 = vmatprep.mubr.bf16.mxu0 0
      %2723 = vmatmul.mubr.bf16.gmra.mrb[0].mxu0 %v2618
      %v2724 = vpop.f32.mrb[0].mxu0
      %v2725 = vadd.f32 0.0, %v2724
      %v2726 = vpop.f32.mrb[0].mxu0
      %v2727 = vpop.f32.mrb[0].mxu0
      %v2728 = vadd.f32 0.0, %v2727
      %v2729 = vpop.f32.mrb[0].mxu0
      %2730 = vmatprep.mubr.bf16.mxu0 0
      %2731 = vmatmul.mubr.bf16.gmra.mrb[0].mxu0 %v2621
      %v2732 = vpop.f32.mrb[0].mxu0
      %v2733 = vadd.f32 0.0, %v2732
      %v2734 = vpop.f32.mrb[0].mxu0
      %v2735 = vpop.f32.mrb[0].mxu0
      %v2736 = vadd.f32 0.0, %v2735
      %v2737 = vpop.f32.mrb[0].mxu0
      %2738 = vmatprep.mubr.bf16.mxu0 0
      %2739 = vmatmul.mubr.bf16.gmra.mrb[0].mxu0 %v2624
      %v2740 = vpop.f32.mrb[0].mxu0
      %v2741 = vadd.f32 0.0, %v2740
      %v2742 = vpop.f32.mrb[0].mxu0
      %v2743 = vpop.f32.mrb[0].mxu0
      %v2744 = vadd.f32 0.0, %v2743
      %v2745 = vpop.f32.mrb[0].mxu0
      %2746 = vmatprep.mubr.bf16.mxu0 0
      %2747 = vmatmul.mubr.bf16.gmra.mrb[0].mxu0 %v2627
      %v2748 = vpop.f32.mrb[0].mxu0
      %v2749 = vadd.f32 0.0, %v2748
      %v2750 = vpop.f32.mrb[0].mxu0
      %v2751 = vpop.f32.mrb[0].mxu0
      %v2752 = vadd.f32 0.0, %v2751
      %v2753 = vpop.f32.mrb[0].mxu0
      %2754 = vmatprep.mubr.bf16.mxu0 0
      %2755 = vmatmul.mubr.bf16.gmra.mrb[0].mxu0 %v2630
      %v2756 = vpop.f32.mrb[0].mxu0
      %v2757 = vadd.f32 0.0, %v2756
      %v2758 = vpop.f32.mrb[0].mxu0
      %v2759 = vpop.f32.mrb[0].mxu0
      %v2760 = vadd.f32 0.0, %v2759
      %v2761 = vpop.f32.mrb[0].mxu0
      %2762 = vmatprep.mubr.bf16.mxu0 0
      %2763 = vmatmul.mubr.bf16.gmra.mrb[0].mxu0 %v2633
      %v2764 = vpop.f32.mrb[0].mxu0
      %v2765 = vadd.f32 0.0, %v2764
      %v2766 = vpop.f32.mrb[0].mxu0
      %v2767 = vpop.f32.mrb[0].mxu0
      %v2768 = vadd.f32 0.0, %v2767
      %v2769 = vpop.f32.mrb[0].mxu0
      %2770 = vmatprep.mubr.bf16.mxu0 0
      %2771 = vmatmul.mubr.bf16.gmra.mrb[0].mxu0 %v2636
      %v2772 = vpop.f32.mrb[0].mxu0
      %v2773 = vadd.f32 0.0, %v2772
      %v2774 = vpop.f32.mrb[0].mxu0
      %v2775 = vpop.f32.mrb[0].mxu0
      %v2776 = vadd.f32 0.0, %v2775
      %v2777 = vpop.f32.mrb[0].mxu0
      %2778 = vmatprep.mubr.bf16.mxu0 0
      %2779 = vmatmul.mubr.bf16.gmra.mrb[0].mxu0 %v2639
      %v2780 = vpop.f32.mrb[0].mxu0
      %v2781 = vadd.f32 0.0, %v2780
      %v2782 = vpop.f32.mrb[0].mxu0
      %v2783 = vpop.f32.mrb[0].mxu0
      %v2784 = vadd.f32 0.0, %v2783
      %v2785 = vpop.f32.mrb[0].mxu0
      %2786 = vmatprep.mubr.bf16.mxu0 0
      %2787 = vmatmul.mubr.bf16.gmra.mrb[0].mxu0 %v2642
      %v2788 = vpop.f32.mrb[0].mxu0
      %v2789 = vadd.f32 0.0, %v2788
      %v2790 = vpop.f32.mrb[0].mxu0
      %v2791 = vpop.f32.mrb[0].mxu0
      %v2792 = vadd.f32 0.0, %v2791
      %v2793 = vpop.f32.mrb[0].mxu0
      %2794 = vmatprep.mubr.bf16.mxu0 0
      %2795 = vmatmul.mubr.bf16.gmra.mrb[0].mxu0 %v2645
      %v2796 = vpop.f32.mrb[0].mxu0
      %v2797 = vadd.f32 0.0, %v2796
      %v2798 = vpop.f32.mrb[0].mxu0
      %v2799 = vpop.f32.mrb[0].mxu0
      %v2800 = vadd.f32 0.0, %v2799
      %v2801 = vpop.f32.mrb[0].mxu0
      %2802 = vmatprep.mubr.bf16.mxu0 0
      %2803 = vmatmul.mubr.bf16.gmra.mrb[0].mxu0 %v2648
      %v2804 = vpop.f32.mrb[0].mxu0
      %v2805 = vadd.f32 0.0, %v2804
      %v2806 = vpop.f32.mrb[0].mxu0
      %v2807 = vpop.f32.mrb[0].mxu0
      %v2808 = vadd.f32 0.0, %v2807
      %v2809 = vpop.f32.mrb[0].mxu0
      %2810 = vdwg.mxu0
      %s2811 = scalar_lea.vmem %s6, 3
      %v2812 = vld [vmem:[%s2811] sm:$0x1]
      %v2814 = vlaneseq
      %v2815 = vshrl.u32 %v2814, 7
      %v2816 = vsub.s32 0, %v2815
      %v2817 = vrot.slane %v2812, %v2816
      %v2819 = vmul.f32 %v2685, %v2817
      %v2820 = vmul.f32 %v2688, %v2817
      %v2821 = vmul.f32 %v2693, %v2817
      %v2822 = vmul.f32 %v2696, %v2817
      %v2823 = vmul.f32 %v2701, %v2817
      %v2824 = vmul.f32 %v2704, %v2817
      %v2825 = vmul.f32 %v2709, %v2817
      %v2826 = vmul.f32 %v2712, %v2817
      %v2827 = vmul.f32 %v2717, %v2817
      %v2828 = vmul.f32 %v2720, %v2817
      %v2829 = vmul.f32 %v2725, %v2817
      %v2830 = vmul.f32 %v2728, %v2817
      %v2831 = vmul.f32 %v2733, %v2817
      %v2832 = vmul.f32 %v2736, %v2817
      %v2833 = vmul.f32 %v2741, %v2817
      %v2834 = vmul.f32 %v2744, %v2817
      %v2835 = vmul.f32 %v2749, %v2817
      %v2836 = vmul.f32 %v2752, %v2817
      %v2837 = vmul.f32 %v2757, %v2817
      %v2838 = vmul.f32 %v2760, %v2817
      %v2839 = vmul.f32 %v2765, %v2817
      %v2840 = vmul.f32 %v2768, %v2817
      %v2841 = vmul.f32 %v2773, %v2817
      %v2842 = vmul.f32 %v2776, %v2817
      %v2843 = vmul.f32 %v2781, %v2817
      %v2844 = vmul.f32 %v2784, %v2817
      %v2845 = vmul.f32 %v2789, %v2817
      %v2846 = vmul.f32 %v2792, %v2817
      %v2847 = vmul.f32 %v2797, %v2817
      %v2848 = vmul.f32 %v2800, %v2817
      %v2849 = vmul.f32 %v2805, %v2817
      %v2850 = vmul.f32 %v2808, %v2817
      %s2851 = scalar_lea.vmem %s7, 3
      %v2852 = vld [vmem:[%s2851] sm:$0x1]
      %v2854 = vlaneseq
      %v2855 = vshrl.u32 %v2854, 7
      %v2856 = vsub.s32 0, %v2855
      %v2857 = vrot.slane %v2852, %v2856
      %v2859 = vadd.f32 %v2819, %v2857
      %v2860 = vadd.f32 %v2820, %v2857
      %v2861 = vadd.f32 %v2821, %v2857
      %v2862 = vadd.f32 %v2822, %v2857
      %v2863 = vadd.f32 %v2823, %v2857
      %v2864 = vadd.f32 %v2824, %v2857
      %v2865 = vadd.f32 %v2825, %v2857
      %v2866 = vadd.f32 %v2826, %v2857
      %v2867 = vadd.f32 %v2827, %v2857
      %v2868 = vadd.f32 %v2828, %v2857
      %v2869 = vadd.f32 %v2829, %v2857
      %v2870 = vadd.f32 %v2830, %v2857
      %v2871 = vadd.f32 %v2831, %v2857
      %v2872 = vadd.f32 %v2832, %v2857
      %v2873 = vadd.f32 %v2833, %v2857
      %v2874 = vadd.f32 %v2834, %v2857
      %v2875 = vadd.f32 %v2835, %v2857
      %v2876 = vadd.f32 %v2836, %v2857
      %v2877 = vadd.f32 %v2837, %v2857
      %v2878 = vadd.f32 %v2838, %v2857
      %v2879 = vadd.f32 %v2839, %v2857
      %v2880 = vadd.f32 %v2840, %v2857
      %v2881 = vadd.f32 %v2841, %v2857
      %v2882 = vadd.f32 %v2842, %v2857
      %v2883 = vadd.f32 %v2843, %v2857
      %v2884 = vadd.f32 %v2844, %v2857
      %v2885 = vadd.f32 %v2845, %v2857
      %v2886 = vadd.f32 %v2846, %v2857
      %v2887 = vadd.f32 %v2847, %v2857
      %v2888 = vadd.f32 %v2848, %v2857
      %v2889 = vadd.f32 %v2849, %v2857
      %v2890 = vadd.f32 %v2850, %v2857
      %v2891 = vmax.f32 %v2859, 0.0
      %v2892 = vmax.f32 %v2860, 0.0
      %v2893 = vmax.f32 %v2861, 0.0
      %v2894 = vmax.f32 %v2862, 0.0
      %v2895 = vmax.f32 %v2863, 0.0
      %v2896 = vmax.f32 %v2864, 0.0
      %v2897 = vmax.f32 %v2865, 0.0
      %v2898 = vmax.f32 %v2866, 0.0
      %v2899 = vmax.f32 %v2867, 0.0
      %v2900 = vmax.f32 %v2868, 0.0
      %v2901 = vmax.f32 %v2869, 0.0
      %v2902 = vmax.f32 %v2870, 0.0
      %v2903 = vmax.f32 %v2871, 0.0
      %v2904 = vmax.f32 %v2872, 0.0
      %v2905 = vmax.f32 %v2873, 0.0
      %v2906 = vmax.f32 %v2874, 0.0
      %v2907 = vmax.f32 %v2875, 0.0
      %v2908 = vmax.f32 %v2876, 0.0
      %v2909 = vmax.f32 %v2877, 0.0
      %v2910 = vmax.f32 %v2878, 0.0
      %v2911 = vmax.f32 %v2879, 0.0
      %v2912 = vmax.f32 %v2880, 0.0
      %v2913 = vmax.f32 %v2881, 0.0
      %v2914 = vmax.f32 %v2882, 0.0
      %v2915 = vmax.f32 %v2883, 0.0
      %v2916 = vmax.f32 %v2884, 0.0
      %v2917 = vmax.f32 %v2885, 0.0
      %v2918 = vmax.f32 %v2886, 0.0
      %v2919 = vmax.f32 %v2887, 0.0
      %v2920 = vmax.f32 %v2888, 0.0
      %v2921 = vmax.f32 %v2889, 0.0
      %v2922 = vmax.f32 %v2890, 0.0
      %v2923 = vmin.f32 %v2891, 6.0
      %v2924 = vmin.f32 %v2892, 6.0
      %v2925 = vmin.f32 %v2893, 6.0
      %v2926 = vmin.f32 %v2894, 6.0
      %v2927 = vmin.f32 %v2895, 6.0
      %v2928 = vmin.f32 %v2896, 6.0
      %v2929 = vmin.f32 %v2897, 6.0
      %v2930 = vmin.f32 %v2898, 6.0
      %v2931 = vmin.f32 %v2899, 6.0
      %v2932 = vmin.f32 %v2900, 6.0
      %v2933 = vmin.f32 %v2901, 6.0
      %v2934 = vmin.f32 %v2902, 6.0
      %v2935 = vmin.f32 %v2903, 6.0
      %v2936 = vmin.f32 %v2904, 6.0
      %v2937 = vmin.f32 %v2905, 6.0
      %v2938 = vmin.f32 %v2906, 6.0
      %v2939 = vmin.f32 %v2907, 6.0
      %v2940 = vmin.f32 %v2908, 6.0
      %v2941 = vmin.f32 %v2909, 6.0
      %v2942 = vmin.f32 %v2910, 6.0
      %v2943 = vmin.f32 %v2911, 6.0
      %v2944 = vmin.f32 %v2912, 6.0
      %v2945 = vmin.f32 %v2913, 6.0
      %v2946 = vmin.f32 %v2914, 6.0
      %v2947 = vmin.f32 %v2915, 6.0
      %v2948 = vmin.f32 %v2916, 6.0
      %v2949 = vmin.f32 %v2917, 6.0
      %v2950 = vmin.f32 %v2918, 6.0
      %v2951 = vmin.f32 %v2919, 6.0
      %v2952 = vmin.f32 %v2920, 6.0
      %v2953 = vmin.f32 %v2921, 6.0
      %v2954 = vmin.f32 %v2922, 6.0
      %v2955 = vpack.c.bf16 %v2924, %v2923
      %v2956 = vpack.c.bf16 %v2926, %v2925
      %v2957 = vpack.c.bf16 %v2928, %v2927
      %v2958 = vpack.c.bf16 %v2930, %v2929
      %v2959 = vpack.c.bf16 %v2932, %v2931
      %v2960 = vpack.c.bf16 %v2934, %v2933
      %v2961 = vpack.c.bf16 %v2936, %v2935
      %v2962 = vpack.c.bf16 %v2938, %v2937
      %v2963 = vpack.c.bf16 %v2940, %v2939
      %v2964 = vpack.c.bf16 %v2942, %v2941
      %v2965 = vpack.c.bf16 %v2944, %v2943
      %v2966 = vpack.c.bf16 %v2946, %v2945
      %v2967 = vpack.c.bf16 %v2948, %v2947
      %v2968 = vpack.c.bf16 %v2950, %v2949
      %v2969 = vpack.c.bf16 %v2952, %v2951
      %v2970 = vpack.c.bf16 %v2954, %v2953
      %v2971 = vld [vmem:[%s8] sm:$0xf]
      %v2972 = vld [vmem:[%s8 + $0x4] sm:$0xf]
      %v2973 = vld [vmem:[%s8 + $0x8] sm:$0xf]
      %v2974 = vld [vmem:[%s8 + $0xc] sm:$0xf]
      %s2975 = scalar_lea.vmem %s8, 16
      %v2976 = vld [vmem:[%s2975] sm:$0xf]
      %v2977 = vld [vmem:[%s2975 + $0x4] sm:$0xf]
      %v2978 = vld [vmem:[%s2975 + $0x8] sm:$0xf]
      %v2979 = vld [vmem:[%s2975 + $0xc] sm:$0xf]
      %v2984 = vunpack.c.l.b16 %v2976
      %v2985 = vunpack.c.l.b16 %v2977
      %v2986 = vunpack.c.l.b16 %v2978
      %v2987 = vunpack.c.l.b16 %v2979
      %v2988 = vpack.c.b16 %v2985, %v2984
      %v2989 = vpack.c.b16 %v2987, %v2986
      %v2993 = vsel %vm771, %v1959, 0
      %v2996 = vsel %vm771, %v1960, 0
      %v2999 = vsel %vm771, %v1961, 0
      %v3002 = vsel %vm771, %v1962, 0
      %v3005 = vsel %vm771, %v1963, 0
      %v3008 = vsel %vm771, %v1964, 0
      %v3011 = vsel %vm771, %v1965, 0
      %v3014 = vsel %vm771, %v1966, 0
      %v3017 = vsel %vm771, %v1967, 0
      %v3020 = vsel %vm771, %v1968, 0
      %v3023 = vsel %vm771, %v1969, 0
      %v3026 = vsel %vm771, %v1970, 0
      %v3029 = vsel %vm771, %v1971, 0
      %v3032 = vsel %vm771, %v1972, 0
      %v3035 = vsel %vm771, %v1973, 0
      %v3038 = vsel %vm771, %v1974, 0
      %3040 = vmatprep.subr.bf16.mxu0 0
      %3041 = vmatpush1.bf16.msra.mxu0 %v2988
      %3042 = vmatprep.subr.bf16.mxu0 0
      %3043 = vmatpush1.bf16.msra.mxu0 %v2989
      %3044 = vmatprep.subr.bf16.mxu0 0
      %3045 = vmatpush1.bf16.msra.mxu0 0
      %3046 = vmatprep.subr.bf16.mxu0 0
      %3047 = vmatpush1.bf16.msra.mxu0 0
      %3048 = vmatprep.subr.bf16.mxu0 0
      %3049 = vmatpush1.bf16.msra.mxu0 0
      %3050 = vmatprep.subr.bf16.mxu0 0
      %3051 = vmatpush1.bf16.msra.mxu0 0
      %3052 = vmatprep.subr.bf16.mxu0 0
      %3053 = vmatpush1.bf16.msra.mxu0 0
      %3054 = vmatprep.subr.bf16.mxu0 0
      %3055 = vmatpush1.bf16.msra.mxu0 0
      %3056 = vmatprep.subr.bf16.mxu0 0
      %3057 = vmatpush1.bf16.msra.mxu0 0
      %3058 = vmatprep.subr.bf16.mxu0 0
      %3059 = vmatpush1.bf16.msra.mxu0 0
      %3060 = vmatprep.subr.bf16.mxu0 0
      %3061 = vmatpush1.bf16.msra.mxu0 0
      %3062 = vmatprep.subr.bf16.mxu0 0
      %3063 = vmatpush1.bf16.msra.mxu0 0
      %3064 = vmatprep.subr.bf16.mxu0 0
      %3065 = vmatpush1.bf16.msra.mxu0 0
      %3066 = vmatprep.subr.bf16.mxu0 0
      %3067 = vmatpush1.bf16.msra.mxu0 0
      %3068 = vmatprep.subr.bf16.mxu0 0
      %3069 = vmatpush1.bf16.msra.mxu0 0
      %3070 = vmatprep.subr.bf16.mxu0 0
      %3071 = vmatpush1.bf16.msra.mxu0 0
      %3072 = vmatprep.mubr.bf16.mxu0 0
      %3073 = vmatmul.mubr.bf16.gmra.mrb[0].mxu0 %v2993
      %v3074 = vpop.f32.mrb[0].mxu0
      %v3075 = vadd.f32 0.0, %v3074
      %v3076 = vpop.f32.mrb[0].mxu0
      %v3077 = vpop.f32.mrb[0].mxu0
      %v3078 = vadd.f32 0.0, %v3077
      %v3079 = vpop.f32.mrb[0].mxu0
      %3080 = vmatprep.mubr.bf16.mxu0 0
      %3081 = vmatmul.mubr.bf16.gmra.mrb[0].mxu0 %v2996
      %v3082 = vpop.f32.mrb[0].mxu0
      %v3083 = vadd.f32 0.0, %v3082
      %v3084 = vpop.f32.mrb[0].mxu0
      %v3085 = vpop.f32.mrb[0].mxu0
      %v3086 = vadd.f32 0.0, %v3085
      %v3087 = vpop.f32.mrb[0].mxu0
      %3088 = vmatprep.mubr.bf16.mxu0 0
      %3089 = vmatmul.mubr.bf16.gmra.mrb[0].mxu0 %v2999
      %v3090 = vpop.f32.mrb[0].mxu0
      %v3091 = vadd.f32 0.0, %v3090
      %v3092 = vpop.f32.mrb[0].mxu0
      %v3093 = vpop.f32.mrb[0].mxu0
      %v3094 = vadd.f32 0.0, %v3093
      %v3095 = vpop.f32.mrb[0].mxu0
      %3096 = vmatprep.mubr.bf16.mxu0 0
      %3097 = vmatmul.mubr.bf16.gmra.mrb[0].mxu0 %v3002
      %v3098 = vpop.f32.mrb[0].mxu0
      %v3099 = vadd.f32 0.0, %v3098
      %v3100 = vpop.f32.mrb[0].mxu0
      %v3101 = vpop.f32.mrb[0].mxu0
      %v3102 = vadd.f32 0.0, %v3101
      %v3103 = vpop.f32.mrb[0].mxu0
      %3104 = vmatprep.mubr.bf16.mxu0 0
      %3105 = vmatmul.mubr.bf16.gmra.mrb[0].mxu0 %v3005
      %v3106 = vpop.f32.mrb[0].mxu0
      %v3107 = vadd.f32 0.0, %v3106
      %v3108 = vpop.f32.mrb[0].mxu0
      %v3109 = vpop.f32.mrb[0].mxu0
      %v3110 = vadd.f32 0.0, %v3109
      %v3111 = vpop.f32.mrb[0].mxu0
      %3112 = vmatprep.mubr.bf16.mxu0 0
      %3113 = vmatmul.mubr.bf16.gmra.mrb[0].mxu0 %v3008
      %v3114 = vpop.f32.mrb[0].mxu0
      %v3115 = vadd.f32 0.0, %v3114
      %v3116 = vpop.f32.mrb[0].mxu0
      %v3117 = vpop.f32.mrb[0].mxu0
      %v3118 = vadd.f32 0.0, %v3117
      %v3119 = vpop.f32.mrb[0].mxu0
      %3120 = vmatprep.mubr.bf16.mxu0 0
      %3121 = vmatmul.mubr.bf16.gmra.mrb[0].mxu0 %v3011
      %v3122 = vpop.f32.mrb[0].mxu0
      %v3123 = vadd.f32 0.0, %v3122
      %v3124 = vpop.f32.mrb[0].mxu0
      %v3125 = vpop.f32.mrb[0].mxu0
      %v3126 = vadd.f32 0.0, %v3125
      %v3127 = vpop.f32.mrb[0].mxu0
      %3128 = vmatprep.mubr.bf16.mxu0 0
      %3129 = vmatmul.mubr.bf16.gmra.mrb[0].mxu0 %v3014
      %v3130 = vpop.f32.mrb[0].mxu0
      %v3131 = vadd.f32 0.0, %v3130
      %v3132 = vpop.f32.mrb[0].mxu0
      %v3133 = vpop.f32.mrb[0].mxu0
      %v3134 = vadd.f32 0.0, %v3133
      %v3135 = vpop.f32.mrb[0].mxu0
      %3136 = vmatprep.mubr.bf16.mxu0 0
      %3137 = vmatmul.mubr.bf16.gmra.mrb[0].mxu0 %v3017
      %v3138 = vpop.f32.mrb[0].mxu0
      %v3139 = vadd.f32 0.0, %v3138
      %v3140 = vpop.f32.mrb[0].mxu0
      %v3141 = vpop.f32.mrb[0].mxu0
      %v3142 = vadd.f32 0.0, %v3141
      %v3143 = vpop.f32.mrb[0].mxu0
      %3144 = vmatprep.mubr.bf16.mxu0 0
      %3145 = vmatmul.mubr.bf16.gmra.mrb[0].mxu0 %v3020
      %v3146 = vpop.f32.mrb[0].mxu0
      %v3147 = vadd.f32 0.0, %v3146
      %v3148 = vpop.f32.mrb[0].mxu0
      %v3149 = vpop.f32.mrb[0].mxu0
      %v3150 = vadd.f32 0.0, %v3149
      %v3151 = vpop.f32.mrb[0].mxu0
      %3152 = vmatprep.mubr.bf16.mxu0 0
      %3153 = vmatmul.mubr.bf16.gmra.mrb[0].mxu0 %v3023
      %v3154 = vpop.f32.mrb[0].mxu0
      %v3155 = vadd.f32 0.0, %v3154
      %v3156 = vpop.f32.mrb[0].mxu0
      %v3157 = vpop.f32.mrb[0].mxu0
      %v3158 = vadd.f32 0.0, %v3157
      %v3159 = vpop.f32.mrb[0].mxu0
      %3160 = vmatprep.mubr.bf16.mxu0 0
      %3161 = vmatmul.mubr.bf16.gmra.mrb[0].mxu0 %v3026
      %v3162 = vpop.f32.mrb[0].mxu0
      %v3163 = vadd.f32 0.0, %v3162
      %v3164 = vpop.f32.mrb[0].mxu0
      %v3165 = vpop.f32.mrb[0].mxu0
      %v3166 = vadd.f32 0.0, %v3165
      %v3167 = vpop.f32.mrb[0].mxu0
      %3168 = vmatprep.mubr.bf16.mxu0 0
      %3169 = vmatmul.mubr.bf16.gmra.mrb[0].mxu0 %v3029
      %v3170 = vpop.f32.mrb[0].mxu0
      %v3171 = vadd.f32 0.0, %v3170
      %v3172 = vpop.f32.mrb[0].mxu0
      %v3173 = vpop.f32.mrb[0].mxu0
      %v3174 = vadd.f32 0.0, %v3173
      %v3175 = vpop.f32.mrb[0].mxu0
      %3176 = vmatprep.mubr.bf16.mxu0 0
      %3177 = vmatmul.mubr.bf16.gmra.mrb[0].mxu0 %v3032
      %v3178 = vpop.f32.mrb[0].mxu0
      %v3179 = vadd.f32 0.0, %v3178
      %v3180 = vpop.f32.mrb[0].mxu0
      %v3181 = vpop.f32.mrb[0].mxu0
      %v3182 = vadd.f32 0.0, %v3181
      %v3183 = vpop.f32.mrb[0].mxu0
      %3184 = vmatprep.mubr.bf16.mxu0 0
      %3185 = vmatmul.mubr.bf16.gmra.mrb[0].mxu0 %v3035
      %v3186 = vpop.f32.mrb[0].mxu0
      %v3187 = vadd.f32 0.0, %v3186
      %v3188 = vpop.f32.mrb[0].mxu0
      %v3189 = vpop.f32.mrb[0].mxu0
      %v3190 = vadd.f32 0.0, %v3189
      %v3191 = vpop.f32.mrb[0].mxu0
      %3192 = vmatprep.mubr.bf16.mxu0 0
      %3193 = vmatmul.mubr.bf16.gmra.mrb[0].mxu0 %v3038
      %v3194 = vpop.f32.mrb[0].mxu0
      %v3195 = vadd.f32 0.0, %v3194
      %v3196 = vpop.f32.mrb[0].mxu0
      %v3197 = vpop.f32.mrb[0].mxu0
      %v3198 = vadd.f32 0.0, %v3197
      %v3199 = vpop.f32.mrb[0].mxu0
      %3200 = vdwg.mxu0
      %v3205 = vunpack.c.l.b16 %v2971
      %v3206 = vunpack.c.l.b16 %v2972
      %v3207 = vunpack.c.l.b16 %v2973
      %v3208 = vunpack.c.l.b16 %v2974
      %v3209 = vpack.c.b16 %v3206, %v3205
      %v3210 = vpack.c.b16 %v3208, %v3207
      %v3214 = vsel %vm771, %v1461, 0
      %v3217 = vsel %vm771, %v1462, 0
      %v3220 = vsel %vm771, %v1463, 0
      %v3223 = vsel %vm771, %v1464, 0
      %v3226 = vsel %vm771, %v1465, 0
      %v3229 = vsel %vm771, %v1466, 0
      %v3232 = vsel %vm771, %v1467, 0
      %v3235 = vsel %vm771, %v1468, 0
      %v3238 = vsel %vm771, %v1469, 0
      %v3241 = vsel %vm771, %v1470, 0
      %v3244 = vsel %vm771, %v1471, 0
      %v3247 = vsel %vm771, %v1472, 0
      %v3250 = vsel %vm771, %v1473, 0
      %v3253 = vsel %vm771, %v1474, 0
      %v3256 = vsel %vm771, %v1475, 0
      %v3259 = vsel %vm771, %v1476, 0
      %3261 = vmatprep.subr.bf16.mxu0 0
      %3262 = vmatpush1.bf16.msra.mxu0 %v3209
      %3263 = vmatprep.subr.bf16.mxu0 0
      %3264 = vmatpush1.bf16.msra.mxu0 %v3210
      %3265 = vmatprep.subr.bf16.mxu0 0
      %3266 = vmatpush1.bf16.msra.mxu0 0
      %3267 = vmatprep.subr.bf16.mxu0 0
      %3268 = vmatpush1.bf16.msra.mxu0 0
      %3269 = vmatprep.subr.bf16.mxu0 0
      %3270 = vmatpush1.bf16.msra.mxu0 0
      %3271 = vmatprep.subr.bf16.mxu0 0
      %3272 = vmatpush1.bf16.msra.mxu0 0
      %3273 = vmatprep.subr.bf16.mxu0 0
      %3274 = vmatpush1.bf16.msra.mxu0 0
      %3275 = vmatprep.subr.bf16.mxu0 0
      %3276 = vmatpush1.bf16.msra.mxu0 0
      %3277 = vmatprep.subr.bf16.mxu0 0
      %3278 = vmatpush1.bf16.msra.mxu0 0
      %3279 = vmatprep.subr.bf16.mxu0 0
      %3280 = vmatpush1.bf16.msra.mxu0 0
      %3281 = vmatprep.subr.bf16.mxu0 0
      %3282 = vmatpush1.bf16.msra.mxu0 0
      %3283 = vmatprep.subr.bf16.mxu0 0
      %3284 = vmatpush1.bf16.msra.mxu0 0
      %3285 = vmatprep.subr.bf16.mxu0 0
      %3286 = vmatpush1.bf16.msra.mxu0 0
      %3287 = vmatprep.subr.bf16.mxu0 0
      %3288 = vmatpush1.bf16.msra.mxu0 0
      %3289 = vmatprep.subr.bf16.mxu0 0
      %3290 = vmatpush1.bf16.msra.mxu0 0
      %3291 = vmatprep.subr.bf16.mxu0 0
      %3292 = vmatpush1.bf16.msra.mxu0 0
      %3293 = vmatprep.mubr.bf16.mxu0 0
      %3294 = vmatmul.mubr.bf16.gmra.mrb[0].mxu0 %v3214
      %v3295 = vpop.f32.mrb[0].mxu0
      %v3296 = vadd.f32 %v3075, %v3295
      %v3297 = vpop.f32.mrb[0].mxu0
      %v3298 = vpop.f32.mrb[0].mxu0
      %v3299 = vadd.f32 %v3078, %v3298
      %v3300 = vpop.f32.mrb[0].mxu0
      %3301 = vmatprep.mubr.bf16.mxu0 0
      %3302 = vmatmul.mubr.bf16.gmra.mrb[0].mxu0 %v3217
      %v3303 = vpop.f32.mrb[0].mxu0
      %v3304 = vadd.f32 %v3083, %v3303
      %v3305 = vpop.f32.mrb[0].mxu0
      %v3306 = vpop.f32.mrb[0].mxu0
      %v3307 = vadd.f32 %v3086, %v3306
      %v3308 = vpop.f32.mrb[0].mxu0
      %3309 = vmatprep.mubr.bf16.mxu0 0
      %3310 = vmatmul.mubr.bf16.gmra.mrb[0].mxu0 %v3220
      %v3311 = vpop.f32.mrb[0].mxu0
      %v3312 = vadd.f32 %v3091, %v3311
      %v3313 = vpop.f32.mrb[0].mxu0
      %v3314 = vpop.f32.mrb[0].mxu0
      %v3315 = vadd.f32 %v3094, %v3314
      %v3316 = vpop.f32.mrb[0].mxu0
      %3317 = vmatprep.mubr.bf16.mxu0 0
      %3318 = vmatmul.mubr.bf16.gmra.mrb[0].mxu0 %v3223
      %v3319 = vpop.f32.mrb[0].mxu0
      %v3320 = vadd.f32 %v3099, %v3319
      %v3321 = vpop.f32.mrb[0].mxu0
      %v3322 = vpop.f32.mrb[0].mxu0
      %v3323 = vadd.f32 %v3102, %v3322
      %v3324 = vpop.f32.mrb[0].mxu0
      %3325 = vmatprep.mubr.bf16.mxu0 0
      %3326 = vmatmul.mubr.bf16.gmra.mrb[0].mxu0 %v3226
      %v3327 = vpop.f32.mrb[0].mxu0
      %v3328 = vadd.f32 %v3107, %v3327
      %v3329 = vpop.f32.mrb[0].mxu0
      %v3330 = vpop.f32.mrb[0].mxu0
      %v3331 = vadd.f32 %v3110, %v3330
      %v3332 = vpop.f32.mrb[0].mxu0
      %3333 = vmatprep.mubr.bf16.mxu0 0
      %3334 = vmatmul.mubr.bf16.gmra.mrb[0].mxu0 %v3229
      %v3335 = vpop.f32.mrb[0].mxu0
      %v3336 = vadd.f32 %v3115, %v3335
      %v3337 = vpop.f32.mrb[0].mxu0
      %v3338 = vpop.f32.mrb[0].mxu0
      %v3339 = vadd.f32 %v3118, %v3338
      %v3340 = vpop.f32.mrb[0].mxu0
      %3341 = vmatprep.mubr.bf16.mxu0 0
      %3342 = vmatmul.mubr.bf16.gmra.mrb[0].mxu0 %v3232
      %v3343 = vpop.f32.mrb[0].mxu0
      %v3344 = vadd.f32 %v3123, %v3343
      %v3345 = vpop.f32.mrb[0].mxu0
      %v3346 = vpop.f32.mrb[0].mxu0
      %v3347 = vadd.f32 %v3126, %v3346
      %v3348 = vpop.f32.mrb[0].mxu0
      %3349 = vmatprep.mubr.bf16.mxu0 0
      %3350 = vmatmul.mubr.bf16.gmra.mrb[0].mxu0 %v3235
      %v3351 = vpop.f32.mrb[0].mxu0
      %v3352 = vadd.f32 %v3131, %v3351
      %v3353 = vpop.f32.mrb[0].mxu0
      %v3354 = vpop.f32.mrb[0].mxu0
      %v3355 = vadd.f32 %v3134, %v3354
      %v3356 = vpop.f32.mrb[0].mxu0
      %3357 = vmatprep.mubr.bf16.mxu0 0
      %3358 = vmatmul.mubr.bf16.gmra.mrb[0].mxu0 %v3238
      %v3359 = vpop.f32.mrb[0].mxu0
      %v3360 = vadd.f32 %v3139, %v3359
      %v3361 = vpop.f32.mrb[0].mxu0
      %v3362 = vpop.f32.mrb[0].mxu0
      %v3363 = vadd.f32 %v3142, %v3362
      %v3364 = vpop.f32.mrb[0].mxu0
      %3365 = vmatprep.mubr.bf16.mxu0 0
      %3366 = vmatmul.mubr.bf16.gmra.mrb[0].mxu0 %v3241
      %v3367 = vpop.f32.mrb[0].mxu0
      %v3368 = vadd.f32 %v3147, %v3367
      %v3369 = vpop.f32.mrb[0].mxu0
      %v3370 = vpop.f32.mrb[0].mxu0
      %v3371 = vadd.f32 %v3150, %v3370
      %v3372 = vpop.f32.mrb[0].mxu0
      %3373 = vmatprep.mubr.bf16.mxu0 0
      %3374 = vmatmul.mubr.bf16.gmra.mrb[0].mxu0 %v3244
      %v3375 = vpop.f32.mrb[0].mxu0
      %v3376 = vadd.f32 %v3155, %v3375
      %v3377 = vpop.f32.mrb[0].mxu0
      %v3378 = vpop.f32.mrb[0].mxu0
      %v3379 = vadd.f32 %v3158, %v3378
      %v3380 = vpop.f32.mrb[0].mxu0
      %3381 = vmatprep.mubr.bf16.mxu0 0
      %3382 = vmatmul.mubr.bf16.gmra.mrb[0].mxu0 %v3247
      %v3383 = vpop.f32.mrb[0].mxu0
      %v3384 = vadd.f32 %v3163, %v3383
      %v3385 = vpop.f32.mrb[0].mxu0
      %v3386 = vpop.f32.mrb[0].mxu0
      %v3387 = vadd.f32 %v3166, %v3386
      %v3388 = vpop.f32.mrb[0].mxu0
      %3389 = vmatprep.mubr.bf16.mxu0 0
      %3390 = vmatmul.mubr.bf16.gmra.mrb[0].mxu0 %v3250
      %v3391 = vpop.f32.mrb[0].mxu0
      %v3392 = vadd.f32 %v3171, %v3391
      %v3393 = vpop.f32.mrb[0].mxu0
      %v3394 = vpop.f32.mrb[0].mxu0
      %v3395 = vadd.f32 %v3174, %v3394
      %v3396 = vpop.f32.mrb[0].mxu0
      %3397 = vmatprep.mubr.bf16.mxu0 0
      %3398 = vmatmul.mubr.bf16.gmra.mrb[0].mxu0 %v3253
      %v3399 = vpop.f32.mrb[0].mxu0
      %v3400 = vadd.f32 %v3179, %v3399
      %v3401 = vpop.f32.mrb[0].mxu0
      %v3402 = vpop.f32.mrb[0].mxu0
      %v3403 = vadd.f32 %v3182, %v3402
      %v3404 = vpop.f32.mrb[0].mxu0
      %3405 = vmatprep.mubr.bf16.mxu0 0
      %3406 = vmatmul.mubr.bf16.gmra.mrb[0].mxu0 %v3256
      %v3407 = vpop.f32.mrb[0].mxu0
      %v3408 = vadd.f32 %v3187, %v3407
      %v3409 = vpop.f32.mrb[0].mxu0
      %v3410 = vpop.f32.mrb[0].mxu0
      %v3411 = vadd.f32 %v3190, %v3410
      %v3412 = vpop.f32.mrb[0].mxu0
      %3413 = vmatprep.mubr.bf16.mxu0 0
      %3414 = vmatmul.mubr.bf16.gmra.mrb[0].mxu0 %v3259
      %v3415 = vpop.f32.mrb[0].mxu0
      %v3416 = vadd.f32 %v3195, %v3415
      %v3417 = vpop.f32.mrb[0].mxu0
      %v3418 = vpop.f32.mrb[0].mxu0
      %v3419 = vadd.f32 %v3198, %v3418
      %v3420 = vpop.f32.mrb[0].mxu0
      %3421 = vdwg.mxu0
      %s3422 = scalar_lea.vmem %s8, 32
      %v3423 = vld [vmem:[%s3422] sm:$0xf]
      %v3424 = vld [vmem:[%s3422 + $0x4] sm:$0xf]
      %v3425 = vld [vmem:[%s3422 + $0x8] sm:$0xf]
      %v3426 = vld [vmem:[%s3422 + $0xc] sm:$0xf]
      %v3431 = vunpack.c.l.b16 %v3423
      %v3432 = vunpack.c.l.b16 %v3424
      %v3433 = vunpack.c.l.b16 %v3425
      %v3434 = vunpack.c.l.b16 %v3426
      %v3435 = vpack.c.b16 %v3432, %v3431
      %v3436 = vpack.c.b16 %v3434, %v3433
      %v3440 = vsel %vm771, %v2457, 0
      %v3443 = vsel %vm771, %v2458, 0
      %v3446 = vsel %vm771, %v2459, 0
      %v3449 = vsel %vm771, %v2460, 0
      %v3452 = vsel %vm771, %v2461, 0
      %v3455 = vsel %vm771, %v2462, 0
      %v3458 = vsel %vm771, %v2463, 0
      %v3461 = vsel %vm771, %v2464, 0
      %v3464 = vsel %vm771, %v2465, 0
      %v3467 = vsel %vm771, %v2466, 0
      %v3470 = vsel %vm771, %v2467, 0
      %v3473 = vsel %vm771, %v2468, 0
      %v3476 = vsel %vm771, %v2469, 0
      %v3479 = vsel %vm771, %v2470, 0
      %v3482 = vsel %vm771, %v2471, 0
      %v3485 = vsel %vm771, %v2472, 0
      %3487 = vmatprep.subr.bf16.mxu0 0
      %3488 = vmatpush1.bf16.msra.mxu0 %v3435
      %3489 = vmatprep.subr.bf16.mxu0 0
      %3490 = vmatpush1.bf16.msra.mxu0 %v3436
      %3491 = vmatprep.subr.bf16.mxu0 0
      %3492 = vmatpush1.bf16.msra.mxu0 0
      %3493 = vmatprep.subr.bf16.mxu0 0
      %3494 = vmatpush1.bf16.msra.mxu0 0
      %3495 = vmatprep.subr.bf16.mxu0 0
      %3496 = vmatpush1.bf16.msra.mxu0 0
      %3497 = vmatprep.subr.bf16.mxu0 0
      %3498 = vmatpush1.bf16.msra.mxu0 0
      %3499 = vmatprep.subr.bf16.mxu0 0
      %3500 = vmatpush1.bf16.msra.mxu0 0
      %3501 = vmatprep.subr.bf16.mxu0 0
      %3502 = vmatpush1.bf16.msra.mxu0 0
      %3503 = vmatprep.subr.bf16.mxu0 0
      %3504 = vmatpush1.bf16.msra.mxu0 0
      %3505 = vmatprep.subr.bf16.mxu0 0
      %3506 = vmatpush1.bf16.msra.mxu0 0
      %3507 = vmatprep.subr.bf16.mxu0 0
      %3508 = vmatpush1.bf16.msra.mxu0 0
      %3509 = vmatprep.subr.bf16.mxu0 0
      %3510 = vmatpush1.bf16.msra.mxu0 0
      %3511 = vmatprep.subr.bf16.mxu0 0
      %3512 = vmatpush1.bf16.msra.mxu0 0
      %3513 = vmatprep.subr.bf16.mxu0 0
      %3514 = vmatpush1.bf16.msra.mxu0 0
      %3515 = vmatprep.subr.bf16.mxu0 0
      %3516 = vmatpush1.bf16.msra.mxu0 0
      %3517 = vmatprep.subr.bf16.mxu0 0
      %3518 = vmatpush1.bf16.msra.mxu0 0
      %3519 = vmatprep.mubr.bf16.mxu0 0
      %3520 = vmatmul.mubr.bf16.gmra.mrb[0].mxu0 %v3440
      %v3521 = vpop.f32.mrb[0].mxu0
      %v3522 = vadd.f32 0.0, %v3521
      %v3523 = vpop.f32.mrb[0].mxu0
      %v3524 = vpop.f32.mrb[0].mxu0
      %v3525 = vadd.f32 0.0, %v3524
      %v3526 = vpop.f32.mrb[0].mxu0
      %3527 = vmatprep.mubr.bf16.mxu0 0
      %3528 = vmatmul.mubr.bf16.gmra.mrb[0].mxu0 %v3443
      %v3529 = vpop.f32.mrb[0].mxu0
      %v3530 = vadd.f32 0.0, %v3529
      %v3531 = vpop.f32.mrb[0].mxu0
      %v3532 = vpop.f32.mrb[0].mxu0
      %v3533 = vadd.f32 0.0, %v3532
      %v3534 = vpop.f32.mrb[0].mxu0
      %3535 = vmatprep.mubr.bf16.mxu0 0
      %3536 = vmatmul.mubr.bf16.gmra.mrb[0].mxu0 %v3446
      %v3537 = vpop.f32.mrb[0].mxu0
      %v3538 = vadd.f32 0.0, %v3537
      %v3539 = vpop.f32.mrb[0].mxu0
      %v3540 = vpop.f32.mrb[0].mxu0
      %v3541 = vadd.f32 0.0, %v3540
      %v3542 = vpop.f32.mrb[0].mxu0
      %3543 = vmatprep.mubr.bf16.mxu0 0
      %3544 = vmatmul.mubr.bf16.gmra.mrb[0].mxu0 %v3449
      %v3545 = vpop.f32.mrb[0].mxu0
      %v3546 = vadd.f32 0.0, %v3545
      %v3547 = vpop.f32.mrb[0].mxu0
      %v3548 = vpop.f32.mrb[0].mxu0
      %v3549 = vadd.f32 0.0, %v3548
      %v3550 = vpop.f32.mrb[0].mxu0
      %3551 = vmatprep.mubr.bf16.mxu0 0
      %3552 = vmatmul.mubr.bf16.gmra.mrb[0].mxu0 %v3452
      %v3553 = vpop.f32.mrb[0].mxu0
      %v3554 = vadd.f32 0.0, %v3553
      %v3555 = vpop.f32.mrb[0].mxu0
      %v3556 = vpop.f32.mrb[0].mxu0
      %v3557 = vadd.f32 0.0, %v3556
      %v3558 = vpop.f32.mrb[0].mxu0
      %3559 = vmatprep.mubr.bf16.mxu0 0
      %3560 = vmatmul.mubr.bf16.gmra.mrb[0].mxu0 %v3455
      %v3561 = vpop.f32.mrb[0].mxu0
      %v3562 = vadd.f32 0.0, %v3561
      %v3563 = vpop.f32.mrb[0].mxu0
      %v3564 = vpop.f32.mrb[0].mxu0
      %v3565 = vadd.f32 0.0, %v3564
      %v3566 = vpop.f32.mrb[0].mxu0
      %3567 = vmatprep.mubr.bf16.mxu0 0
      %3568 = vmatmul.mubr.bf16.gmra.mrb[0].mxu0 %v3458
      %v3569 = vpop.f32.mrb[0].mxu0
      %v3570 = vadd.f32 0.0, %v3569
      %v3571 = vpop.f32.mrb[0].mxu0
      %v3572 = vpop.f32.mrb[0].mxu0
      %v3573 = vadd.f32 0.0, %v3572
      %v3574 = vpop.f32.mrb[0].mxu0
      %3575 = vmatprep.mubr.bf16.mxu0 0
      %3576 = vmatmul.mubr.bf16.gmra.mrb[0].mxu0 %v3461
      %v3577 = vpop.f32.mrb[0].mxu0
      %v3578 = vadd.f32 0.0, %v3577
      %v3579 = vpop.f32.mrb[0].mxu0
      %v3580 = vpop.f32.mrb[0].mxu0
      %v3581 = vadd.f32 0.0, %v3580
      %v3582 = vpop.f32.mrb[0].mxu0
      %3583 = vmatprep.mubr.bf16.mxu0 0
      %3584 = vmatmul.mubr.bf16.gmra.mrb[0].mxu0 %v3464
      %v3585 = vpop.f32.mrb[0].mxu0
      %v3586 = vadd.f32 0.0, %v3585
      %v3587 = vpop.f32.mrb[0].mxu0
      %v3588 = vpop.f32.mrb[0].mxu0
      %v3589 = vadd.f32 0.0, %v3588
      %v3590 = vpop.f32.mrb[0].mxu0
      %3591 = vmatprep.mubr.bf16.mxu0 0
      %3592 = vmatmul.mubr.bf16.gmra.mrb[0].mxu0 %v3467
      %v3593 = vpop.f32.mrb[0].mxu0
      %v3594 = vadd.f32 0.0, %v3593
      %v3595 = vpop.f32.mrb[0].mxu0
      %v3596 = vpop.f32.mrb[0].mxu0
      %v3597 = vadd.f32 0.0, %v3596
      %v3598 = vpop.f32.mrb[0].mxu0
      %3599 = vmatprep.mubr.bf16.mxu0 0
      %3600 = vmatmul.mubr.bf16.gmra.mrb[0].mxu0 %v3470
      %v3601 = vpop.f32.mrb[0].mxu0
      %v3602 = vadd.f32 0.0, %v3601
      %v3603 = vpop.f32.mrb[0].mxu0
      %v3604 = vpop.f32.mrb[0].mxu0
      %v3605 = vadd.f32 0.0, %v3604
      %v3606 = vpop.f32.mrb[0].mxu0
      %3607 = vmatprep.mubr.bf16.mxu0 0
      %3608 = vmatmul.mubr.bf16.gmra.mrb[0].mxu0 %v3473
      %v3609 = vpop.f32.mrb[0].mxu0
      %v3610 = vadd.f32 0.0, %v3609
      %v3611 = vpop.f32.mrb[0].mxu0
      %v3612 = vpop.f32.mrb[0].mxu0
      %v3613 = vadd.f32 0.0, %v3612
      %v3614 = vpop.f32.mrb[0].mxu0
      %3615 = vmatprep.mubr.bf16.mxu0 0
      %3616 = vmatmul.mubr.bf16.gmra.mrb[0].mxu0 %v3476
      %v3617 = vpop.f32.mrb[0].mxu0
      %v3618 = vadd.f32 0.0, %v3617
      %v3619 = vpop.f32.mrb[0].mxu0
      %v3620 = vpop.f32.mrb[0].mxu0
      %v3621 = vadd.f32 0.0, %v3620
      %v3622 = vpop.f32.mrb[0].mxu0
      %3623 = vmatprep.mubr.bf16.mxu0 0
      %3624 = vmatmul.mubr.bf16.gmra.mrb[0].mxu0 %v3479
      %v3625 = vpop.f32.mrb[0].mxu0
      %v3626 = vadd.f32 0.0, %v3625
      %v3627 = vpop.f32.mrb[0].mxu0
      %v3628 = vpop.f32.mrb[0].mxu0
      %v3629 = vadd.f32 0.0, %v3628
      %v3630 = vpop.f32.mrb[0].mxu0
      %3631 = vmatprep.mubr.bf16.mxu0 0
      %3632 = vmatmul.mubr.bf16.gmra.mrb[0].mxu0 %v3482
      %v3633 = vpop.f32.mrb[0].mxu0
      %v3634 = vadd.f32 0.0, %v3633
      %v3635 = vpop.f32.mrb[0].mxu0
      %v3636 = vpop.f32.mrb[0].mxu0
      %v3637 = vadd.f32 0.0, %v3636
      %v3638 = vpop.f32.mrb[0].mxu0
      %3639 = vmatprep.mubr.bf16.mxu0 0
      %3640 = vmatmul.mubr.bf16.gmra.mrb[0].mxu0 %v3485
      %v3641 = vpop.f32.mrb[0].mxu0
      %v3642 = vadd.f32 0.0, %v3641
      %v3643 = vpop.f32.mrb[0].mxu0
      %v3644 = vpop.f32.mrb[0].mxu0
      %v3645 = vadd.f32 0.0, %v3644
      %v3646 = vpop.f32.mrb[0].mxu0
      %3647 = vdwg.mxu0
      %v3648 = vadd.f32 %v3296, %v3522
      %v3649 = vadd.f32 %v3299, %v3525
      %v3650 = vadd.f32 %v3304, %v3530
      %v3651 = vadd.f32 %v3307, %v3533
      %v3652 = vadd.f32 %v3312, %v3538
      %v3653 = vadd.f32 %v3315, %v3541
      %v3654 = vadd.f32 %v3320, %v3546
      %v3655 = vadd.f32 %v3323, %v3549
      %v3656 = vadd.f32 %v3328, %v3554
      %v3657 = vadd.f32 %v3331, %v3557
      %v3658 = vadd.f32 %v3336, %v3562
      %v3659 = vadd.f32 %v3339, %v3565
      %v3660 = vadd.f32 %v3344, %v3570
      %v3661 = vadd.f32 %v3347, %v3573
      %v3662 = vadd.f32 %v3352, %v3578
      %v3663 = vadd.f32 %v3355, %v3581
      %v3664 = vadd.f32 %v3360, %v3586
      %v3665 = vadd.f32 %v3363, %v3589
      %v3666 = vadd.f32 %v3368, %v3594
      %v3667 = vadd.f32 %v3371, %v3597
      %v3668 = vadd.f32 %v3376, %v3602
      %v3669 = vadd.f32 %v3379, %v3605
      %v3670 = vadd.f32 %v3384, %v3610
      %v3671 = vadd.f32 %v3387, %v3613
      %v3672 = vadd.f32 %v3392, %v3618
      %v3673 = vadd.f32 %v3395, %v3621
      %v3674 = vadd.f32 %v3400, %v3626
      %v3675 = vadd.f32 %v3403, %v3629
      %v3676 = vadd.f32 %v3408, %v3634
      %v3677 = vadd.f32 %v3411, %v3637
      %v3678 = vadd.f32 %v3416, %v3642
      %v3679 = vadd.f32 %v3419, %v3645
      %s3680 = scalar_lea.vmem %s8, 48
      %v3681 = vld [vmem:[%s3680] sm:$0xf]
      %v3682 = vld [vmem:[%s3680 + $0x4] sm:$0xf]
      %v3683 = vld [vmem:[%s3680 + $0x8] sm:$0xf]
      %v3684 = vld [vmem:[%s3680 + $0xc] sm:$0xf]
      %v3689 = vunpack.c.l.b16 %v3681
      %v3690 = vunpack.c.l.b16 %v3682
      %v3691 = vunpack.c.l.b16 %v3683
      %v3692 = vunpack.c.l.b16 %v3684
      %v3693 = vpack.c.b16 %v3690, %v3689
      %v3694 = vpack.c.b16 %v3692, %v3691
      %v3698 = vsel %vm771, %v2955, 0
      %v3701 = vsel %vm771, %v2956, 0
      %v3704 = vsel %vm771, %v2957, 0
      %v3707 = vsel %vm771, %v2958, 0
      %v3710 = vsel %vm771, %v2959, 0
      %v3713 = vsel %vm771, %v2960, 0
      %v3716 = vsel %vm771, %v2961, 0
      %v3719 = vsel %vm771, %v2962, 0
      %v3722 = vsel %vm771, %v2963, 0
      %v3725 = vsel %vm771, %v2964, 0
      %v3728 = vsel %vm771, %v2965, 0
      %v3731 = vsel %vm771, %v2966, 0
      %v3734 = vsel %vm771, %v2967, 0
      %v3737 = vsel %vm771, %v2968, 0
      %v3740 = vsel %vm771, %v2969, 0
      %v3743 = vsel %vm771, %v2970, 0
      %3745 = vmatprep.subr.bf16.mxu0 0
      %3746 = vmatpush1.bf16.msra.mxu0 %v3693
      %3747 = vmatprep.subr.bf16.mxu0 0
      %3748 = vmatpush1.bf16.msra.mxu0 %v3694
      %3749 = vmatprep.subr.bf16.mxu0 0
      %3750 = vmatpush1.bf16.msra.mxu0 0
      %3751 = vmatprep.subr.bf16.mxu0 0
      %3752 = vmatpush1.bf16.msra.mxu0 0
      %3753 = vmatprep.subr.bf16.mxu0 0
      %3754 = vmatpush1.bf16.msra.mxu0 0
      %3755 = vmatprep.subr.bf16.mxu0 0
      %3756 = vmatpush1.bf16.msra.mxu0 0
      %3757 = vmatprep.subr.bf16.mxu0 0
      %3758 = vmatpush1.bf16.msra.mxu0 0
      %3759 = vmatprep.subr.bf16.mxu0 0
      %3760 = vmatpush1.bf16.msra.mxu0 0
      %3761 = vmatprep.subr.bf16.mxu0 0
      %3762 = vmatpush1.bf16.msra.mxu0 0
      %3763 = vmatprep.subr.bf16.mxu0 0
      %3764 = vmatpush1.bf16.msra.mxu0 0
      %3765 = vmatprep.subr.bf16.mxu0 0
      %3766 = vmatpush1.bf16.msra.mxu0 0
      %3767 = vmatprep.subr.bf16.mxu0 0
      %3768 = vmatpush1.bf16.msra.mxu0 0
      %3769 = vmatprep.subr.bf16.mxu0 0
      %3770 = vmatpush1.bf16.msra.mxu0 0
      %3771 = vmatprep.subr.bf16.mxu0 0
      %3772 = vmatpush1.bf16.msra.mxu0 0
      %3773 = vmatprep.subr.bf16.mxu0 0
      %3774 = vmatpush1.bf16.msra.mxu0 0
      %3775 = vmatprep.subr.bf16.mxu0 0
      %3776 = vmatpush1.bf16.msra.mxu0 0
      %3777 = vmatprep.mubr.bf16.mxu0 0
      %3778 = vmatmul.mubr.bf16.gmra.mrb[0].mxu0 %v3698
      %v3779 = vpop.f32.mrb[0].mxu0
      %v3780 = vadd.f32 0.0, %v3779
      %v3781 = vpop.f32.mrb[0].mxu0
      %v3782 = vpop.f32.mrb[0].mxu0
      %v3783 = vadd.f32 0.0, %v3782
      %v3784 = vpop.f32.mrb[0].mxu0
      %3785 = vmatprep.mubr.bf16.mxu0 0
      %3786 = vmatmul.mubr.bf16.gmra.mrb[0].mxu0 %v3701
      %v3787 = vpop.f32.mrb[0].mxu0
      %v3788 = vadd.f32 0.0, %v3787
      %v3789 = vpop.f32.mrb[0].mxu0
      %v3790 = vpop.f32.mrb[0].mxu0
      %v3791 = vadd.f32 0.0, %v3790
      %v3792 = vpop.f32.mrb[0].mxu0
      %3793 = vmatprep.mubr.bf16.mxu0 0
      %3794 = vmatmul.mubr.bf16.gmra.mrb[0].mxu0 %v3704
      %v3795 = vpop.f32.mrb[0].mxu0
      %v3796 = vadd.f32 0.0, %v3795
      %v3797 = vpop.f32.mrb[0].mxu0
      %v3798 = vpop.f32.mrb[0].mxu0
      %v3799 = vadd.f32 0.0, %v3798
      %v3800 = vpop.f32.mrb[0].mxu0
      %3801 = vmatprep.mubr.bf16.mxu0 0
      %3802 = vmatmul.mubr.bf16.gmra.mrb[0].mxu0 %v3707
      %v3803 = vpop.f32.mrb[0].mxu0
      %v3804 = vadd.f32 0.0, %v3803
      %v3805 = vpop.f32.mrb[0].mxu0
      %v3806 = vpop.f32.mrb[0].mxu0
      %v3807 = vadd.f32 0.0, %v3806
      %v3808 = vpop.f32.mrb[0].mxu0
      %3809 = vmatprep.mubr.bf16.mxu0 0
      %3810 = vmatmul.mubr.bf16.gmra.mrb[0].mxu0 %v3710
      %v3811 = vpop.f32.mrb[0].mxu0
      %v3812 = vadd.f32 0.0, %v3811
      %v3813 = vpop.f32.mrb[0].mxu0
      %v3814 = vpop.f32.mrb[0].mxu0
      %v3815 = vadd.f32 0.0, %v3814
      %v3816 = vpop.f32.mrb[0].mxu0
      %3817 = vmatprep.mubr.bf16.mxu0 0
      %3818 = vmatmul.mubr.bf16.gmra.mrb[0].mxu0 %v3713
      %v3819 = vpop.f32.mrb[0].mxu0
      %v3820 = vadd.f32 0.0, %v3819
      %v3821 = vpop.f32.mrb[0].mxu0
      %v3822 = vpop.f32.mrb[0].mxu0
      %v3823 = vadd.f32 0.0, %v3822
      %v3824 = vpop.f32.mrb[0].mxu0
      %3825 = vmatprep.mubr.bf16.mxu0 0
      %3826 = vmatmul.mubr.bf16.gmra.mrb[0].mxu0 %v3716
      %v3827 = vpop.f32.mrb[0].mxu0
      %v3828 = vadd.f32 0.0, %v3827
      %v3829 = vpop.f32.mrb[0].mxu0
      %v3830 = vpop.f32.mrb[0].mxu0
      %v3831 = vadd.f32 0.0, %v3830
      %v3832 = vpop.f32.mrb[0].mxu0
      %3833 = vmatprep.mubr.bf16.mxu0 0
      %3834 = vmatmul.mubr.bf16.gmra.mrb[0].mxu0 %v3719
      %v3835 = vpop.f32.mrb[0].mxu0
      %v3836 = vadd.f32 0.0, %v3835
      %v3837 = vpop.f32.mrb[0].mxu0
      %v3838 = vpop.f32.mrb[0].mxu0
      %v3839 = vadd.f32 0.0, %v3838
      %v3840 = vpop.f32.mrb[0].mxu0
      %3841 = vmatprep.mubr.bf16.mxu0 0
      %3842 = vmatmul.mubr.bf16.gmra.mrb[0].mxu0 %v3722
      %v3843 = vpop.f32.mrb[0].mxu0
      %v3844 = vadd.f32 0.0, %v3843
      %v3845 = vpop.f32.mrb[0].mxu0
      %v3846 = vpop.f32.mrb[0].mxu0
      %v3847 = vadd.f32 0.0, %v3846
      %v3848 = vpop.f32.mrb[0].mxu0
      %3849 = vmatprep.mubr.bf16.mxu0 0
      %3850 = vmatmul.mubr.bf16.gmra.mrb[0].mxu0 %v3725
      %v3851 = vpop.f32.mrb[0].mxu0
      %v3852 = vadd.f32 0.0, %v3851
      %v3853 = vpop.f32.mrb[0].mxu0
      %v3854 = vpop.f32.mrb[0].mxu0
      %v3855 = vadd.f32 0.0, %v3854
      %v3856 = vpop.f32.mrb[0].mxu0
      %3857 = vmatprep.mubr.bf16.mxu0 0
      %3858 = vmatmul.mubr.bf16.gmra.mrb[0].mxu0 %v3728
      %v3859 = vpop.f32.mrb[0].mxu0
      %v3860 = vadd.f32 0.0, %v3859
      %v3861 = vpop.f32.mrb[0].mxu0
      %v3862 = vpop.f32.mrb[0].mxu0
      %v3863 = vadd.f32 0.0, %v3862
      %v3864 = vpop.f32.mrb[0].mxu0
      %3865 = vmatprep.mubr.bf16.mxu0 0
      %3866 = vmatmul.mubr.bf16.gmra.mrb[0].mxu0 %v3731
      %v3867 = vpop.f32.mrb[0].mxu0
      %v3868 = vadd.f32 0.0, %v3867
      %v3869 = vpop.f32.mrb[0].mxu0
      %v3870 = vpop.f32.mrb[0].mxu0
      %v3871 = vadd.f32 0.0, %v3870
      %v3872 = vpop.f32.mrb[0].mxu0
      %3873 = vmatprep.mubr.bf16.mxu0 0
      %3874 = vmatmul.mubr.bf16.gmra.mrb[0].mxu0 %v3734
      %v3875 = vpop.f32.mrb[0].mxu0
      %v3876 = vadd.f32 0.0, %v3875
      %v3877 = vpop.f32.mrb[0].mxu0
      %v3878 = vpop.f32.mrb[0].mxu0
      %v3879 = vadd.f32 0.0, %v3878
      %v3880 = vpop.f32.mrb[0].mxu0
      %3881 = vmatprep.mubr.bf16.mxu0 0
      %3882 = vmatmul.mubr.bf16.gmra.mrb[0].mxu0 %v3737
      %v3883 = vpop.f32.mrb[0].mxu0
      %v3884 = vadd.f32 0.0, %v3883
      %v3885 = vpop.f32.mrb[0].mxu0
      %v3886 = vpop.f32.mrb[0].mxu0
      %v3887 = vadd.f32 0.0, %v3886
      %v3888 = vpop.f32.mrb[0].mxu0
      %3889 = vmatprep.mubr.bf16.mxu0 0
      %3890 = vmatmul.mubr.bf16.gmra.mrb[0].mxu0 %v3740
      %v3891 = vpop.f32.mrb[0].mxu0
      %v3892 = vadd.f32 0.0, %v3891
      %v3893 = vpop.f32.mrb[0].mxu0
      %v3894 = vpop.f32.mrb[0].mxu0
      %v3895 = vadd.f32 0.0, %v3894
      %v3896 = vpop.f32.mrb[0].mxu0
      %3897 = vmatprep.mubr.bf16.mxu0 0
      %3898 = vmatmul.mubr.bf16.gmra.mrb[0].mxu0 %v3743
      %v3899 = vpop.f32.mrb[0].mxu0
      %v3900 = vadd.f32 0.0, %v3899
      %v3901 = vpop.f32.mrb[0].mxu0
      %v3902 = vpop.f32.mrb[0].mxu0
      %v3903 = vadd.f32 0.0, %v3902
      %v3904 = vpop.f32.mrb[0].mxu0
      %3905 = vdwg.mxu0
      %v3906 = vadd.f32 %v3648, %v3780
      %v3907 = vadd.f32 %v3649, %v3783
      %v3908 = vadd.f32 %v3650, %v3788
      %v3909 = vadd.f32 %v3651, %v3791
      %v3910 = vadd.f32 %v3652, %v3796
      %v3911 = vadd.f32 %v3653, %v3799
      %v3912 = vadd.f32 %v3654, %v3804
      %v3913 = vadd.f32 %v3655, %v3807
      %v3914 = vadd.f32 %v3656, %v3812
      %v3915 = vadd.f32 %v3657, %v3815
      %v3916 = vadd.f32 %v3658, %v3820
      %v3917 = vadd.f32 %v3659, %v3823
      %v3918 = vadd.f32 %v3660, %v3828
      %v3919 = vadd.f32 %v3661, %v3831
      %v3920 = vadd.f32 %v3662, %v3836
      %v3921 = vadd.f32 %v3663, %v3839
      %v3922 = vadd.f32 %v3664, %v3844
      %v3923 = vadd.f32 %v3665, %v3847
      %v3924 = vadd.f32 %v3666, %v3852
      %v3925 = vadd.f32 %v3667, %v3855
      %v3926 = vadd.f32 %v3668, %v3860
      %v3927 = vadd.f32 %v3669, %v3863
      %v3928 = vadd.f32 %v3670, %v3868
      %v3929 = vadd.f32 %v3671, %v3871
      %v3930 = vadd.f32 %v3672, %v3876
      %v3931 = vadd.f32 %v3673, %v3879
      %v3932 = vadd.f32 %v3674, %v3884
      %v3933 = vadd.f32 %v3675, %v3887
      %v3934 = vadd.f32 %v3676, %v3892
      %v3935 = vadd.f32 %v3677, %v3895
      %v3936 = vadd.f32 %v3678, %v3900
      %v3937 = vadd.f32 %v3679, %v3903
      %v3938 = vld [vmem:[%s9] sm:$0x1]
      %v3940 = vlaneseq
      %v3941 = vshrl.u32 %v3940, 7
      %v3942 = vsub.s32 0, %v3941
      %v3943 = vrot.slane %v3938, %v3942
      %v3945 = vmul.f32 %v3906, %v3943
      %v3946 = vmul.f32 %v3907, %v3943
      %v3947 = vmul.f32 %v3908, %v3943
      %v3948 = vmul.f32 %v3909, %v3943
      %v3949 = vmul.f32 %v3910, %v3943
      %v3950 = vmul.f32 %v3911, %v3943
      %v3951 = vmul.f32 %v3912, %v3943
      %v3952 = vmul.f32 %v3913, %v3943
      %v3953 = vmul.f32 %v3914, %v3943
      %v3954 = vmul.f32 %v3915, %v3943
      %v3955 = vmul.f32 %v3916, %v3943
      %v3956 = vmul.f32 %v3917, %v3943
      %v3957 = vmul.f32 %v3918, %v3943
      %v3958 = vmul.f32 %v3919, %v3943
      %v3959 = vmul.f32 %v3920, %v3943
      %v3960 = vmul.f32 %v3921, %v3943
      %v3961 = vmul.f32 %v3922, %v3943
      %v3962 = vmul.f32 %v3923, %v3943
      %v3963 = vmul.f32 %v3924, %v3943
      %v3964 = vmul.f32 %v3925, %v3943
      %v3965 = vmul.f32 %v3926, %v3943
      %v3966 = vmul.f32 %v3927, %v3943
      %v3967 = vmul.f32 %v3928, %v3943
      %v3968 = vmul.f32 %v3929, %v3943
      %v3969 = vmul.f32 %v3930, %v3943
      %v3970 = vmul.f32 %v3931, %v3943
      %v3971 = vmul.f32 %v3932, %v3943
      %v3972 = vmul.f32 %v3933, %v3943
      %v3973 = vmul.f32 %v3934, %v3943
      %v3974 = vmul.f32 %v3935, %v3943
      %v3975 = vmul.f32 %v3936, %v3943
      %v3976 = vmul.f32 %v3937, %v3943
      %v3977 = vld [vmem:[%s625] sm:$0x1]
      %v3979 = vlaneseq
      %v3980 = vshrl.u32 %v3979, 7
      %v3981 = vsub.s32 0, %v3980
      %v3982 = vrot.slane %v3977, %v3981
      %v3984 = vadd.f32 %v3945, %v3982
      %v3985 = vadd.f32 %v3946, %v3982
      %v3986 = vadd.f32 %v3947, %v3982
      %v3987 = vadd.f32 %v3948, %v3982
      %v3988 = vadd.f32 %v3949, %v3982
      %v3989 = vadd.f32 %v3950, %v3982
      %v3990 = vadd.f32 %v3951, %v3982
      %v3991 = vadd.f32 %v3952, %v3982
      %v3992 = vadd.f32 %v3953, %v3982
      %v3993 = vadd.f32 %v3954, %v3982
      %v3994 = vadd.f32 %v3955, %v3982
      %v3995 = vadd.f32 %v3956, %v3982
      %v3996 = vadd.f32 %v3957, %v3982
      %v3997 = vadd.f32 %v3958, %v3982
      %v3998 = vadd.f32 %v3959, %v3982
      %v3999 = vadd.f32 %v3960, %v3982
      %v4000 = vadd.f32 %v3961, %v3982
      %v4001 = vadd.f32 %v3962, %v3982
      %v4002 = vadd.f32 %v3963, %v3982
      %v4003 = vadd.f32 %v3964, %v3982
      %v4004 = vadd.f32 %v3965, %v3982
      %v4005 = vadd.f32 %v3966, %v3982
      %v4006 = vadd.f32 %v3967, %v3982
      %v4007 = vadd.f32 %v3968, %v3982
      %v4008 = vadd.f32 %v3969, %v3982
      %v4009 = vadd.f32 %v3970, %v3982
      %v4010 = vadd.f32 %v3971, %v3982
      %v4011 = vadd.f32 %v3972, %v3982
      %v4012 = vadd.f32 %v3973, %v3982
      %v4013 = vadd.f32 %v3974, %v3982
      %v4014 = vadd.f32 %v3975, %v3982
      %v4015 = vadd.f32 %v3976, %v3982
      %v4016 = vmax.f32 %v3984, 0.0
      %v4017 = vmax.f32 %v3985, 0.0
      %v4018 = vmax.f32 %v3986, 0.0
      %v4019 = vmax.f32 %v3987, 0.0
      %v4020 = vmax.f32 %v3988, 0.0
      %v4021 = vmax.f32 %v3989, 0.0
      %v4022 = vmax.f32 %v3990, 0.0
      %v4023 = vmax.f32 %v3991, 0.0
      %v4024 = vmax.f32 %v3992, 0.0
      %v4025 = vmax.f32 %v3993, 0.0
      %v4026 = vmax.f32 %v3994, 0.0
      %v4027 = vmax.f32 %v3995, 0.0
      %v4028 = vmax.f32 %v3996, 0.0
      %v4029 = vmax.f32 %v3997, 0.0
      %v4030 = vmax.f32 %v3998, 0.0
      %v4031 = vmax.f32 %v3999, 0.0
      %v4032 = vmax.f32 %v4000, 0.0
      %v4033 = vmax.f32 %v4001, 0.0
      %v4034 = vmax.f32 %v4002, 0.0
      %v4035 = vmax.f32 %v4003, 0.0
      %v4036 = vmax.f32 %v4004, 0.0
      %v4037 = vmax.f32 %v4005, 0.0
      %v4038 = vmax.f32 %v4006, 0.0
      %v4039 = vmax.f32 %v4007, 0.0
      %v4040 = vmax.f32 %v4008, 0.0
      %v4041 = vmax.f32 %v4009, 0.0
      %v4042 = vmax.f32 %v4010, 0.0
      %v4043 = vmax.f32 %v4011, 0.0
      %v4044 = vmax.f32 %v4012, 0.0
      %v4045 = vmax.f32 %v4013, 0.0
      %v4046 = vmax.f32 %v4014, 0.0
      %v4047 = vmax.f32 %v4015, 0.0
      %v4048 = vmin.f32 %v4016, 6.0
      %v4049 = vmin.f32 %v4017, 6.0
      %v4050 = vmin.f32 %v4018, 6.0
      %v4051 = vmin.f32 %v4019, 6.0
      %v4052 = vmin.f32 %v4020, 6.0
      %v4053 = vmin.f32 %v4021, 6.0
      %v4054 = vmin.f32 %v4022, 6.0
      %v4055 = vmin.f32 %v4023, 6.0
      %v4056 = vmin.f32 %v4024, 6.0
      %v4057 = vmin.f32 %v4025, 6.0
      %v4058 = vmin.f32 %v4026, 6.0
      %v4059 = vmin.f32 %v4027, 6.0
      %v4060 = vmin.f32 %v4028, 6.0
      %v4061 = vmin.f32 %v4029, 6.0
      %v4062 = vmin.f32 %v4030, 6.0
      %v4063 = vmin.f32 %v4031, 6.0
      %v4064 = vmin.f32 %v4032, 6.0
      %v4065 = vmin.f32 %v4033, 6.0
      %v4066 = vmin.f32 %v4034, 6.0
      %v4067 = vmin.f32 %v4035, 6.0
      %v4068 = vmin.f32 %v4036, 6.0
      %v4069 = vmin.f32 %v4037, 6.0
      %v4070 = vmin.f32 %v4038, 6.0
      %v4071 = vmin.f32 %v4039, 6.0
      %v4072 = vmin.f32 %v4040, 6.0
      %v4073 = vmin.f32 %v4041, 6.0
      %v4074 = vmin.f32 %v4042, 6.0
      %v4075 = vmin.f32 %v4043, 6.0
      %v4076 = vmin.f32 %v4044, 6.0
      %v4077 = vmin.f32 %v4045, 6.0
      %v4078 = vmin.f32 %v4046, 6.0
      %v4079 = vmin.f32 %v4047, 6.0
      %v4080 = vpack.c.bf16 %v4049, %v4048
      %v4081 = vpack.c.bf16 %v4051, %v4050
      %v4082 = vpack.c.bf16 %v4053, %v4052
      %v4083 = vpack.c.bf16 %v4055, %v4054
      %v4084 = vpack.c.bf16 %v4057, %v4056
      %v4085 = vpack.c.bf16 %v4059, %v4058
      %v4086 = vpack.c.bf16 %v4061, %v4060
      %v4087 = vpack.c.bf16 %v4063, %v4062
      %v4088 = vpack.c.bf16 %v4065, %v4064
      %v4089 = vpack.c.bf16 %v4067, %v4066
      %v4090 = vpack.c.bf16 %v4069, %v4068
      %v4091 = vpack.c.bf16 %v4071, %v4070
      %v4092 = vpack.c.bf16 %v4073, %v4072
      %v4093 = vpack.c.bf16 %v4075, %v4074
      %v4094 = vpack.c.bf16 %v4077, %v4076
      %v4095 = vpack.c.bf16 %v4079, %v4078
      %v4096 = vld [vmem:[%s11] sm:$0xf]
      %v4097 = vld [vmem:[%s11 + $0x4] sm:$0xf]
      %v4098 = vld [vmem:[%s11 + $0x8] sm:$0xf]
      %v4099 = vld [vmem:[%s11 + $0xc] sm:$0xf]
      %v4104 = vunpack.c.l.b16 %v4096
      %v4105 = vunpack.c.l.b16 %v4097
      %v4106 = vunpack.c.l.b16 %v4098
      %v4107 = vunpack.c.l.b16 %v4099
      %v4108 = vpack.c.b16 %v4105, %v4104
      %v4109 = vpack.c.b16 %v4107, %v4106
      %v4113 = vsel %vm771, %v4080, 0
      %v4116 = vsel %vm771, %v4081, 0
      %v4119 = vsel %vm771, %v4082, 0
      %v4122 = vsel %vm771, %v4083, 0
      %v4125 = vsel %vm771, %v4084, 0
      %v4128 = vsel %vm771, %v4085, 0
      %v4131 = vsel %vm771, %v4086, 0
      %v4134 = vsel %vm771, %v4087, 0
      %v4137 = vsel %vm771, %v4088, 0
      %v4140 = vsel %vm771, %v4089, 0
      %v4143 = vsel %vm771, %v4090, 0
      %v4146 = vsel %vm771, %v4091, 0
      %v4149 = vsel %vm771, %v4092, 0
      %v4152 = vsel %vm771, %v4093, 0
      %v4155 = vsel %vm771, %v4094, 0
      %v4158 = vsel %vm771, %v4095, 0
      %4160 = vmatprep.subr.bf16.mxu0 0
      %4161 = vmatpush1.bf16.msra.mxu0 %v4108
      %4162 = vmatprep.subr.bf16.mxu0 0
      %4163 = vmatpush1.bf16.msra.mxu0 %v4109
      %4164 = vmatprep.subr.bf16.mxu0 0
      %4165 = vmatpush1.bf16.msra.mxu0 0
      %4166 = vmatprep.subr.bf16.mxu0 0
      %4167 = vmatpush1.bf16.msra.mxu0 0
      %4168 = vmatprep.subr.bf16.mxu0 0
      %4169 = vmatpush1.bf16.msra.mxu0 0
      %4170 = vmatprep.subr.bf16.mxu0 0
      %4171 = vmatpush1.bf16.msra.mxu0 0
      %4172 = vmatprep.subr.bf16.mxu0 0
      %4173 = vmatpush1.bf16.msra.mxu0 0
      %4174 = vmatprep.subr.bf16.mxu0 0
      %4175 = vmatpush1.bf16.msra.mxu0 0
      %4176 = vmatprep.subr.bf16.mxu0 0
      %4177 = vmatpush1.bf16.msra.mxu0 0
      %4178 = vmatprep.subr.bf16.mxu0 0
      %4179 = vmatpush1.bf16.msra.mxu0 0
      %4180 = vmatprep.subr.bf16.mxu0 0
      %4181 = vmatpush1.bf16.msra.mxu0 0
      %4182 = vmatprep.subr.bf16.mxu0 0
      %4183 = vmatpush1.bf16.msra.mxu0 0
      %4184 = vmatprep.subr.bf16.mxu0 0
      %4185 = vmatpush1.bf16.msra.mxu0 0
      %4186 = vmatprep.subr.bf16.mxu0 0
      %4187 = vmatpush1.bf16.msra.mxu0 0
      %4188 = vmatprep.subr.bf16.mxu0 0
      %4189 = vmatpush1.bf16.msra.mxu0 0
      %4190 = vmatprep.subr.bf16.mxu0 0
      %4191 = vmatpush1.bf16.msra.mxu0 0
      %4192 = vmatprep.mubr.bf16.mxu0 0
      %4193 = vmatmul.mubr.bf16.gmra.mrb[0].mxu0 %v4113
      %v4194 = vpop.f32.mrb[0].mxu0
      %v4195 = vadd.f32 0.0, %v4194
      %v4196 = vpop.f32.mrb[0].mxu0
      %v4197 = vpop.f32.mrb[0].mxu0
      %v4198 = vadd.f32 0.0, %v4197
      %v4199 = vpop.f32.mrb[0].mxu0
      %4200 = vmatprep.mubr.bf16.mxu0 0
      %4201 = vmatmul.mubr.bf16.gmra.mrb[0].mxu0 %v4116
      %v4202 = vpop.f32.mrb[0].mxu0
      %v4203 = vadd.f32 0.0, %v4202
      %v4204 = vpop.f32.mrb[0].mxu0
      %v4205 = vpop.f32.mrb[0].mxu0
      %v4206 = vadd.f32 0.0, %v4205
      %v4207 = vpop.f32.mrb[0].mxu0
      %4208 = vmatprep.mubr.bf16.mxu0 0
      %4209 = vmatmul.mubr.bf16.gmra.mrb[0].mxu0 %v4119
      %v4210 = vpop.f32.mrb[0].mxu0
      %v4211 = vadd.f32 0.0, %v4210
      %v4212 = vpop.f32.mrb[0].mxu0
      %v4213 = vpop.f32.mrb[0].mxu0
      %v4214 = vadd.f32 0.0, %v4213
      %v4215 = vpop.f32.mrb[0].mxu0
      %4216 = vmatprep.mubr.bf16.mxu0 0
      %4217 = vmatmul.mubr.bf16.gmra.mrb[0].mxu0 %v4122
      %v4218 = vpop.f32.mrb[0].mxu0
      %v4219 = vadd.f32 0.0, %v4218
      %v4220 = vpop.f32.mrb[0].mxu0
      %v4221 = vpop.f32.mrb[0].mxu0
      %v4222 = vadd.f32 0.0, %v4221
      %v4223 = vpop.f32.mrb[0].mxu0
      %4224 = vmatprep.mubr.bf16.mxu0 0
      %4225 = vmatmul.mubr.bf16.gmra.mrb[0].mxu0 %v4125
      %v4226 = vpop.f32.mrb[0].mxu0
      %v4227 = vadd.f32 0.0, %v4226
      %v4228 = vpop.f32.mrb[0].mxu0
      %v4229 = vpop.f32.mrb[0].mxu0
      %v4230 = vadd.f32 0.0, %v4229
      %v4231 = vpop.f32.mrb[0].mxu0
      %4232 = vmatprep.mubr.bf16.mxu0 0
      %4233 = vmatmul.mubr.bf16.gmra.mrb[0].mxu0 %v4128
      %v4234 = vpop.f32.mrb[0].mxu0
      %v4235 = vadd.f32 0.0, %v4234
      %v4236 = vpop.f32.mrb[0].mxu0
      %v4237 = vpop.f32.mrb[0].mxu0
      %v4238 = vadd.f32 0.0, %v4237
      %v4239 = vpop.f32.mrb[0].mxu0
      %4240 = vmatprep.mubr.bf16.mxu0 0
      %4241 = vmatmul.mubr.bf16.gmra.mrb[0].mxu0 %v4131
      %v4242 = vpop.f32.mrb[0].mxu0
      %v4243 = vadd.f32 0.0, %v4242
      %v4244 = vpop.f32.mrb[0].mxu0
      %v4245 = vpop.f32.mrb[0].mxu0
      %v4246 = vadd.f32 0.0, %v4245
      %v4247 = vpop.f32.mrb[0].mxu0
      %4248 = vmatprep.mubr.bf16.mxu0 0
      %4249 = vmatmul.mubr.bf16.gmra.mrb[0].mxu0 %v4134
      %v4250 = vpop.f32.mrb[0].mxu0
      %v4251 = vadd.f32 0.0, %v4250
      %v4252 = vpop.f32.mrb[0].mxu0
      %v4253 = vpop.f32.mrb[0].mxu0
      %v4254 = vadd.f32 0.0, %v4253
      %v4255 = vpop.f32.mrb[0].mxu0
      %4256 = vmatprep.mubr.bf16.mxu0 0
      %4257 = vmatmul.mubr.bf16.gmra.mrb[0].mxu0 %v4137
      %v4258 = vpop.f32.mrb[0].mxu0
      %v4259 = vadd.f32 0.0, %v4258
      %v4260 = vpop.f32.mrb[0].mxu0
      %v4261 = vpop.f32.mrb[0].mxu0
      %v4262 = vadd.f32 0.0, %v4261
      %v4263 = vpop.f32.mrb[0].mxu0
      %4264 = vmatprep.mubr.bf16.mxu0 0
      %4265 = vmatmul.mubr.bf16.gmra.mrb[0].mxu0 %v4140
      %v4266 = vpop.f32.mrb[0].mxu0
      %v4267 = vadd.f32 0.0, %v4266
      %v4268 = vpop.f32.mrb[0].mxu0
      %v4269 = vpop.f32.mrb[0].mxu0
      %v4270 = vadd.f32 0.0, %v4269
      %v4271 = vpop.f32.mrb[0].mxu0
      %4272 = vmatprep.mubr.bf16.mxu0 0
      %4273 = vmatmul.mubr.bf16.gmra.mrb[0].mxu0 %v4143
      %v4274 = vpop.f32.mrb[0].mxu0
      %v4275 = vadd.f32 0.0, %v4274
      %v4276 = vpop.f32.mrb[0].mxu0
      %v4277 = vpop.f32.mrb[0].mxu0
      %v4278 = vadd.f32 0.0, %v4277
      %v4279 = vpop.f32.mrb[0].mxu0
      %4280 = vmatprep.mubr.bf16.mxu0 0
      %4281 = vmatmul.mubr.bf16.gmra.mrb[0].mxu0 %v4146
      %v4282 = vpop.f32.mrb[0].mxu0
      %v4283 = vadd.f32 0.0, %v4282
      %v4284 = vpop.f32.mrb[0].mxu0
      %v4285 = vpop.f32.mrb[0].mxu0
      %v4286 = vadd.f32 0.0, %v4285
      %v4287 = vpop.f32.mrb[0].mxu0
      %4288 = vmatprep.mubr.bf16.mxu0 0
      %4289 = vmatmul.mubr.bf16.gmra.mrb[0].mxu0 %v4149
      %v4290 = vpop.f32.mrb[0].mxu0
      %v4291 = vadd.f32 0.0, %v4290
      %v4292 = vpop.f32.mrb[0].mxu0
      %v4293 = vpop.f32.mrb[0].mxu0
      %v4294 = vadd.f32 0.0, %v4293
      %v4295 = vpop.f32.mrb[0].mxu0
      %4296 = vmatprep.mubr.bf16.mxu0 0
      %4297 = vmatmul.mubr.bf16.gmra.mrb[0].mxu0 %v4152
      %v4298 = vpop.f32.mrb[0].mxu0
      %v4299 = vadd.f32 0.0, %v4298
      %v4300 = vpop.f32.mrb[0].mxu0
      %v4301 = vpop.f32.mrb[0].mxu0
      %v4302 = vadd.f32 0.0, %v4301
      %v4303 = vpop.f32.mrb[0].mxu0
      %4304 = vmatprep.mubr.bf16.mxu0 0
      %4305 = vmatmul.mubr.bf16.gmra.mrb[0].mxu0 %v4155
      %v4306 = vpop.f32.mrb[0].mxu0
      %v4307 = vadd.f32 0.0, %v4306
      %v4308 = vpop.f32.mrb[0].mxu0
      %v4309 = vpop.f32.mrb[0].mxu0
      %v4310 = vadd.f32 0.0, %v4309
      %v4311 = vpop.f32.mrb[0].mxu0
      %4312 = vmatprep.mubr.bf16.mxu0 0
      %4313 = vmatmul.mubr.bf16.gmra.mrb[0].mxu0 %v4158
      %v4314 = vpop.f32.mrb[0].mxu0
      %v4315 = vadd.f32 0.0, %v4314
      %v4316 = vpop.f32.mrb[0].mxu0
      %v4317 = vpop.f32.mrb[0].mxu0
      %v4318 = vadd.f32 0.0, %v4317
      %v4319 = vpop.f32.mrb[0].mxu0
      %4320 = vdwg.mxu0
      %v4321 = vld [vmem:[%s12] sm:$0x1]
      %v4323 = vlaneseq
      %v4324 = vshrl.u32 %v4323, 7
      %v4325 = vsub.s32 0, %v4324
      %v4326 = vrot.slane %v4321, %v4325
      %v4328 = vmul.f32 %v4195, %v4326
      %v4329 = vmul.f32 %v4198, %v4326
      %v4330 = vmul.f32 %v4203, %v4326
      %v4331 = vmul.f32 %v4206, %v4326
      %v4332 = vmul.f32 %v4211, %v4326
      %v4333 = vmul.f32 %v4214, %v4326
      %v4334 = vmul.f32 %v4219, %v4326
      %v4335 = vmul.f32 %v4222, %v4326
      %v4336 = vmul.f32 %v4227, %v4326
      %v4337 = vmul.f32 %v4230, %v4326
      %v4338 = vmul.f32 %v4235, %v4326
      %v4339 = vmul.f32 %v4238, %v4326
      %v4340 = vmul.f32 %v4243, %v4326
      %v4341 = vmul.f32 %v4246, %v4326
      %v4342 = vmul.f32 %v4251, %v4326
      %v4343 = vmul.f32 %v4254, %v4326
      %v4344 = vmul.f32 %v4259, %v4326
      %v4345 = vmul.f32 %v4262, %v4326
      %v4346 = vmul.f32 %v4267, %v4326
      %v4347 = vmul.f32 %v4270, %v4326
      %v4348 = vmul.f32 %v4275, %v4326
      %v4349 = vmul.f32 %v4278, %v4326
      %v4350 = vmul.f32 %v4283, %v4326
      %v4351 = vmul.f32 %v4286, %v4326
      %v4352 = vmul.f32 %v4291, %v4326
      %v4353 = vmul.f32 %v4294, %v4326
      %v4354 = vmul.f32 %v4299, %v4326
      %v4355 = vmul.f32 %v4302, %v4326
      %v4356 = vmul.f32 %v4307, %v4326
      %v4357 = vmul.f32 %v4310, %v4326
      %v4358 = vmul.f32 %v4315, %v4326
      %v4359 = vmul.f32 %v4318, %v4326
      %v4360 = vld [vmem:[%s13] sm:$0x1]
      %v4362 = vlaneseq
      %v4363 = vshrl.u32 %v4362, 7
      %v4364 = vsub.s32 0, %v4363
      %v4365 = vrot.slane %v4360, %v4364
      %v4367 = vadd.f32 %v4328, %v4365
      %v4368 = vadd.f32 %v4329, %v4365
      %v4369 = vadd.f32 %v4330, %v4365
      %v4370 = vadd.f32 %v4331, %v4365
      %v4371 = vadd.f32 %v4332, %v4365
      %v4372 = vadd.f32 %v4333, %v4365
      %v4373 = vadd.f32 %v4334, %v4365
      %v4374 = vadd.f32 %v4335, %v4365
      %v4375 = vadd.f32 %v4336, %v4365
      %v4376 = vadd.f32 %v4337, %v4365
      %v4377 = vadd.f32 %v4338, %v4365
      %v4378 = vadd.f32 %v4339, %v4365
      %v4379 = vadd.f32 %v4340, %v4365
      %v4380 = vadd.f32 %v4341, %v4365
      %v4381 = vadd.f32 %v4342, %v4365
      %v4382 = vadd.f32 %v4343, %v4365
      %v4383 = vadd.f32 %v4344, %v4365
      %v4384 = vadd.f32 %v4345, %v4365
      %v4385 = vadd.f32 %v4346, %v4365
      %v4386 = vadd.f32 %v4347, %v4365
      %v4387 = vadd.f32 %v4348, %v4365
      %v4388 = vadd.f32 %v4349, %v4365
      %v4389 = vadd.f32 %v4350, %v4365
      %v4390 = vadd.f32 %v4351, %v4365
      %v4391 = vadd.f32 %v4352, %v4365
      %v4392 = vadd.f32 %v4353, %v4365
      %v4393 = vadd.f32 %v4354, %v4365
      %v4394 = vadd.f32 %v4355, %v4365
      %v4395 = vadd.f32 %v4356, %v4365
      %v4396 = vadd.f32 %v4357, %v4365
      %v4397 = vadd.f32 %v4358, %v4365
      %v4398 = vadd.f32 %v4359, %v4365
      %v4399 = vmax.f32 %v4367, 0.0
      %v4400 = vmax.f32 %v4368, 0.0
      %v4401 = vmax.f32 %v4369, 0.0
      %v4402 = vmax.f32 %v4370, 0.0
      %v4403 = vmax.f32 %v4371, 0.0
      %v4404 = vmax.f32 %v4372, 0.0
      %v4405 = vmax.f32 %v4373, 0.0
      %v4406 = vmax.f32 %v4374, 0.0
      %v4407 = vmax.f32 %v4375, 0.0
      %v4408 = vmax.f32 %v4376, 0.0
      %v4409 = vmax.f32 %v4377, 0.0
      %v4410 = vmax.f32 %v4378, 0.0
      %v4411 = vmax.f32 %v4379, 0.0
      %v4412 = vmax.f32 %v4380, 0.0
      %v4413 = vmax.f32 %v4381, 0.0
      %v4414 = vmax.f32 %v4382, 0.0
      %v4415 = vmax.f32 %v4383, 0.0
      %v4416 = vmax.f32 %v4384, 0.0
      %v4417 = vmax.f32 %v4385, 0.0
      %v4418 = vmax.f32 %v4386, 0.0
      %v4419 = vmax.f32 %v4387, 0.0
      %v4420 = vmax.f32 %v4388, 0.0
      %v4421 = vmax.f32 %v4389, 0.0
      %v4422 = vmax.f32 %v4390, 0.0
      %v4423 = vmax.f32 %v4391, 0.0
      %v4424 = vmax.f32 %v4392, 0.0
      %v4425 = vmax.f32 %v4393, 0.0
      %v4426 = vmax.f32 %v4394, 0.0
      %v4427 = vmax.f32 %v4395, 0.0
      %v4428 = vmax.f32 %v4396, 0.0
      %v4429 = vmax.f32 %v4397, 0.0
      %v4430 = vmax.f32 %v4398, 0.0
      %v4431 = vmin.f32 %v4399, 6.0
      %v4432 = vmin.f32 %v4400, 6.0
      %v4433 = vmin.f32 %v4401, 6.0
      %v4434 = vmin.f32 %v4402, 6.0
      %v4435 = vmin.f32 %v4403, 6.0
      %v4436 = vmin.f32 %v4404, 6.0
      %v4437 = vmin.f32 %v4405, 6.0
      %v4438 = vmin.f32 %v4406, 6.0
      %v4439 = vmin.f32 %v4407, 6.0
      %v4440 = vmin.f32 %v4408, 6.0
      %v4441 = vmin.f32 %v4409, 6.0
      %v4442 = vmin.f32 %v4410, 6.0
      %v4443 = vmin.f32 %v4411, 6.0
      %v4444 = vmin.f32 %v4412, 6.0
      %v4445 = vmin.f32 %v4413, 6.0
      %v4446 = vmin.f32 %v4414, 6.0
      %v4447 = vmin.f32 %v4415, 6.0
      %v4448 = vmin.f32 %v4416, 6.0
      %v4449 = vmin.f32 %v4417, 6.0
      %v4450 = vmin.f32 %v4418, 6.0
      %v4451 = vmin.f32 %v4419, 6.0
      %v4452 = vmin.f32 %v4420, 6.0
      %v4453 = vmin.f32 %v4421, 6.0
      %v4454 = vmin.f32 %v4422, 6.0
      %v4455 = vmin.f32 %v4423, 6.0
      %v4456 = vmin.f32 %v4424, 6.0
      %v4457 = vmin.f32 %v4425, 6.0
      %v4458 = vmin.f32 %v4426, 6.0
      %v4459 = vmin.f32 %v4427, 6.0
      %v4460 = vmin.f32 %v4428, 6.0
      %v4461 = vmin.f32 %v4429, 6.0
      %v4462 = vmin.f32 %v4430, 6.0
      %4463 = vst.msk [vmem:[%s639] sm:$0xff] %vm771, %v4431
      %4464 = vst.msk [vmem:[%s639 + $0x8] sm:$0xff] %vm771, %v4432
      %4465 = vst.msk [vmem:[%s639 + $0x10] sm:$0xff] %vm771, %v4433
      %4466 = vst.msk [vmem:[%s639 + $0x18] sm:$0xff] %vm771, %v4434
      %4467 = vst.msk [vmem:[%s639 + $0x20] sm:$0xff] %vm771, %v4435
      %4468 = vst.msk [vmem:[%s639 + $0x28] sm:$0xff] %vm771, %v4436
      %4469 = vst.msk [vmem:[%s639 + $0x30] sm:$0xff] %vm771, %v4437
      %4470 = vst.msk [vmem:[%s639 + $0x38] sm:$0xff] %vm771, %v4438
      %4471 = vst.msk [vmem:[%s639 + $0x40] sm:$0xff] %vm771, %v4439
      %4472 = vst.msk [vmem:[%s639 + $0x48] sm:$0xff] %vm771, %v4440
      %4473 = vst.msk [vmem:[%s639 + $0x50] sm:$0xff] %vm771, %v4441
      %4474 = vst.msk [vmem:[%s639 + $0x58] sm:$0xff] %vm771, %v4442
      %4475 = vst.msk [vmem:[%s639 + $0x60] sm:$0xff] %vm771, %v4443
      %4476 = vst.msk [vmem:[%s639 + $0x68] sm:$0xff] %vm771, %v4444
      %4477 = vst.msk [vmem:[%s639 + $0x70] sm:$0xff] %vm771, %v4445
      %4478 = vst.msk [vmem:[%s639 + $0x78] sm:$0xff] %vm771, %v4446
      %4479 = vst.msk [vmem:[%s639 + $0x80] sm:$0xff] %vm771, %v4447
      %4480 = vst.msk [vmem:[%s639 + $0x88] sm:$0xff] %vm771, %v4448
      %4481 = vst.msk [vmem:[%s639 + $0x90] sm:$0xff] %vm771, %v4449
      %4482 = vst.msk [vmem:[%s639 + $0x98] sm:$0xff] %vm771, %v4450
      %4483 = vst.msk [vmem:[%s639 + $0xa0] sm:$0xff] %vm771, %v4451
      %4484 = vst.msk [vmem:[%s639 + $0xa8] sm:$0xff] %vm771, %v4452
      %4485 = vst.msk [vmem:[%s639 + $0xb0] sm:$0xff] %vm771, %v4453
      %4486 = vst.msk [vmem:[%s639 + $0xb8] sm:$0xff] %vm771, %v4454
      %4487 = vst.msk [vmem:[%s639 + $0xc0] sm:$0xff] %vm771, %v4455
      %4488 = vst.msk [vmem:[%s639 + $0xc8] sm:$0xff] %vm771, %v4456
      %4489 = vst.msk [vmem:[%s639 + $0xd0] sm:$0xff] %vm771, %v4457
      %4490 = vst.msk [vmem:[%s639 + $0xd8] sm:$0xff] %vm771, %v4458
      %4491 = vst.msk [vmem:[%s639 + $0xe0] sm:$0xff] %vm771, %v4459
      %4492 = vst.msk [vmem:[%s639 + $0xe8] sm:$0xff] %vm771, %v4460
      %4493 = vst.msk [vmem:[%s639 + $0xf0] sm:$0xff] %vm771, %v4461
      %4494 = vst.msk [vmem:[%s639 + $0xf8] sm:$0xff] %vm771, %v4462
      %s4495 = sadd.s32 %s31, %s32
      %s4496 = smul.u32 32, %s4495
      %p4497 = scmp.lt.s32.totalorder %s4496, 63
      %s4498 = scalar_select %p4497, %s4496, 63
      %s4499 = smul.addr %s4498, 4
      %s4500 = scalar_lea.vmem %s14, %s4499
      %s4501 = sadd.s32 %s31, %s32
      %s4502 = smul.u32 32, %s4501
      %p4503 = scmp.lt.s32.totalorder %s4502, 63
      %s4504 = scalar_select %p4503, %s4502, 63
      %s4505 = smul.addr %s4504, 8
      %s4506 = scalar_lea.vmem %s15, %s4505
      // Predicated region
      $region77: #{tpu_custom_call.1} parent=75 // pred_check
        %p4507 = pneg %p386
      $region78: #{tpu_custom_call.1} parent=75 // pred_check_branch
        %4509 = sbr.rel (%p4507) target = $region80
      $region79: #{tpu_custom_call.1} parent=75 // pred_region
        %s4510 = sadd.s32 %s31, %s32
        %s4511 = smul.u32 32, %s4510
      $region80: #{tpu_custom_call.1} parent=75 // pred_fallthru
        _
      // Predicated region
      $region81: #{tpu_custom_call.1} parent=75 // pred_check
        %p4512 = pneg %p414
      $region82: #{tpu_custom_call.1} parent=75 // pred_check_branch
        %4514 = sbr.rel (%p4512) target = $region84
      $region83: #{tpu_custom_call.1} parent=75 // pred_region
        %s4515 = sadd.s32 %s31, %s32
        %s4516 = smul.u32 32, %s4515
      $region84: #{tpu_custom_call.1} parent=75 // pred_fallthru
        _
    $region76: #{tpu_custom_call.1} parent=5 // pred_fallthru
      _
    %p4517 = scmp.le.s32.totalorder 2, %s22
    // Predicated region
    $region85: #{tpu_custom_call.1} parent=5 // pred_check
      %p4518 = pneg %p4517
    $region86: #{tpu_custom_call.1} parent=5 // pred_check_branch
      %4520 = sbr.rel (%p4518) target = $region88
    $region87: #{tpu_custom_call.1} parent=5 // pred_region
      %s4521 = ssub.s32 %s22, 2
      // Predicated region
      $region89: #{tpu_custom_call.1} parent=87 // pred_check
        %p4522 = pneg %p392
      $region90: #{tpu_custom_call.1} parent=87 // pred_check_branch
        %4524 = sbr.rel (%p4522) target = $region92
      $region91: #{tpu_custom_call.1} parent=87 // pred_region
        %s4525 = sadd.s32 %s33, %s34
        %s4526 = smul.u32 32, %s4525
        %p4527 = scmp.lt.s32.totalorder %s4526, 63
        %s4528 = scalar_select %p4527, %s4526, 63
        %s4529 = smul.addr %s4528, 4
        %s4530 = scalar_lea.vmem %s14, %s4529
      $region92: #{tpu_custom_call.1} parent=87 // pred_fallthru
        _
      // Predicated region
      $region93: #{tpu_custom_call.1} parent=87 // pred_check
        %p4531 = pneg %p420
      $region94: #{tpu_custom_call.1} parent=87 // pred_check_branch
        %4533 = sbr.rel (%p4531) target = $region96
      $region95: #{tpu_custom_call.1} parent=87 // pred_region
        %s4534 = sadd.s32 %s33, %s34
        %s4535 = smul.u32 32, %s4534
        %p4536 = scmp.lt.s32.totalorder %s4535, 63
        %s4537 = scalar_select %p4536, %s4535, 63
        %s4538 = smul.addr %s4537, 8
        %s4539 = scalar_lea.vmem %s15, %s4538
      $region96: #{tpu_custom_call.1} parent=87 // pred_fallthru
        _
    $region88: #{tpu_custom_call.1} parent=5 // pred_fallthru
      _
  $region6: #{tpu_custom_call.1} parent=0 // loop_footer
    %s26 = sadd.s32 1, %s22
  $region7: #{tpu_custom_call.1} parent=0 // loop_footer_branch
    %21 = sbr.rel target = $region3
  $region8: #{tpu_custom_call.1} parent=0 // loop_exit
    _

</llo_original>
